<compile_context>
chip_gen: v7x
topology: tpu7x:2x2x1
jax: 0.10.0
libtpu: 0.0.40
codegen_flags: <defaults>
</compile_context>

<pallas_src>
import functools

import jax
import jax.numpy as jnp
from jax.experimental import pallas as pl
from jax.experimental.pallas import tpu as pltpu

_EPS = 1e-5
_NEG_SLOPE = 0.01


# ---------------------------------------------------------------------------
# Small helpers
# ---------------------------------------------------------------------------
def _round_up(x, m):
    return (x + m - 1) // m * m


def _split_parity(p, d):
    """High-res tap offset (p + d - 1) -> (2x2-window index a, parity q)."""
    a_abs = p + d - 1            # in {-1, 0, 1, 2}
    di = a_abs // 2              # floor div -> {-1, 0, 0, 1}
    q = a_abs - 2 * di           # {0, 1}
    a = di - (p - 1)             # {0, 1}
    return a, q


def _compose_tap_weights(wt, w1, w2, cin, cout, cp):
    """Pre-compose (transposed conv + concat + conv1) and conv2 into 3x3-tap
    weights on the low-res grid with FULL output width 4*cp.

    Returns:
      w1_tap: (3, 3, cin + 4*cp, 4*cp)   combined [x ; s2d(skip)] -> conv1 out
      w2_tap: (3, 3, 4*cp,      4*cp)    conv1 out (s2d layout)   -> conv2 out
    s2d channel layout is (qy*2+qx)*cp + c; output layout (py*2+px)*cp + co.
    """
    f32 = jnp.float32
    wt = wt.astype(f32)                    # (cin, cout, 2, 2)
    w1_up = w1[:, :cout].astype(f32)       # (cout, cout, 3, 3)  [co, cm, dy, dx]
    w1_sk = w1[:, cout:].astype(f32)       # (cout, cout, 3, 3)  [co, cs, dy, dx]
    w2 = w2.astype(f32)                    # (cout, cout, 3, 3)  [co, c,  dy, dx]
    c4 = 4 * cp
    k1 = cin + c4
    w1_tap = jnp.zeros((3, 3, k1, c4), f32)
    w2_tap = jnp.zeros((3, 3, c4, c4), f32)
    for py in (0, 1):
        for px in (0, 1):
            col0 = (py * 2 + px) * cp
            for dy in range(3):
                ay, qy = _split_parity(py, dy)
                sy = py + ay                        # tap row shift in {0,1,2}
                for dx in range(3):
                    ax, qx = _split_parity(px, dx)
                    sx = px + ax                    # tap col shift in {0,1,2}
                    # transposed-conv path (low-res input channels 0..cin)
                    blk = wt[:, :, qy, qx] @ w1_up[:, :, dy, dx].T   # (cin, cout)
                    w1_tap = w1_tap.at[sy, sx, 0:cin,
                                       col0:col0 + cout].add(blk)
                    # skip path (s2d channels after the cin block)
                    r1 = cin + (qy * 2 + qx) * cp
                    w1_tap = w1_tap.at[sy, sx, r1:r1 + cout,
                                       col0:col0 + cout].add(
                        w1_sk[:, :, dy, dx].T)
                    # conv2
                    r2 = (qy * 2 + qx) * cp
                    w2_tap = w2_tap.at[sy, sx, r2:r2 + cout,
                                       col0:col0 + cout].add(
                        w2[:, :, dy, dx].T)
    return w1_tap, w2_tap


def _row_halos(x, th):
    """x: (N, H, Wp, C) -> (N, H//th, 2, Wp, C): rows just above/below each tile."""
    n, h, wp, c = x.shape
    nt = h // th
    zeros = jnp.zeros((n, 1, wp, c), x.dtype)
    if nt == 1:
        above = zeros
        below = zeros
    else:
        above = jnp.concatenate([zeros, x[:, th - 1::th][:, :nt - 1]], axis=1)
        below = jnp.concatenate([x[:, th::th], zeros], axis=1)
    return jnp.stack([above, below], axis=2)


def _shuffle_halos(halos):
    """conv1 edge-row output (N, nt, 2, Wp, C) with [...,0,...]=tile row 0 and
    [...,1,...]=tile row th-1  ->  conv2 halo input (above = previous tile's
    last row, below = next tile's first row; zeros at the image boundary)."""
    n, nt, _, wp, c = halos.shape
    z = jnp.zeros((n, 1, 1, wp, c), halos.dtype)
    above = jnp.concatenate([z, halos[:, :nt - 1, 1:2]], axis=1)
    below = jnp.concatenate([halos[:, 1:, 0:1], z], axis=1)
    return jnp.concatenate([above, below], axis=2)


def _vmem_config():
    """(vmem_limit_bytes, per-tile working-set budget) — generation aware."""
    cap = None
    try:
        info = pltpu.get_tpu_info()
        cap = int(getattr(info, "vmem_capacity_bytes", 0)) or None
    except Exception:
        cap = None
    if cap is None:
        try:
            kind = jax.devices()[0].device_kind.lower()
            cap = (64 << 20) if "v7" in kind else (128 << 20)
        except Exception:
            cap = 64 << 20          # conservative: v7x per-core VMEM
    if cap >= (96 << 20):           # v5e / v6e: 128 MiB VMEM
        return 96 << 20, 20 << 20
    return 30 << 20, 5 << 20        # v7x: 64 MiB VMEM


def _pick_tile_rows(h, w, k1, c4, itemsize, budget_bytes):
    """Largest divisor of h whose per-tile working set (incl. double buffering
    of BlockSpec I/O and in-kernel f32 temporaries) fits the budget."""
    wp = w + 2
    best = 1
    for th in range(1, h + 1):
        if h % th:
            continue
        tile_in = (th + 2) * wp * k1 * itemsize
        tile_out = (th + 2) * wp * c4 * max(itemsize, 4) + 4 * c4 * 4
        temps = 3 * (th + 2) * wp * k1 * max(itemsize, 4) + th * w * c4 * 4
        if 2 * (tile_in + tile_out) + temps <= budget_bytes:
            best = th
    return best


def _stats_to_norm(sums, ssqs, n, cp, count):
    """(N, nt, 1, 4cp) partial sums -> per-(n, channel) mean / rsqrt(var+eps),
    broadcast back to the s2d channel layout, shape (N, 1, 4cp).
    NOTE: E[x^2]-E[x]^2 in f32 (clamped at 0); adequate at these sizes."""
    s = jnp.sum(sums, axis=(1, 2)).reshape(n, 4, cp).sum(axis=1)   # (N, cp)
    q = jnp.sum(ssqs, axis=(1, 2)).reshape(n, 4, cp).sum(axis=1)
    mean = s / count
    var = jnp.maximum(q / count - mean * mean, 0.0)
    inv = jax.lax.rsqrt(var + _EPS)
    mean_b = jnp.broadcast_to(mean[:, None, :], (n, 4, cp)).reshape(n, 1, 4 * cp)
    inv_b = jnp.broadcast_to(inv[:, None, :], (n, 4, cp)).reshape(n, 1, 4 * cp)
    return mean_b, inv_b


# ---------------------------------------------------------------------------
# Pallas kernels
# ---------------------------------------------------------------------------
def _nine_tap(xt, w_ref, th, w, c4):
    """xt: (th+2, w+2, K) assembled tile; w_ref: (3,3,K,c4) tap weights.
    Returns (th*w, c4) float32 accumulated over the 9 taps (full-width MXU)."""
    k = xt.shape[-1]
    acc = jnp.zeros((th * w, c4), jnp.float32)
    for sy in range(3):
        for sx in range(3):
            lhs = xt[sy:sy + th, sx:sx + w, :].reshape(th * w, k)
            acc = acc + jnp.dot(lhs, w_ref[sy, sx],
                                preferred_element_type=jnp.float32)
    return acc


def _conv1_kernel(x_ref, xh_ref, w_ref, out_ref, halo_ref, sum_ref, ssq_ref,
                  *, th, w, c4):
    """Fused (transposed conv ⊕ concat ⊕ conv1) + per-tile IN1 partial sums.
    Also emits the tile's first/last rows so conv2 needs no halo re-gather."""
    xh = xh_ref[0, 0]                                              # (2, wp, k1)
    xt = jnp.concatenate([xh[0:1], x_ref[0], xh[1:2]], axis=0)     # (th+2, wp, k1)

    acc = _nine_tap(xt, w_ref, th, w, c4)                          # (th*w, c4) f32
    sum_ref[0, 0] = jnp.sum(acc, axis=0, keepdims=True)
    ssq_ref[0, 0] = jnp.sum(acc * acc, axis=0, keepdims=True)

    # Single full-width store, with the W-pad zero columns built in registers.
    yt = acc.reshape(th, w, c4).astype(out_ref.dtype)
    zcol = jnp.zeros((th, 1, c4), out_ref.dtype)
    ypad = jnp.concatenate([zcol, yt, zcol], axis=1)               # (th, wp, c4)
    out_ref[0] = ypad
    halo_ref[0, 0] = jnp.concatenate([ypad[0:1], ypad[th - 1:th]], axis=0)


def _conv2_kernel(x_ref, xh_ref, mean_ref, inv_ref, w_ref,
                  out_ref, sum_ref, ssq_ref, *, th, w, c4, compute_dtype):
    """(IN1 + LeakyReLU fused into the input load) conv2 + IN2 partial sums."""
    wp = w + 2
    t = pl.program_id(1)
    nt = pl.num_programs(1)

    mean = mean_ref[...]                                           # (1, 1, c4)
    inv = inv_ref[...]
    cols = jax.lax.broadcasted_iota(jnp.int32, (1, wp), 1)
    cmask = ((cols >= 1) & (cols <= w)).astype(jnp.float32)[:, :, None]

    def norm_act(v):
        v = (v.astype(jnp.float32) - mean) * inv
        v = jnp.where(v >= 0.0, v, _NEG_SLOPE * v)
        return v * cmask          # W-pad columns must stay exactly zero

    xh = xh_ref[0, 0]                                              # (2, wp, c4)
    # Halo rows outside the image (t==0 / t==nt-1) must stay zero post-norm.
    top = (norm_act(xh[0:1]) * (t > 0).astype(jnp.float32)).astype(compute_dtype)
    bot = (norm_act(xh[1:2]) * (t < nt - 1).astype(jnp.float32)).astype(compute_dtype)
    mid = norm_act(x_ref[0]).astype(compute_dtype)                 # (th, wp, c4)
    a1 = jnp.concatenate([top, mid, bot], axis=0)                  # (th+2, wp, c4)

    acc = _nine_tap(a1, w_ref, th, w, c4)                          # (th*w, c4) f32
    sum_ref[0, 0] = jnp.sum(acc, axis=0, keepdims=True)
    ssq_ref[0, 0] = jnp.sum(acc * acc, axis=0, keepdims=True)
    out_ref[0] = acc.reshape(th, w, c4).astype(out_ref.dtype)


# ---------------------------------------------------------------------------
# Forward wrapper
# ---------------------------------------------------------------------------
@functools.partial(jax.jit, static_argnames=("tile_rows", "use_bf16"))
def unetr_up_block_forward(inp_nchw, skip_nchw, wt, w1, w2, *,
                           tile_rows=None, use_bf16=False):
    """Pallas forward of UnetrUpBlock (spatial_dims=2, res_block=False).

    inp_nchw : [N, Cin, H, W]        skip_nchw: [N, Cout, 2H, 2W]
    wt: [Cin, Cout, 2, 2]            ConvTranspose2d weight
    w1: [Cout, 2*Cout, 3, 3]         conv1 weight
    w2: [Cout, Cout, 3, 3]           conv2 weight
    returns [N, Cout, 2H, 2W] float32
    """
    n, cin, h, w = inp_nchw.shape
    cout = wt.shape[1]
    assert skip_nchw.shape == (n, cout, 2 * h, 2 * w)
    compute_dtype = jnp.bfloat16 if use_bf16 else jnp.float32
    itemsize = jnp.dtype(compute_dtype).itemsize

    cp = _round_up(cout, 32)       # 4*cp multiple of 128 -> lane-dense blocks
    c4 = 4 * cp
    k1 = cin + c4                  # combined conv1 K dim
    wp = w + 2

    vmem_limit, tile_budget = _vmem_config()
    if tile_rows is None:
        tile_rows = _pick_tile_rows(h, w, k1, c4, itemsize, tile_budget)
    assert h % tile_rows == 0, (h, tile_rows)
    th = tile_rows
    nt = h // th
    grid = (n, nt)

    # ---- input prep (one fused XLA layout pass): NCHW->NHWC, s2d(skip),
    #      channel-concat [x ; s2d], W zero-pad, dtype cast.
    x_lr = jnp.transpose(inp_nchw, (0, 2, 3, 1))                    # (n,h,w,cin)
    s2d = jnp.transpose(skip_nchw, (0, 2, 3, 1)).reshape(n, h, 2, w, 2, cout)
    s2d = jnp.transpose(s2d, (0, 1, 3, 2, 4, 5))                    # (n,h,w,2,2,cout)
    s2d = jnp.pad(s2d, ((0, 0),) * 5 + ((0, cp - cout),)).reshape(n, h, w, c4)
    comb = jnp.concatenate([x_lr, s2d], axis=-1)                    # (n,h,w,k1)
    comb = jnp.pad(comb, ((0, 0), (0, 0), (1, 1), (0, 0))).astype(compute_dtype)
    comb_halo = _row_halos(comb, th)                                # (n,nt,2,wp,k1)

    w1_tap, w2_tap = _compose_tap_weights(wt, w1, w2, cin, cout, cp)
    w1_tap = w1_tap.astype(compute_dtype)
    w2_tap = w2_tap.astype(compute_dtype)

    stats_shape = jax.ShapeDtypeStruct((n, nt, 1, c4), jnp.float32)
    stats_spec = pl.BlockSpec((1, 1, 1, c4), lambda i, t: (i, t, 0, 0))
    cparams = pltpu.CompilerParams(
        dimension_semantics=("parallel", "parallel"),
        vmem_limit_bytes=vmem_limit)

    # ---- stage 1: fused (transp-conv ⊕ concat ⊕ conv1) + IN1 partial sums.
    flops1 = 2 * 9 * n * h * w * k1 * c4
    bytes1 = ((comb.size + comb_halo.size + w1_tap.size) * itemsize
              + (n * h * wp * c4 + n * nt * 2 * wp * c4) * itemsize
              + 2 * n * nt * c4 * 4)
    out1, halo1, sum1, ssq1 = pl.pallas_call(
        functools.partial(_conv1_kernel, th=th, w=w, c4=c4),
        out_shape=(jax.ShapeDtypeStruct((n, h, wp, c4), compute_dtype),
                   jax.ShapeDtypeStruct((n, nt, 2, wp, c4), compute_dtype),
                   stats_shape, stats_shape),
        grid=grid,
        in_specs=[
            pl.BlockSpec((1, th, wp, k1), lambda i, t: (i, t, 0, 0)),
            pl.BlockSpec((1, 1, 2, wp, k1), lambda i, t: (i, t, 0, 0, 0)),
            pl.BlockSpec((3, 3, k1, c4), lambda i, t: (0, 0, 0, 0)),
        ],
        out_specs=(
            pl.BlockSpec((1, th, wp, c4), lambda i, t: (i, t, 0, 0)),
            pl.BlockSpec((1, 1, 2, wp, c4), lambda i, t: (i, t, 0, 0, 0)),
            stats_spec, stats_spec),
        compiler_params=cparams,
        cost_estimate=pl.CostEstimate(
            flops=flops1, transcendentals=0, bytes_accessed=bytes1),
    )(comb, comb_halo, w1_tap)

    count = jnp.float32(4 * h * w)
    mean1, inv1 = _stats_to_norm(sum1, ssq1, n, cp, count)
    o1_halo = _shuffle_halos(halo1)     # tiny shuffle; boundary halos are zeros

    # ---- stage 2: (IN1 + LeakyReLU fused into input) conv2 + IN2 partial sums.
    out2_dtype = compute_dtype if use_bf16 else jnp.float32
    flops2 = 2 * 9 * n * h * w * c4 * c4
    bytes2 = ((n * h * wp * c4 + n * nt * 2 * wp * c4 + w2_tap.size) * itemsize
              + n * h * w * c4 * jnp.dtype(out2_dtype).itemsize
              + 2 * n * nt * c4 * 4)
    out2, sum2, ssq2 = pl.pallas_call(
        functools.partial(_conv2_kernel, th=th, w=w, c4=c4,
                          compute_dtype=compute_dtype),
        out_shape=(jax.ShapeDtypeStruct((n, h, w, c4), out2_dtype),
                   stats_shape, stats_shape),
        grid=grid,
        in_specs=[
            pl.BlockSpec((1, th, wp, c4), lambda i, t: (i, t, 0, 0)),
            pl.BlockSpec((1, 1, 2, wp, c4), lambda i, t: (i, t, 0, 0, 0)),
            pl.BlockSpec((1, 1, c4), lambda i, t: (i, 0, 0)),
            pl.BlockSpec((1, 1, c4), lambda i, t: (i, 0, 0)),
            pl.BlockSpec((3, 3, c4, c4), lambda i, t: (0, 0, 0, 0)),
        ],
        out_specs=(
            pl.BlockSpec((1, th, w, c4), lambda i, t: (i, t, 0, 0)),
            stats_spec, stats_spec),
        compiler_params=cparams,
        cost_estimate=pl.CostEstimate(
            flops=flops2, transcendentals=0, bytes_accessed=bytes2),
    )(out1, o1_halo, mean1, inv1, w2_tap)

    # ---- final IN2 + LeakyReLU + depth-to-space + NCHW (one fused XLA pass).
    mean2, inv2 = _stats_to_norm(sum2, ssq2, n, cp, count)
    y = (out2.astype(jnp.float32) - mean2[:, :, None, :]) * inv2[:, :, None, :]
    y = jnp.where(y >= 0.0, y, _NEG_SLOPE * y)
    y = y.reshape(n, h, w, 2, 2, cp)[..., :cout]
    y = jnp.transpose(y, (0, 1, 3, 2, 4, 5)).reshape(n, 2 * h, 2 * w, cout)
    return jnp.transpose(y, (0, 3, 1, 2)).astype(jnp.float32)


# ---------------------------------------------------------------------------
# Pure-JAX reference (independent of the Pallas path) for verification.
# ---------------------------------------------------------------------------
def reference_forward(inp_nchw, skip_nchw, wt, w1, w2):
    # transposed conv == lhs-dilated conv with flipped, IO-swapped kernel
    w_flip = jnp.flip(wt, axis=(2, 3))
    w_conv = jnp.transpose(w_flip, (1, 0, 2, 3))          # OIHW
    up = jax.lax.conv_general_dilated(
        inp_nchw, w_conv, window_strides=(1, 1),
        padding=((1, 1), (1, 1)), lhs_dilation=(2, 2),
        dimension_numbers=("NCHW", "OIHW", "NCHW"))
    x = jnp.concatenate([up, skip_nchw], axis=1)

    def conv3(x, w):
        return jax.lax.conv_general_dilated(
            x, w, (1, 1), ((1, 1), (1, 1)),
            dimension_numbers=("NCHW", "OIHW", "NCHW"))

    def inorm(x):
        mean = x.mean(axis=(2, 3), keepdims=True)
        var = ((x - mean) ** 2).mean(axis=(2, 3), keepdims=True)
        return (x - mean) * jax.lax.rsqrt(var + _EPS)

    def lrelu(x):
        return jnp.where(x >= 0, x, _NEG_SLOPE * x)

    y = lrelu(inorm(conv3(x, w1)))
    y = lrelu(inorm(conv3(y, w2)))
    return y


# ---------------------------------------------------------------------------
if __name__ == "__main__":
    # Module config: spatial_dims=2, in_channels=8, out_channels=4,
    # kernel_size=3, upsample_kernel_size=2, norm_name="instance",
    # res_block=False.  Low-res input 16x16 -> output 32x32.
    N, Cin, Cout, H, W = 2, 8, 4, 16, 16

    key = jax.random.PRNGKey(0)
    ka, kb, kc, kd, ke = jax.random.split(key, 5)
    inp = jax.random.normal(ka, (N, Cin, H, W), jnp.float32)
    skip = jax.random.normal(kb, (N, Cout, 2 * H, 2 * W), jnp.float32)

    # Deterministic synthetic parameters (bias=False everywhere per module).
    wt = 0.1 * jax.random.normal(kc, (Cin, Cout, 2, 2), jnp.float32)
    w1 = 0.1 * jax.random.normal(kd, (Cout, 2 * Cout, 3, 3), jnp.float32)
    w2 = 0.1 * jax.random.normal(ke, (Cout, Cout, 3, 3), jnp.float32)

    ref = reference_forward(inp, skip, wt, w1, w2)

    # f32 path, explicit row tiling (exercises halos): strict check.
    out = unetr_up_block_forward(inp, skip, wt, w1, w2, tile_rows=8)
    out = jax.block_until_ready(out)
    assert out.shape == (N, Cout, 2 * H, 2 * W), out.shape
    max_err = float(jnp.max(jnp.abs(out - ref)))
    assert jnp.allclose(out, ref, rtol=3e-3, atol=3e-3), max_err

    # bf16 matmul/storage path + auto tile picker: smoke check.
    out_bf16 = unetr_up_block_forward(inp, skip, wt, w1, w2, use_bf16=True)
    out_bf16 = jax.block_until_ready(out_bf16)
    max_err_bf16 = float(jnp.max(jnp.abs(out_bf16 - ref)))
    assert max_err_bf16 < 0.2, max_err_bf16

    print("KERNEL_OK")
</pallas_src>

<mosaic_0001>
module attributes {stable_mosaic.version = 11 : i64} {
  func.func @_conv1_kernel(%arg0: i32, %arg1: i32, %arg2: memref<1x8x18x136xf32, #tpu.memory_space<vmem>>, %arg3: memref<1x1x2x18x136xf32, #tpu.memory_space<vmem>>, %arg4: memref<3x3x136x128xf32, #tpu.memory_space<vmem>>, %arg5: memref<1x8x18x128xf32, #tpu.memory_space<vmem>>, %arg6: memref<1x1x2x18x128xf32, #tpu.memory_space<vmem>>, %arg7: memref<1x1x1x128xf32, #tpu.memory_space<vmem>>, %arg8: memref<1x1x1x128xf32, #tpu.memory_space<vmem>>) attributes {dimension_semantics = [#tpu.dimension_semantics<parallel>, #tpu.dimension_semantics<parallel>], iteration_bounds = array<i64: 2, 2>, scalar_prefetch = 0 : i64, scratch_operands = 0 : i64, tpu.core_type = #tpu.core_type<tc>, window_params = [{transform_indices = @transform_0, window_bounds = array<i64: 1, 8, 18, 136>}, {transform_indices = @transform_1, window_bounds = array<i64: 1, 1, 2, 18, 136>}, {pipeline_mode = #tpu.pipeline_mode<synchronous>, transform_indices = @transform_2, window_bounds = array<i64: 3, 3, 136, 128>}, {transform_indices = @transform_3, window_bounds = array<i64: 1, 8, 18, 128>}, {transform_indices = @transform_4, window_bounds = array<i64: 1, 1, 2, 18, 128>}, {transform_indices = @transform_5, window_bounds = array<i64: 1, 1, 1, 128>}, {transform_indices = @transform_6, window_bounds = array<i64: 1, 1, 1, 128>}]} {
    %c0 = arith.constant 0 : index
    %c0_0 = arith.constant 0 : index
    %c0_1 = arith.constant 0 : index
    %c0_2 = arith.constant 0 : index
    %c0_3 = arith.constant 0 : index
    %0 = vector.load %arg3[%c0, %c0_0, %c0_1, %c0_2, %c0_3] : memref<1x1x2x18x136xf32, #tpu.memory_space<vmem>>, vector<1x1x2x18x136xf32>
    %1 = vector.shape_cast %0 : vector<1x1x2x18x136xf32> to vector<2x18x136xf32>
    %2 = vector.extract_strided_slice %1 {offsets = [0, 0, 0], sizes = [1, 18, 136], strides = [1, 1, 1]} : vector<2x18x136xf32> to vector<1x18x136xf32>
    %c0_4 = arith.constant 0 : index
    %c0_5 = arith.constant 0 : index
    %c0_6 = arith.constant 0 : index
    %c0_7 = arith.constant 0 : index
    %3 = vector.load %arg2[%c0_4, %c0_5, %c0_6, %c0_7] : memref<1x8x18x136xf32, #tpu.memory_space<vmem>>, vector<1x8x18x136xf32>
    %4 = vector.shape_cast %3 : vector<1x8x18x136xf32> to vector<8x18x136xf32>
    %5 = vector.extract_strided_slice %1 {offsets = [1, 0, 0], sizes = [1, 18, 136], strides = [1, 1, 1]} : vector<2x18x136xf32> to vector<1x18x136xf32>
    %6 = tpu.concatenate %2, %4, %5 in 0 : vector<1x18x136xf32>, vector<8x18x136xf32>, vector<1x18x136xf32> -> vector<10x18x136xf32>
    %cst = arith.constant 0.000000e+00 : f32
    %7 = vector.broadcast %cst : f32 to vector<128x128xf32>
    %8 = vector.extract_strided_slice %6 {offsets = [0, 0, 0], sizes = [8, 16, 136], strides = [1, 1, 1]} : vector<10x18x136xf32> to vector<8x16x136xf32>
    %9 = vector.shape_cast %8 : vector<8x16x136xf32> to vector<128x136xf32>
    %c0_8 = arith.constant 0 : index
    %c0_9 = arith.constant 0 : index
    %c0_10 = arith.constant 0 : index
    %c0_11 = arith.constant 0 : index
    %10 = vector.load %arg4[%c0_8, %c0_9, %c0_10, %c0_11] : memref<3x3x136x128xf32, #tpu.memory_space<vmem>>, vector<1x1x136x128xf32>
    %11 = vector.shape_cast %10 : vector<1x1x136x128xf32> to vector<136x128xf32>
    %cst_12 = arith.constant dense<0.000000e+00> : vector<128x128xf32>
    %12 = tpu.matmul %9, %11, %cst_12 {dimension_numbers = #tpu.dot_dimension_numbers<[1], [0], [0], [1], [0, 0, 1, 1], [], []>} : vector<128x136xf32>, vector<136x128xf32>, vector<128x128xf32> -> vector<128x128xf32>
    %13 = arith.addf %7, %12 : vector<128x128xf32>
    %14 = vector.extract_strided_slice %6 {offsets = [0, 1, 0], sizes = [8, 16, 136], strides = [1, 1, 1]} : vector<10x18x136xf32> to vector<8x16x136xf32>
    %15 = vector.shape_cast %14 : vector<8x16x136xf32> to vector<128x136xf32>
    %c0_13 = arith.constant 0 : index
    %c1 = arith.constant 1 : index
    %c0_14 = arith.constant 0 : index
    %c0_15 = arith.constant 0 : index
    %16 = vector.load %arg4[%c0_13, %c1, %c0_14, %c0_15] : memref<3x3x136x128xf32, #tpu.memory_space<vmem>>, vector<1x1x136x128xf32>
    %17 = vector.shape_cast %16 : vector<1x1x136x128xf32> to vector<136x128xf32>
    %cst_16 = arith.constant dense<0.000000e+00> : vector<128x128xf32>
    %18 = tpu.matmul %15, %17, %cst_16 {dimension_numbers = #tpu.dot_dimension_numbers<[1], [0], [0], [1], [0, 0, 1, 1], [], []>} : vector<128x136xf32>, vector<136x128xf32>, vector<128x128xf32> -> vector<128x128xf32>
    %19 = arith.addf %13, %18 : vector<128x128xf32>
    %20 = vector.extract_strided_slice %6 {offsets = [0, 2, 0], sizes = [8, 16, 136], strides = [1, 1, 1]} : vector<10x18x136xf32> to vector<8x16x136xf32>
    %21 = vector.shape_cast %20 : vector<8x16x136xf32> to vector<128x136xf32>
    %c0_17 = arith.constant 0 : index
    %c2 = arith.constant 2 : index
    %c0_18 = arith.constant 0 : index
    %c0_19 = arith.constant 0 : index
    %22 = vector.load %arg4[%c0_17, %c2, %c0_18, %c0_19] : memref<3x3x136x128xf32, #tpu.memory_space<vmem>>, vector<1x1x136x128xf32>
    %23 = vector.shape_cast %22 : vector<1x1x136x128xf32> to vector<136x128xf32>
    %cst_20 = arith.constant dense<0.000000e+00> : vector<128x128xf32>
    %24 = tpu.matmul %21, %23, %cst_20 {dimension_numbers = #tpu.dot_dimension_numbers<[1], [0], [0], [1], [0, 0, 1, 1], [], []>} : vector<128x136xf32>, vector<136x128xf32>, vector<128x128xf32> -> vector<128x128xf32>
    %25 = arith.addf %19, %24 : vector<128x128xf32>
    %26 = vector.extract_strided_slice %6 {offsets = [1, 0, 0], sizes = [8, 16, 136], strides = [1, 1, 1]} : vector<10x18x136xf32> to vector<8x16x136xf32>
    %27 = vector.shape_cast %26 : vector<8x16x136xf32> to vector<128x136xf32>
    %c1_21 = arith.constant 1 : index
    %c0_22 = arith.constant 0 : index
    %c0_23 = arith.constant 0 : index
    %c0_24 = arith.constant 0 : index
    %28 = vector.load %arg4[%c1_21, %c0_22, %c0_23, %c0_24] : memref<3x3x136x128xf32, #tpu.memory_space<vmem>>, vector<1x1x136x128xf32>
    %29 = vector.shape_cast %28 : vector<1x1x136x128xf32> to vector<136x128xf32>
    %cst_25 = arith.constant dense<0.000000e+00> : vector<128x128xf32>
    %30 = tpu.matmul %27, %29, %cst_25 {dimension_numbers = #tpu.dot_dimension_numbers<[1], [0], [0], [1], [0, 0, 1, 1], [], []>} : vector<128x136xf32>, vector<136x128xf32>, vector<128x128xf32> -> vector<128x128xf32>
    %31 = arith.addf %25, %30 : vector<128x128xf32>
    %32 = vector.extract_strided_slice %6 {offsets = [1, 1, 0], sizes = [8, 16, 136], strides = [1, 1, 1]} : vector<10x18x136xf32> to vector<8x16x136xf32>
    %33 = vector.shape_cast %32 : vector<8x16x136xf32> to vector<128x136xf32>
    %c1_26 = arith.constant 1 : index
    %c1_27 = arith.constant 1 : index
    %c0_28 = arith.constant 0 : index
    %c0_29 = arith.constant 0 : index
    %34 = vector.load %arg4[%c1_26, %c1_27, %c0_28, %c0_29] : memref<3x3x136x128xf32, #tpu.memory_space<vmem>>, vector<1x1x136x128xf32>
    %35 = vector.shape_cast %34 : vector<1x1x136x128xf32> to vector<136x128xf32>
    %cst_30 = arith.constant dense<0.000000e+00> : vector<128x128xf32>
    %36 = tpu.matmul %33, %35, %cst_30 {dimension_numbers = #tpu.dot_dimension_numbers<[1], [0], [0], [1], [0, 0, 1, 1], [], []>} : vector<128x136xf32>, vector<136x128xf32>, vector<128x128xf32> -> vector<128x128xf32>
    %37 = arith.addf %31, %36 : vector<128x128xf32>
    %38 = vector.extract_strided_slice %6 {offsets = [1, 2, 0], sizes = [8, 16, 136], strides = [1, 1, 1]} : vector<10x18x136xf32> to vector<8x16x136xf32>
    %39 = vector.shape_cast %38 : vector<8x16x136xf32> to vector<128x136xf32>
    %c1_31 = arith.constant 1 : index
    %c2_32 = arith.constant 2 : index
    %c0_33 = arith.constant 0 : index
    %c0_34 = arith.constant 0 : index
    %40 = vector.load %arg4[%c1_31, %c2_32, %c0_33, %c0_34] : memref<3x3x136x128xf32, #tpu.memory_space<vmem>>, vector<1x1x136x128xf32>
    %41 = vector.shape_cast %40 : vector<1x1x136x128xf32> to vector<136x128xf32>
    %cst_35 = arith.constant dense<0.000000e+00> : vector<128x128xf32>
    %42 = tpu.matmul %39, %41, %cst_35 {dimension_numbers = #tpu.dot_dimension_numbers<[1], [0], [0], [1], [0, 0, 1, 1], [], []>} : vector<128x136xf32>, vector<136x128xf32>, vector<128x128xf32> -> vector<128x128xf32>
    %43 = arith.addf %37, %42 : vector<128x128xf32>
    %44 = vector.extract_strided_slice %6 {offsets = [2, 0, 0], sizes = [8, 16, 136], strides = [1, 1, 1]} : vector<10x18x136xf32> to vector<8x16x136xf32>
    %45 = vector.shape_cast %44 : vector<8x16x136xf32> to vector<128x136xf32>
    %c2_36 = arith.constant 2 : index
    %c0_37 = arith.constant 0 : index
    %c0_38 = arith.constant 0 : index
    %c0_39 = arith.constant 0 : index
    %46 = vector.load %arg4[%c2_36, %c0_37, %c0_38, %c0_39] : memref<3x3x136x128xf32, #tpu.memory_space<vmem>>, vector<1x1x136x128xf32>
    %47 = vector.shape_cast %46 : vector<1x1x136x128xf32> to vector<136x128xf32>
    %cst_40 = arith.constant dense<0.000000e+00> : vector<128x128xf32>
    %48 = tpu.matmul %45, %47, %cst_40 {dimension_numbers = #tpu.dot_dimension_numbers<[1], [0], [0], [1], [0, 0, 1, 1], [], []>} : vector<128x136xf32>, vector<136x128xf32>, vector<128x128xf32> -> vector<128x128xf32>
    %49 = arith.addf %43, %48 : vector<128x128xf32>
    %50 = vector.extract_strided_slice %6 {offsets = [2, 1, 0], sizes = [8, 16, 136], strides = [1, 1, 1]} : vector<10x18x136xf32> to vector<8x16x136xf32>
    %51 = vector.shape_cast %50 : vector<8x16x136xf32> to vector<128x136xf32>
    %c2_41 = arith.constant 2 : index
    %c1_42 = arith.constant 1 : index
    %c0_43 = arith.constant 0 : index
    %c0_44 = arith.constant 0 : index
    %52 = vector.load %arg4[%c2_41, %c1_42, %c0_43, %c0_44] : memref<3x3x136x128xf32, #tpu.memory_space<vmem>>, vector<1x1x136x128xf32>
    %53 = vector.shape_cast %52 : vector<1x1x136x128xf32> to vector<136x128xf32>
    %cst_45 = arith.constant dense<0.000000e+00> : vector<128x128xf32>
    %54 = tpu.matmul %51, %53, %cst_45 {dimension_numbers = #tpu.dot_dimension_numbers<[1], [0], [0], [1], [0, 0, 1, 1], [], []>} : vector<128x136xf32>, vector<136x128xf32>, vector<128x128xf32> -> vector<128x128xf32>
    %55 = arith.addf %49, %54 : vector<128x128xf32>
    %56 = vector.extract_strided_slice %6 {offsets = [2, 2, 0], sizes = [8, 16, 136], strides = [1, 1, 1]} : vector<10x18x136xf32> to vector<8x16x136xf32>
    %57 = vector.shape_cast %56 : vector<8x16x136xf32> to vector<128x136xf32>
    %c2_46 = arith.constant 2 : index
    %c2_47 = arith.constant 2 : index
    %c0_48 = arith.constant 0 : index
    %c0_49 = arith.constant 0 : index
    %58 = vector.load %arg4[%c2_46, %c2_47, %c0_48, %c0_49] : memref<3x3x136x128xf32, #tpu.memory_space<vmem>>, vector<1x1x136x128xf32>
    %59 = vector.shape_cast %58 : vector<1x1x136x128xf32> to vector<136x128xf32>
    %cst_50 = arith.constant dense<0.000000e+00> : vector<128x128xf32>
    %60 = tpu.matmul %57, %59, %cst_50 {dimension_numbers = #tpu.dot_dimension_numbers<[1], [0], [0], [1], [0, 0, 1, 1], [], []>} : vector<128x136xf32>, vector<136x128xf32>, vector<128x128xf32> -> vector<128x128xf32>
    %61 = arith.addf %55, %60 : vector<128x128xf32>
    %cst_51 = arith.constant dense<0.000000e+00> : vector<128xf32>
    %62 = vector.multi_reduction <add>, %61, %cst_51 [0] : vector<128x128xf32> to vector<128xf32>
    %63 = vector.shape_cast %62 : vector<128xf32> to vector<1x128xf32>
    %c0_52 = arith.constant 0 : index
    %c0_53 = arith.constant 0 : index
    %c0_54 = arith.constant 0 : index
    %c0_55 = arith.constant 0 : index
    %64 = vector.load %arg7[%c0_52, %c0_53, %c0_54, %c0_55] : memref<1x1x1x128xf32, #tpu.memory_space<vmem>>, vector<1x1x1x128xf32>
    %65 = vector.shape_cast %64 : vector<1x1x1x128xf32> to vector<1x128xf32>
    %66 = vector.shape_cast %63 : vector<1x128xf32> to vector<1x1x1x128xf32>
    tpu.vector_store %arg7[%c0_52, %c0_53, %c0_54, %c0_55], %66 {strides = array<i32>} : memref<1x1x1x128xf32, #tpu.memory_space<vmem>>, vector<1x1x1x128xf32>,
    %67 = arith.mulf %61, %61 : vector<128x128xf32>
    %cst_56 = arith.constant dense<0.000000e+00> : vector<128xf32>
    %68 = vector.multi_reduction <add>, %67, %cst_56 [0] : vector<128x128xf32> to vector<128xf32>
    %69 = vector.shape_cast %68 : vector<128xf32> to vector<1x128xf32>
    %c0_57 = arith.constant 0 : index
    %c0_58 = arith.constant 0 : index
    %c0_59 = arith.constant 0 : index
    %c0_60 = arith.constant 0 : index
    %70 = vector.load %arg8[%c0_57, %c0_58, %c0_59, %c0_60] : memref<1x1x1x128xf32, #tpu.memory_space<vmem>>, vector<1x1x1x128xf32>
    %71 = vector.shape_cast %70 : vector<1x1x1x128xf32> to vector<1x128xf32>
    %72 = vector.shape_cast %69 : vector<1x128xf32> to vector<1x1x1x128xf32>
    tpu.vector_store %arg8[%c0_57, %c0_58, %c0_59, %c0_60], %72 {strides = array<i32>} : memref<1x1x1x128xf32, #tpu.memory_space<vmem>>, vector<1x1x1x128xf32>,
    %73 = vector.shape_cast %61 : vector<128x128xf32> to vector<8x16x128xf32>
    %cst_61 = arith.constant 0.000000e+00 : f32
    %74 = vector.broadcast %cst_61 : f32 to vector<8x1x128xf32>
    %75 = tpu.concatenate %74, %73, %74 in 1 : vector<8x1x128xf32>, vector<8x16x128xf32>, vector<8x1x128xf32> -> vector<8x18x128xf32>
    %c0_62 = arith.constant 0 : index
    %c0_63 = arith.constant 0 : index
    %c0_64 = arith.constant 0 : index
    %c0_65 = arith.constant 0 : index
    %76 = vector.load %arg5[%c0_62, %c0_63, %c0_64, %c0_65] : memref<1x8x18x128xf32, #tpu.memory_space<vmem>>, vector<1x8x18x128xf32>
    %77 = vector.shape_cast %76 : vector<1x8x18x128xf32> to vector<8x18x128xf32>
    %78 = vector.shape_cast %75 : vector<8x18x128xf32> to vector<1x8x18x128xf32>
    tpu.vector_store %arg5[%c0_62, %c0_63, %c0_64, %c0_65], %78 {strides = array<i32>} : memref<1x8x18x128xf32, #tpu.memory_space<vmem>>, vector<1x8x18x128xf32>,
    %79 = vector.extract_strided_slice %75 {offsets = [0, 0, 0], sizes = [1, 18, 128], strides = [1, 1, 1]} : vector<8x18x128xf32> to vector<1x18x128xf32>
    %80 = vector.extract_strided_slice %75 {offsets = [7, 0, 0], sizes = [1, 18, 128], strides = [1, 1, 1]} : vector<8x18x128xf32> to vector<1x18x128xf32>
    %81 = tpu.concatenate %79, %80 in 0 : vector<1x18x128xf32>, vector<1x18x128xf32> -> vector<2x18x128xf32>
    %c0_66 = arith.constant 0 : index
    %c0_67 = arith.constant 0 : index
    %c0_68 = arith.constant 0 : index
    %c0_69 = arith.constant 0 : index
    %c0_70 = arith.constant 0 : index
    %82 = vector.load %arg6[%c0_66, %c0_67, %c0_68, %c0_69, %c0_70] : memref<1x1x2x18x128xf32, #tpu.memory_space<vmem>>, vector<1x1x2x18x128xf32>
    %83 = vector.shape_cast %82 : vector<1x1x2x18x128xf32> to vector<2x18x128xf32>
    %84 = vector.shape_cast %81 : vector<2x18x128xf32> to vector<1x1x2x18x128xf32>
    tpu.vector_store %arg6[%c0_66, %c0_67, %c0_68, %c0_69, %c0_70], %84 {strides = array<i32>} : memref<1x1x2x18x128xf32, #tpu.memory_space<vmem>>, vector<1x1x2x18x128xf32>,
    return
  }
  func.func @transform_0(%arg0: i32, %arg1: i32) -> (i32, i32, i32, i32) {
    %c0_i32 = arith.constant 0 : i32
    %c0_i32_0 = arith.constant 0 : i32
    %c0_i32_1 = arith.constant 0 : i32
    return %arg0, %arg1, %c0_i32, %c0_i32_0 : i32, i32, i32, i32
  }
  func.func @transform_1(%arg0: i32, %arg1: i32) -> (i32, i32, i32, i32, i32) {
    %c0_i32 = arith.constant 0 : i32
    %c0_i32_0 = arith.constant 0 : i32
    %c0_i32_1 = arith.constant 0 : i32
    %c0_i32_2 = arith.constant 0 : i32
    return %arg0, %arg1, %c0_i32, %c0_i32_0, %c0_i32_1 : i32, i32, i32, i32, i32
  }
  func.func @transform_2(%arg0: i32, %arg1: i32) -> (i32, i32, i32, i32) {
    %c0_i32 = arith.constant 0 : i32
    %c0_i32_0 = arith.constant 0 : i32
    %c0_i32_1 = arith.constant 0 : i32
    %c0_i32_2 = arith.constant 0 : i32
    %c0_i32_3 = arith.constant 0 : i32
    return %c0_i32, %c0_i32_0, %c0_i32_1, %c0_i32_2 : i32, i32, i32, i32
  }
  func.func @transform_3(%arg0: i32, %arg1: i32) -> (i32, i32, i32, i32) {
    %c0_i32 = arith.constant 0 : i32
    %c0_i32_0 = arith.constant 0 : i32
    %c0_i32_1 = arith.constant 0 : i32
    return %arg0, %arg1, %c0_i32, %c0_i32_0 : i32, i32, i32, i32
  }
  func.func @transform_4(%arg0: i32, %arg1: i32) -> (i32, i32, i32, i32, i32) {
    %c0_i32 = arith.constant 0 : i32
    %c0_i32_0 = arith.constant 0 : i32
    %c0_i32_1 = arith.constant 0 : i32
    %c0_i32_2 = arith.constant 0 : i32
    return %arg0, %arg1, %c0_i32, %c0_i32_0, %c0_i32_1 : i32, i32, i32, i32, i32
  }
  func.func @transform_5(%arg0: i32, %arg1: i32) -> (i32, i32, i32, i32) {
    %c0_i32 = arith.constant 0 : i32
    %c0_i32_0 = arith.constant 0 : i32
    %c0_i32_1 = arith.constant 0 : i32
    return %arg0, %arg1, %c0_i32, %c0_i32_0 : i32, i32, i32, i32
  }
  func.func @transform_6(%arg0: i32, %arg1: i32) -> (i32, i32, i32, i32) {
    %c0_i32 = arith.constant 0 : i32
    %c0_i32_0 = arith.constant 0 : i32
    %c0_i32_1 = arith.constant 0 : i32
    return %arg0, %arg1, %c0_i32, %c0_i32_0 : i32, i32, i32, i32
  }
}

module attributes {stable_mosaic.version = 11 : i64} {
  func.func @_conv2_kernel(%arg0: i32, %arg1: i32, %arg2: memref<1x8x18x128xf32, #tpu.memory_space<vmem>>, %arg3: memref<1x1x2x18x128xf32, #tpu.memory_space<vmem>>, %arg4: memref<1x1x128xf32, #tpu.memory_space<vmem>>, %arg5: memref<1x1x128xf32, #tpu.memory_space<vmem>>, %arg6: memref<3x3x128x128xf32, #tpu.memory_space<vmem>>, %arg7: memref<1x8x16x128xf32, #tpu.memory_space<vmem>>, %arg8: memref<1x1x1x128xf32, #tpu.memory_space<vmem>>, %arg9: memref<1x1x1x128xf32, #tpu.memory_space<vmem>>) attributes {dimension_semantics = [#tpu.dimension_semantics<parallel>, #tpu.dimension_semantics<parallel>], iteration_bounds = array<i64: 2, 2>, scalar_prefetch = 0 : i64, scratch_operands = 0 : i64, tpu.core_type = #tpu.core_type<tc>, window_params = [{transform_indices = @transform_0, window_bounds = array<i64: 1, 8, 18, 128>}, {transform_indices = @transform_1, window_bounds = array<i64: 1, 1, 2, 18, 128>}, {transform_indices = @transform_2, window_bounds = array<i64: 1, 1, 128>}, {transform_indices = @transform_3, window_bounds = array<i64: 1, 1, 128>}, {pipeline_mode = #tpu.pipeline_mode<synchronous>, transform_indices = @transform_4, window_bounds = array<i64: 3, 3, 128, 128>}, {transform_indices = @transform_5, window_bounds = array<i64: 1, 8, 16, 128>}, {transform_indices = @transform_6, window_bounds = array<i64: 1, 1, 1, 128>}, {transform_indices = @transform_7, window_bounds = array<i64: 1, 1, 1, 128>}]} {
    %c0 = arith.constant 0 : index
    %c0_0 = arith.constant 0 : index
    %c0_1 = arith.constant 0 : index
    %0 = vector.load %arg4[%c0, %c0_0, %c0_1] : memref<1x1x128xf32, #tpu.memory_space<vmem>>, vector<1x1x128xf32>
    %c0_2 = arith.constant 0 : index
    %c0_3 = arith.constant 0 : index
    %c0_4 = arith.constant 0 : index
    %1 = vector.load %arg5[%c0_2, %c0_3, %c0_4] : memref<1x1x128xf32, #tpu.memory_space<vmem>>, vector<1x1x128xf32>
    %2 = tpu.iota {dimensions = array<i32: 1>} : vector<1x18xi32>
    %c1_i32 = arith.constant 1 : i32
    %3 = vector.broadcast %c1_i32 : i32 to vector<1x18xi32>
    %4 = arith.cmpi sge, %2, %3 : vector<1x18xi32>
    %c16_i32 = arith.constant 16 : i32
    %5 = vector.broadcast %c16_i32 : i32 to vector<1x18xi32>
    %6 = arith.cmpi sle, %2, %5 : vector<1x18xi32>
    %7 = arith.andi %4, %6 : vector<1x18xi1>
    %8 = arith.extui %7 : vector<1x18xi1> to vector<1x18xi32>
    %9 = arith.sitofp %8 : vector<1x18xi32> to vector<1x18xf32>
    %10 = vector.shape_cast %9 : vector<1x18xf32> to vector<1x18x1xf32>
    %c0_5 = arith.constant 0 : index
    %c0_6 = arith.constant 0 : index
    %c0_7 = arith.constant 0 : index
    %c0_8 = arith.constant 0 : index
    %c0_9 = arith.constant 0 : index
    %11 = vector.load %arg3[%c0_5, %c0_6, %c0_7, %c0_8, %c0_9] : memref<1x1x2x18x128xf32, #tpu.memory_space<vmem>>, vector<1x1x2x18x128xf32>
    %12 = vector.shape_cast %11 : vector<1x1x2x18x128xf32> to vector<2x18x128xf32>
    %13 = vector.extract_strided_slice %12 {offsets = [0, 0, 0], sizes = [1, 18, 128], strides = [1, 1, 1]} : vector<2x18x128xf32> to vector<1x18x128xf32>
    %14 = vector.broadcast %0 : vector<1x1x128xf32> to vector<1x18x128xf32>
    %15 = arith.subf %13, %14 : vector<1x18x128xf32>
    %16 = vector.broadcast %1 : vector<1x1x128xf32> to vector<1x18x128xf32>
    %17 = arith.mulf %15, %16 : vector<1x18x128xf32>
    %cst = arith.constant 0.000000e+00 : f32
    %18 = vector.broadcast %cst : f32 to vector<1x18x128xf32>
    %19 = arith.cmpf oge, %17, %18 : vector<1x18x128xf32>
    %cst_10 = arith.constant 0.00999999977 : f32
    %20 = vector.broadcast %cst_10 : f32 to vector<1x18x128xf32>
    %21 = arith.mulf %20, %17 : vector<1x18x128xf32>
    %22 = arith.select %19, %17, %21 : vector<1x18x128xi1>, vector<1x18x128xf32>
    %23 = vector.broadcast %10 : vector<1x18x1xf32> to vector<1x18x128xf32>
    %24 = arith.mulf %22, %23 : vector<1x18x128xf32>
    %c0_i32 = arith.constant 0 : i32
    %25 = arith.cmpi sgt, %arg1, %c0_i32 : i32
    %26 = arith.extui %25 : i1 to i32
    %27 = arith.sitofp %26 : i32 to f32
    %28 = vector.broadcast %27 : f32 to vector<1x18x128xf32>
    %29 = arith.mulf %24, %28 : vector<1x18x128xf32>
    %30 = vector.extract_strided_slice %12 {offsets = [1, 0, 0], sizes = [1, 18, 128], strides = [1, 1, 1]} : vector<2x18x128xf32> to vector<1x18x128xf32>
    %31 = vector.broadcast %0 : vector<1x1x128xf32> to vector<1x18x128xf32>
    %32 = arith.subf %30, %31 : vector<1x18x128xf32>
    %33 = vector.broadcast %1 : vector<1x1x128xf32> to vector<1x18x128xf32>
    %34 = arith.mulf %32, %33 : vector<1x18x128xf32>
    %cst_11 = arith.constant 0.000000e+00 : f32
    %35 = vector.broadcast %cst_11 : f32 to vector<1x18x128xf32>
    %36 = arith.cmpf oge, %34, %35 : vector<1x18x128xf32>
    %cst_12 = arith.constant 0.00999999977 : f32
    %37 = vector.broadcast %cst_12 : f32 to vector<1x18x128xf32>
    %38 = arith.mulf %37, %34 : vector<1x18x128xf32>
    %39 = arith.select %36, %34, %38 : vector<1x18x128xi1>, vector<1x18x128xf32>
    %40 = vector.broadcast %10 : vector<1x18x1xf32> to vector<1x18x128xf32>
    %41 = arith.mulf %39, %40 : vector<1x18x128xf32>
    %c1_i32_13 = arith.constant 1 : i32
    %42 = arith.cmpi slt, %arg1, %c1_i32_13 : i32
    %43 = arith.extui %42 : i1 to i32
    %44 = arith.sitofp %43 : i32 to f32
    %45 = vector.broadcast %44 : f32 to vector<1x18x128xf32>
    %46 = arith.mulf %41, %45 : vector<1x18x128xf32>
    %c0_14 = arith.constant 0 : index
    %c0_15 = arith.constant 0 : index
    %c0_16 = arith.constant 0 : index
    %c0_17 = arith.constant 0 : index
    %47 = vector.load %arg2[%c0_14, %c0_15, %c0_16, %c0_17] : memref<1x8x18x128xf32, #tpu.memory_space<vmem>>, vector<1x8x18x128xf32>
    %48 = vector.shape_cast %47 : vector<1x8x18x128xf32> to vector<8x18x128xf32>
    %49 = vector.broadcast %0 : vector<1x1x128xf32> to vector<8x18x128xf32>
    %50 = arith.subf %48, %49 : vector<8x18x128xf32>
    %51 = vector.broadcast %1 : vector<1x1x128xf32> to vector<8x18x128xf32>
    %52 = arith.mulf %50, %51 : vector<8x18x128xf32>
    %cst_18 = arith.constant 0.000000e+00 : f32
    %53 = vector.broadcast %cst_18 : f32 to vector<8x18x128xf32>
    %54 = arith.cmpf oge, %52, %53 : vector<8x18x128xf32>
    %cst_19 = arith.constant 0.00999999977 : f32
    %55 = vector.broadcast %cst_19 : f32 to vector<8x18x128xf32>
    %56 = arith.mulf %55, %52 : vector<8x18x128xf32>
    %57 = arith.select %54, %52, %56 : vector<8x18x128xi1>, vector<8x18x128xf32>
    %58 = vector.broadcast %10 : vector<1x18x1xf32> to vector<8x18x128xf32>
    %59 = arith.mulf %57, %58 : vector<8x18x128xf32>
    %60 = tpu.concatenate %29, %59, %46 in 0 : vector<1x18x128xf32>, vector<8x18x128xf32>, vector<1x18x128xf32> -> vector<10x18x128xf32>
    %cst_20 = arith.constant 0.000000e+00 : f32
    %61 = vector.broadcast %cst_20 : f32 to vector<128x128xf32>
    %62 = vector.extract_strided_slice %60 {offsets = [0, 0, 0], sizes = [8, 16, 128], strides = [1, 1, 1]} : vector<10x18x128xf32> to vector<8x16x128xf32>
    %63 = vector.shape_cast %62 : vector<8x16x128xf32> to vector<128x128xf32>
    %c0_21 = arith.constant 0 : index
    %c0_22 = arith.constant 0 : index
    %c0_23 = arith.constant 0 : index
    %c0_24 = arith.constant 0 : index
    %64 = vector.load %arg6[%c0_21, %c0_22, %c0_23, %c0_24] : memref<3x3x128x128xf32, #tpu.memory_space<vmem>>, vector<1x1x128x128xf32>
    %65 = vector.shape_cast %64 : vector<1x1x128x128xf32> to vector<128x128xf32>
    %cst_25 = arith.constant dense<0.000000e+00> : vector<128x128xf32>
    %66 = tpu.matmul %63, %65, %cst_25 {dimension_numbers = #tpu.dot_dimension_numbers<[1], [0], [0], [1], [0, 0, 1, 1], [], []>} : vector<128x128xf32>, vector<128x128xf32>, vector<128x128xf32> -> vector<128x128xf32>
    %67 = arith.addf %61, %66 : vector<128x128xf32>
    %68 = vector.extract_strided_slice %60 {offsets = [0, 1, 0], sizes = [8, 16, 128], strides = [1, 1, 1]} : vector<10x18x128xf32> to vector<8x16x128xf32>
    %69 = vector.shape_cast %68 : vector<8x16x128xf32> to vector<128x128xf32>
    %c0_26 = arith.constant 0 : index
    %c1 = arith.constant 1 : index
    %c0_27 = arith.constant 0 : index
    %c0_28 = arith.constant 0 : index
    %70 = vector.load %arg6[%c0_26, %c1, %c0_27, %c0_28] : memref<3x3x128x128xf32, #tpu.memory_space<vmem>>, vector<1x1x128x128xf32>
    %71 = vector.shape_cast %70 : vector<1x1x128x128xf32> to vector<128x128xf32>
    %cst_29 = arith.constant dense<0.000000e+00> : vector<128x128xf32>
    %72 = tpu.matmul %69, %71, %cst_29 {dimension_numbers = #tpu.dot_dimension_numbers<[1], [0], [0], [1], [0, 0, 1, 1], [], []>} : vector<128x128xf32>, vector<128x128xf32>, vector<128x128xf32> -> vector<128x128xf32>
    %73 = arith.addf %67, %72 : vector<128x128xf32>
    %74 = vector.extract_strided_slice %60 {offsets = [0, 2, 0], sizes = [8, 16, 128], strides = [1, 1, 1]} : vector<10x18x128xf32> to vector<8x16x128xf32>
    %75 = vector.shape_cast %74 : vector<8x16x128xf32> to vector<128x128xf32>
    %c0_30 = arith.constant 0 : index
    %c2 = arith.constant 2 : index
    %c0_31 = arith.constant 0 : index
    %c0_32 = arith.constant 0 : index
    %76 = vector.load %arg6[%c0_30, %c2, %c0_31, %c0_32] : memref<3x3x128x128xf32, #tpu.memory_space<vmem>>, vector<1x1x128x128xf32>
    %77 = vector.shape_cast %76 : vector<1x1x128x128xf32> to vector<128x128xf32>
    %cst_33 = arith.constant dense<0.000000e+00> : vector<128x128xf32>
    %78 = tpu.matmul %75, %77, %cst_33 {dimension_numbers = #tpu.dot_dimension_numbers<[1], [0], [0], [1], [0, 0, 1, 1], [], []>} : vector<128x128xf32>, vector<128x128xf32>, vector<128x128xf32> -> vector<128x128xf32>
    %79 = arith.addf %73, %78 : vector<128x128xf32>
    %80 = vector.extract_strided_slice %60 {offsets = [1, 0, 0], sizes = [8, 16, 128], strides = [1, 1, 1]} : vector<10x18x128xf32> to vector<8x16x128xf32>
    %81 = vector.shape_cast %80 : vector<8x16x128xf32> to vector<128x128xf32>
    %c1_34 = arith.constant 1 : index
    %c0_35 = arith.constant 0 : index
    %c0_36 = arith.constant 0 : index
    %c0_37 = arith.constant 0 : index
    %82 = vector.load %arg6[%c1_34, %c0_35, %c0_36, %c0_37] : memref<3x3x128x128xf32, #tpu.memory_space<vmem>>, vector<1x1x128x128xf32>
    %83 = vector.shape_cast %82 : vector<1x1x128x128xf32> to vector<128x128xf32>
    %cst_38 = arith.constant dense<0.000000e+00> : vector<128x128xf32>
    %84 = tpu.matmul %81, %83, %cst_38 {dimension_numbers = #tpu.dot_dimension_numbers<[1], [0], [0], [1], [0, 0, 1, 1], [], []>} : vector<128x128xf32>, vector<128x128xf32>, vector<128x128xf32> -> vector<128x128xf32>
    %85 = arith.addf %79, %84 : vector<128x128xf32>
    %86 = vector.extract_strided_slice %60 {offsets = [1, 1, 0], sizes = [8, 16, 128], strides = [1, 1, 1]} : vector<10x18x128xf32> to vector<8x16x128xf32>
    %87 = vector.shape_cast %86 : vector<8x16x128xf32> to vector<128x128xf32>
    %c1_39 = arith.constant 1 : index
    %c1_40 = arith.constant 1 : index
    %c0_41 = arith.constant 0 : index
    %c0_42 = arith.constant 0 : index
    %88 = vector.load %arg6[%c1_39, %c1_40, %c0_41, %c0_42] : memref<3x3x128x128xf32, #tpu.memory_space<vmem>>, vector<1x1x128x128xf32>
    %89 = vector.shape_cast %88 : vector<1x1x128x128xf32> to vector<128x128xf32>
    %cst_43 = arith.constant dense<0.000000e+00> : vector<128x128xf32>
    %90 = tpu.matmul %87, %89, %cst_43 {dimension_numbers = #tpu.dot_dimension_numbers<[1], [0], [0], [1], [0, 0, 1, 1], [], []>} : vector<128x128xf32>, vector<128x128xf32>, vector<128x128xf32> -> vector<128x128xf32>
    %91 = arith.addf %85, %90 : vector<128x128xf32>
    %92 = vector.extract_strided_slice %60 {offsets = [1, 2, 0], sizes = [8, 16, 128], strides = [1, 1, 1]} : vector<10x18x128xf32> to vector<8x16x128xf32>
    %93 = vector.shape_cast %92 : vector<8x16x128xf32> to vector<128x128xf32>
    %c1_44 = arith.constant 1 : index
    %c2_45 = arith.constant 2 : index
    %c0_46 = arith.constant 0 : index
    %c0_47 = arith.constant 0 : index
    %94 = vector.load %arg6[%c1_44, %c2_45, %c0_46, %c0_47] : memref<3x3x128x128xf32, #tpu.memory_space<vmem>>, vector<1x1x128x128xf32>
    %95 = vector.shape_cast %94 : vector<1x1x128x128xf32> to vector<128x128xf32>
    %cst_48 = arith.constant dense<0.000000e+00> : vector<128x128xf32>
    %96 = tpu.matmul %93, %95, %cst_48 {dimension_numbers = #tpu.dot_dimension_numbers<[1], [0], [0], [1], [0, 0, 1, 1], [], []>} : vector<128x128xf32>, vector<128x128xf32>, vector<128x128xf32> -> vector<128x128xf32>
    %97 = arith.addf %91, %96 : vector<128x128xf32>
    %98 = vector.extract_strided_slice %60 {offsets = [2, 0, 0], sizes = [8, 16, 128], strides = [1, 1, 1]} : vector<10x18x128xf32> to vector<8x16x128xf32>
    %99 = vector.shape_cast %98 : vector<8x16x128xf32> to vector<128x128xf32>
    %c2_49 = arith.constant 2 : index
    %c0_50 = arith.constant 0 : index
    %c0_51 = arith.constant 0 : index
    %c0_52 = arith.constant 0 : index
    %100 = vector.load %arg6[%c2_49, %c0_50, %c0_51, %c0_52] : memref<3x3x128x128xf32, #tpu.memory_space<vmem>>, vector<1x1x128x128xf32>
    %101 = vector.shape_cast %100 : vector<1x1x128x128xf32> to vector<128x128xf32>
    %cst_53 = arith.constant dense<0.000000e+00> : vector<128x128xf32>
    %102 = tpu.matmul %99, %101, %cst_53 {dimension_numbers = #tpu.dot_dimension_numbers<[1], [0], [0], [1], [0, 0, 1, 1], [], []>} : vector<128x128xf32>, vector<128x128xf32>, vector<128x128xf32> -> vector<128x128xf32>
    %103 = arith.addf %97, %102 : vector<128x128xf32>
    %104 = vector.extract_strided_slice %60 {offsets = [2, 1, 0], sizes = [8, 16, 128], strides = [1, 1, 1]} : vector<10x18x128xf32> to vector<8x16x128xf32>
    %105 = vector.shape_cast %104 : vector<8x16x128xf32> to vector<128x128xf32>
    %c2_54 = arith.constant 2 : index
    %c1_55 = arith.constant 1 : index
    %c0_56 = arith.constant 0 : index
    %c0_57 = arith.constant 0 : index
    %106 = vector.load %arg6[%c2_54, %c1_55, %c0_56, %c0_57] : memref<3x3x128x128xf32, #tpu.memory_space<vmem>>, vector<1x1x128x128xf32>
    %107 = vector.shape_cast %106 : vector<1x1x128x128xf32> to vector<128x128xf32>
    %cst_58 = arith.constant dense<0.000000e+00> : vector<128x128xf32>
    %108 = tpu.matmul %105, %107, %cst_58 {dimension_numbers = #tpu.dot_dimension_numbers<[1], [0], [0], [1], [0, 0, 1, 1], [], []>} : vector<128x128xf32>, vector<128x128xf32>, vector<128x128xf32> -> vector<128x128xf32>
    %109 = arith.addf %103, %108 : vector<128x128xf32>
    %110 = vector.extract_strided_slice %60 {offsets = [2, 2, 0], sizes = [8, 16, 128], strides = [1, 1, 1]} : vector<10x18x128xf32> to vector<8x16x128xf32>
    %111 = vector.shape_cast %110 : vector<8x16x128xf32> to vector<128x128xf32>
    %c2_59 = arith.constant 2 : index
    %c2_60 = arith.constant 2 : index
    %c0_61 = arith.constant 0 : index
    %c0_62 = arith.constant 0 : index
    %112 = vector.load %arg6[%c2_59, %c2_60, %c0_61, %c0_62] : memref<3x3x128x128xf32, #tpu.memory_space<vmem>>, vector<1x1x128x128xf32>
    %113 = vector.shape_cast %112 : vector<1x1x128x128xf32> to vector<128x128xf32>
    %cst_63 = arith.constant dense<0.000000e+00> : vector<128x128xf32>
    %114 = tpu.matmul %111, %113, %cst_63 {dimension_numbers = #tpu.dot_dimension_numbers<[1], [0], [0], [1], [0, 0, 1, 1], [], []>} : vector<128x128xf32>, vector<128x128xf32>, vector<128x128xf32> -> vector<128x128xf32>
    %115 = arith.addf %109, %114 : vector<128x128xf32>
    %cst_64 = arith.constant dense<0.000000e+00> : vector<128xf32>
    %116 = vector.multi_reduction <add>, %115, %cst_64 [0] : vector<128x128xf32> to vector<128xf32>
    %117 = vector.shape_cast %116 : vector<128xf32> to vector<1x128xf32>
    %c0_65 = arith.constant 0 : index
    %c0_66 = arith.constant 0 : index
    %c0_67 = arith.constant 0 : index
    %c0_68 = arith.constant 0 : index
    %118 = vector.load %arg8[%c0_65, %c0_66, %c0_67, %c0_68] : memref<1x1x1x128xf32, #tpu.memory_space<vmem>>, vector<1x1x1x128xf32>
    %119 = vector.shape_cast %118 : vector<1x1x1x128xf32> to vector<1x128xf32>
    %120 = vector.shape_cast %117 : vector<1x128xf32> to vector<1x1x1x128xf32>
    tpu.vector_store %arg8[%c0_65, %c0_66, %c0_67, %c0_68], %120 {strides = array<i32>} : memref<1x1x1x128xf32, #tpu.memory_space<vmem>>, vector<1x1x1x128xf32>,
    %121 = arith.mulf %115, %115 : vector<128x128xf32>
    %cst_69 = arith.constant dense<0.000000e+00> : vector<128xf32>
    %122 = vector.multi_reduction <add>, %121, %cst_69 [0] : vector<128x128xf32> to vector<128xf32>
    %123 = vector.shape_cast %122 : vector<128xf32> to vector<1x128xf32>
    %c0_70 = arith.constant 0 : index
    %c0_71 = arith.constant 0 : index
    %c0_72 = arith.constant 0 : index
    %c0_73 = arith.constant 0 : index
    %124 = vector.load %arg9[%c0_70, %c0_71, %c0_72, %c0_73] : memref<1x1x1x128xf32, #tpu.memory_space<vmem>>, vector<1x1x1x128xf32>
    %125 = vector.shape_cast %124 : vector<1x1x1x128xf32> to vector<1x128xf32>
    %126 = vector.shape_cast %123 : vector<1x128xf32> to vector<1x1x1x128xf32>
    tpu.vector_store %arg9[%c0_70, %c0_71, %c0_72, %c0_73], %126 {strides = array<i32>} : memref<1x1x1x128xf32, #tpu.memory_space<vmem>>, vector<1x1x1x128xf32>,
    %127 = vector.shape_cast %115 : vector<128x128xf32> to vector<8x16x128xf32>
    %c0_74 = arith.constant 0 : index
    %c0_75 = arith.constant 0 : index
    %c0_76 = arith.constant 0 : index
    %c0_77 = arith.constant 0 : index
    %128 = vector.load %arg7[%c0_74, %c0_75, %c0_76, %c0_77] : memref<1x8x16x128xf32, #tpu.memory_space<vmem>>, vector<1x8x16x128xf32>
    %129 = vector.shape_cast %128 : vector<1x8x16x128xf32> to vector<8x16x128xf32>
    %130 = vector.shape_cast %127 : vector<8x16x128xf32> to vector<1x8x16x128xf32>
    tpu.vector_store %arg7[%c0_74, %c0_75, %c0_76, %c0_77], %130 {strides = array<i32>} : memref<1x8x16x128xf32, #tpu.memory_space<vmem>>, vector<1x8x16x128xf32>,
    return
  }
  func.func @transform_0(%arg0: i32, %arg1: i32) -> (i32, i32, i32, i32) {
    %c0_i32 = arith.constant 0 : i32
    %c0_i32_0 = arith.constant 0 : i32
    %c0_i32_1 = arith.constant 0 : i32
    return %arg0, %arg1, %c0_i32, %c0_i32_0 : i32, i32, i32, i32
  }
  func.func @transform_1(%arg0: i32, %arg1: i32) -> (i32, i32, i32, i32, i32) {
    %c0_i32 = arith.constant 0 : i32
    %c0_i32_0 = arith.constant 0 : i32
    %c0_i32_1 = arith.constant 0 : i32
    %c0_i32_2 = arith.constant 0 : i32
    return %arg0, %arg1, %c0_i32, %c0_i32_0, %c0_i32_1 : i32, i32, i32, i32, i32
  }
  func.func @transform_2(%arg0: i32, %arg1: i32) -> (i32, i32, i32) {
    %c0_i32 = arith.constant 0 : i32
    %c0_i32_0 = arith.constant 0 : i32
    %c0_i32_1 = arith.constant 0 : i32
    return %arg0, %c0_i32, %c0_i32_0 : i32, i32, i32
  }
  func.func @transform_3(%arg0: i32, %arg1: i32) -> (i32, i32, i32) {
    %c0_i32 = arith.constant 0 : i32
    %c0_i32_0 = arith.constant 0 : i32
    %c0_i32_1 = arith.constant 0 : i32
    return %arg0, %c0_i32, %c0_i32_0 : i32, i32, i32
  }
  func.func @transform_4(%arg0: i32, %arg1: i32) -> (i32, i32, i32, i32) {
    %c0_i32 = arith.constant 0 : i32
    %c0_i32_0 = arith.constant 0 : i32
    %c0_i32_1 = arith.constant 0 : i32
    %c0_i32_2 = arith.constant 0 : i32
    %c0_i32_3 = arith.constant 0 : i32
    return %c0_i32, %c0_i32_0, %c0_i32_1, %c0_i32_2 : i32, i32, i32, i32
  }
  func.func @transform_5(%arg0: i32, %arg1: i32) -> (i32, i32, i32, i32) {
    %c0_i32 = arith.constant 0 : i32
    %c0_i32_0 = arith.constant 0 : i32
    %c0_i32_1 = arith.constant 0 : i32
    return %arg0, %arg1, %c0_i32, %c0_i32_0 : i32, i32, i32, i32
  }
  func.func @transform_6(%arg0: i32, %arg1: i32) -> (i32, i32, i32, i32) {
    %c0_i32 = arith.constant 0 : i32
    %c0_i32_0 = arith.constant 0 : i32
    %c0_i32_1 = arith.constant 0 : i32
    return %arg0, %arg1, %c0_i32, %c0_i32_0 : i32, i32, i32, i32
  }
  func.func @transform_7(%arg0: i32, %arg1: i32) -> (i32, i32, i32, i32) {
    %c0_i32 = arith.constant 0 : i32
    %c0_i32_0 = arith.constant 0 : i32
    %c0_i32_1 = arith.constant 0 : i32
    return %arg0, %arg1, %c0_i32, %c0_i32_0 : i32, i32, i32, i32
  }
}

</mosaic_0001>

<llo_original>
// kernel: unetr_up_block_forward.2
$region0: #{unetr_up_block_forward.2}
  #allocation0 [shape = 'u32[]', space=smem, size = 0x4, offset = 0x4, fixed_abs, tag = 'smem constant byte address 0x4 - core index']
  #allocation1 [shape = 'u32[144,128]{1,0:T(1,128)}', space=vmem, size = 0x12000, scoped, tag = 'internal scratch']
  %s0 = inlined_call_operand.hbm [shape: f32[2,16,18,136], index: 0, kind: input, shape index: {}]
  %s1 = inlined_call_operand.hbm [shape: f32[2,2,2,18,136], index: 1, kind: input, shape index: {}]
  %s2 = inlined_call_operand.hbm [shape: f32[3,3,136,128], index: 2, kind: input, shape index: {}]
  %s3 = inlined_call_operand.hbm [shape: f32[2,16,18,128], index: 3, kind: output, shape index: {0}]
  %s4 = inlined_call_operand.hbm [shape: f32[2,2,2,18,128], index: 4, kind: output, shape index: {1}]
  %s5 = inlined_call_operand.hbm [shape: f32[2,2,1,128], index: 5, kind: output, shape index: {2}]
  %s6 = inlined_call_operand.hbm [shape: f32[2,2,1,128], index: 6, kind: output, shape index: {3}]
  %7 = xla_tuple %s3, %s4, %s5, %s6
  %s8 = sld [smem:[#allocation0]]
  $region81: #{unetr_up_block_forward.2} parent=0
    _
  %s10 = ssub.s32 1, %s8
  %s11 = scalar_select 0, %s10, %s8
  $region1: #{unetr_up_block_forward.2} parent=0
    #allocation2 [shape = 'u8[393216]{0}', space=vmem, size = 0x60000, scoped, tag = 'input window, operand 0']
    #allocation3 [shape = 's32[2]{0}', space=sflag, size = 0x8, scoped, tag = 'scoped memory for unetr_up_block_forward.2']
    #allocation4 [shape = 's32[2]{0}', space=sflag, size = 0x8, scoped, tag = 'scoped memory for unetr_up_block_forward.2']
    #allocation5 [shape = 'u8[98304]{0}', space=vmem, size = 0x18000, scoped, tag = 'input window, operand 1']
    #allocation6 [shape = 's32[2]{0}', space=sflag, size = 0x8, scoped, tag = 'scoped memory for unetr_up_block_forward.2']
    #allocation7 [shape = 'u8[626688]{0}', space=vmem, size = 0x99000, scoped, tag = 'input window, operand 2, single buffered']
    #allocation8 [shape = 'u8[196608]{0}', space=vmem, size = 0x30000, scoped, tag = 'output window, operand 0']
    #allocation9 [shape = 'u8[49152]{0}', space=vmem, size = 0xc000, scoped, tag = 'output window, operand 1']
    #allocation10 [shape = 's32[2]{0}', space=sflag, size = 0x8, scoped, tag = 'scoped memory for unetr_up_block_forward.2']
    #allocation11 [shape = 'u8[1024]{0}', space=vmem, size = 0x400, scoped, tag = 'output window, operand 2']
    #allocation12 [shape = 'u8[1024]{0}', space=vmem, size = 0x400, scoped, tag = 'output window, operand 3']
    #allocation13 [shape = 's32[2]{0}', space=sflag, size = 0x8, scoped, tag = 'scoped memory for unetr_up_block_forward.2']
    %12 = vsyncpa [#allocation3], 0
    %s13 = scalar_lea.sflag [#allocation3], 1
    %14 = vsyncpa %s13, 0
    %15 = vsyncpa [#allocation6], 0
    %s16 = scalar_lea.sflag [#allocation6], 1
    %17 = vsyncpa %s16, 0
    %18 = vsyncpa [#allocation4], 0
    %s19 = scalar_lea.sflag [#allocation4], 1
    %20 = vsyncpa %s19, 0
    %21 = vsyncpa [#allocation10], 0
    %s22 = scalar_lea.sflag [#allocation10], 1
    %23 = vsyncpa %s22, 0
    %24 = vsyncpa [#allocation13], 0
    %s25 = scalar_lea.sflag [#allocation13], 1
    %26 = vsyncpa %s25, 0
    loop: start=0, step=1, limit=6
    $region2: #{unetr_up_block_forward.2} parent=1 // loop_pre_header
      _
    $region3: #{unetr_up_block_forward.2} parent=1 // loop_header
      %s28 = sphi 0, %s32
      %p29 = scmp.ge.s32.totalorder %s28, 6
      %s35 = sphi 0, %s47
      %s36 = sphi 0, %s43
      %s37 = sphi 0, %s35
      %s38 = sphi 0, %s36
      %s39 = sphi 0, %s37
      %s40 = sphi 0, %s38
      %s52 = sphi 0, %s54
      %s55 = sphi 0, %s52
      %s56 = sphi 0, %s55
      %s72 = sphi 0, %s56
      %s80 = sphi 0, %s82
      %s83 = sphi 0, %s80
      %s84 = sphi 0, %s83
      %s100 = sphi 0, %s84
      %s104 = sphi 0, %s104
      %s106 = sphi 0, %s104
      %s107 = sphi 0, %s106
      %s121 = sphi 0, %s107
      %s129 = sphi 0, %s131
      %s132 = sphi 0, %s129
      %s133 = sphi 0, %s132
      %s149 = sphi 0, %s133
      %s157 = sphi 0, %s159
      %s160 = sphi 0, %s157
      %s161 = sphi 0, %s160
      %s177 = sphi 0, %s161
      %s185 = sphi 0, %s187
      %s188 = sphi 0, %s185
      %s189 = sphi 0, %s188
      %s205 = sphi 0, %s189
      %s213 = sphi 0, %s215
      %s216 = sphi 0, %s213
      %s217 = sphi 0, %s216
      %s233 = sphi 0, %s217
    $region4: #{unetr_up_block_forward.2} parent=1 // loop_header_branch
      %31 = sbr.rel (%p29) target = $region8
    $region5: #{unetr_up_block_forward.2} parent=1 // loop_body
      %s33 = ssub.s32 %s28, 1
      %s34 = ssub.s32 %s28, 2
      %s41 = sadd.s32 1, %s36
      %p42 = scmp.ge.s32.totalorder %s41, 2
      %s43 = scalar_select %p42, 0, %s41
      %s44 = sadd.s32 1, %s35
      %s45 = scalar_select %p42, %s44, %s35
      %p46 = scmp.ge.s32.totalorder %s45, 2
      %s47 = scalar_select %p46, 0, %s45
      %s48 = ssub.s32 %s35, %s47
      %s49 = ssub.s32 %s36, %s43
      %s50 = sor.u32 %s48, %s49
      %p51 = scmp.eq.s32.totalorder %s50, 0
      %s53 = sadd.s32 %s52, 1
      %s54 = scalar_select %p51, %s52, %s53
      %p57 = pneg %p51
      %p58 = scmp.eq.s32.totalorder %s28, 3
      %p59 = por %p57, %p58
      %p60 = scmp.ne.s32.totalorder %s52, %s55
      %p61 = scmp.eq.s32.totalorder %s28, 0
      %p62 = por %p60, %p61
      %p63 = scmp.ne.s32.totalorder %s52, %s55
      %p64 = scmp.eq.s32.totalorder %s33, 3
      %p65 = por %p63, %p64
      %p66 = scmp.ne.s32.totalorder %s55, %s56
      %p67 = scmp.eq.s32.totalorder %s33, 0
      %p68 = por %p66, %p67
      %p69 = scmp.ne.s32.totalorder %s55, %s56
      %p70 = scmp.eq.s32.totalorder %s34, 3
      %p71 = por %p69, %p70
      %p73 = scmp.ne.s32.totalorder %s56, %s72
      %p74 = scmp.eq.s32.totalorder %s34, 0
      %p75 = por %p73, %p74
      %s76 = ssub.s32 %s35, %s47
      %s77 = ssub.s32 %s36, %s43
      %s78 = sor.u32 %s76, %s77
      %p79 = scmp.eq.s32.totalorder %s78, 0
      %s81 = sadd.s32 %s80, 1
      %s82 = scalar_select %p79, %s80, %s81
      %p85 = pneg %p79
      %p86 = scmp.eq.s32.totalorder %s28, 3
      %p87 = por %p85, %p86
      %p88 = scmp.ne.s32.totalorder %s80, %s83
      %p89 = scmp.eq.s32.totalorder %s28, 0
      %p90 = por %p88, %p89
      %p91 = scmp.ne.s32.totalorder %s80, %s83
      %p92 = scmp.eq.s32.totalorder %s33, 3
      %p93 = por %p91, %p92
      %p94 = scmp.ne.s32.totalorder %s83, %s84
      %p95 = scmp.eq.s32.totalorder %s33, 0
      %p96 = por %p94, %p95
      %p97 = scmp.ne.s32.totalorder %s83, %s84
      %p98 = scmp.eq.s32.totalorder %s34, 3
      %p99 = por %p97, %p98
      %p101 = scmp.ne.s32.totalorder %s84, %s100
      %p102 = scmp.eq.s32.totalorder %s34, 0
      %p103 = por %p101, %p102
      %s105 = sadd.s32 %s104, 1
      %p108 = scmp.eq.s32.totalorder %s28, 3
      %p109 = scmp.ne.s32.totalorder %s104, %s106
      %p110 = scmp.eq.s32.totalorder %s28, 0
      %p111 = por %p109, %p110
      %p112 = scmp.ne.s32.totalorder %s104, %s106
      %p113 = scmp.eq.s32.totalorder %s33, 3
      %p114 = por %p112, %p113
      %p115 = scmp.ne.s32.totalorder %s106, %s107
      %p116 = scmp.eq.s32.totalorder %s33, 0
      %p117 = por %p115, %p116
      %p118 = scmp.ne.s32.totalorder %s106, %s107
      %p119 = scmp.eq.s32.totalorder %s34, 3
      %p120 = por %p118, %p119
      %p122 = scmp.ne.s32.totalorder %s107, %s121
      %p123 = scmp.eq.s32.totalorder %s34, 0
      %p124 = por %p122, %p123
      %s125 = ssub.s32 %s35, %s47
      %s126 = ssub.s32 %s36, %s43
      %s127 = sor.u32 %s125, %s126
      %p128 = scmp.eq.s32.totalorder %s127, 0
      %s130 = sadd.s32 %s129, 1
      %s131 = scalar_select %p128, %s129, %s130
      %p134 = pneg %p128
      %p135 = scmp.eq.s32.totalorder %s28, 3
      %p136 = por %p134, %p135
      %p137 = scmp.ne.s32.totalorder %s129, %s132
      %p138 = scmp.eq.s32.totalorder %s28, 0
      %p139 = por %p137, %p138
      %p140 = scmp.ne.s32.totalorder %s129, %s132
      %p141 = scmp.eq.s32.totalorder %s33, 3
      %p142 = por %p140, %p141
      %p143 = scmp.ne.s32.totalorder %s132, %s133
      %p144 = scmp.eq.s32.totalorder %s33, 0
      %p145 = por %p143, %p144
      %p146 = scmp.ne.s32.totalorder %s132, %s133
      %p147 = scmp.eq.s32.totalorder %s34, 3
      %p148 = por %p146, %p147
      %p150 = scmp.ne.s32.totalorder %s133, %s149
      %p151 = scmp.eq.s32.totalorder %s34, 0
      %p152 = por %p150, %p151
      %s153 = ssub.s32 %s35, %s47
      %s154 = ssub.s32 %s36, %s43
      %s155 = sor.u32 %s153, %s154
      %p156 = scmp.eq.s32.totalorder %s155, 0
      %s158 = sadd.s32 %s157, 1
      %s159 = scalar_select %p156, %s157, %s158
      %p162 = pneg %p156
      %p163 = scmp.eq.s32.totalorder %s28, 3
      %p164 = por %p162, %p163
      %p165 = scmp.ne.s32.totalorder %s157, %s160
      %p166 = scmp.eq.s32.totalorder %s28, 0
      %p167 = por %p165, %p166
      %p168 = scmp.ne.s32.totalorder %s157, %s160
      %p169 = scmp.eq.s32.totalorder %s33, 3
      %p170 = por %p168, %p169
      %p171 = scmp.ne.s32.totalorder %s160, %s161
      %p172 = scmp.eq.s32.totalorder %s33, 0
      %p173 = por %p171, %p172
      %p174 = scmp.ne.s32.totalorder %s160, %s161
      %p175 = scmp.eq.s32.totalorder %s34, 3
      %p176 = por %p174, %p175
      %p178 = scmp.ne.s32.totalorder %s161, %s177
      %p179 = scmp.eq.s32.totalorder %s34, 0
      %p180 = por %p178, %p179
      %s181 = ssub.s32 %s35, %s47
      %s182 = ssub.s32 %s36, %s43
      %s183 = sor.u32 %s181, %s182
      %p184 = scmp.eq.s32.totalorder %s183, 0
      %s186 = sadd.s32 %s185, 1
      %s187 = scalar_select %p184, %s185, %s186
      %p190 = pneg %p184
      %p191 = scmp.eq.s32.totalorder %s28, 3
      %p192 = por %p190, %p191
      %p193 = scmp.ne.s32.totalorder %s185, %s188
      %p194 = scmp.eq.s32.totalorder %s28, 0
      %p195 = por %p193, %p194
      %p196 = scmp.ne.s32.totalorder %s185, %s188
      %p197 = scmp.eq.s32.totalorder %s33, 3
      %p198 = por %p196, %p197
      %p199 = scmp.ne.s32.totalorder %s188, %s189
      %p200 = scmp.eq.s32.totalorder %s33, 0
      %p201 = por %p199, %p200
      %p202 = scmp.ne.s32.totalorder %s188, %s189
      %p203 = scmp.eq.s32.totalorder %s34, 3
      %p204 = por %p202, %p203
      %p206 = scmp.ne.s32.totalorder %s189, %s205
      %p207 = scmp.eq.s32.totalorder %s34, 0
      %p208 = por %p206, %p207
      %s209 = ssub.s32 %s35, %s47
      %s210 = ssub.s32 %s36, %s43
      %s211 = sor.u32 %s209, %s210
      %p212 = scmp.eq.s32.totalorder %s211, 0
      %s214 = sadd.s32 %s213, 1
      %s215 = scalar_select %p212, %s213, %s214
      %p218 = pneg %p212
      %p219 = scmp.eq.s32.totalorder %s28, 3
      %p220 = por %p218, %p219
      %p221 = scmp.ne.s32.totalorder %s213, %s216
      %p222 = scmp.eq.s32.totalorder %s28, 0
      %p223 = por %p221, %p222
      %p224 = scmp.ne.s32.totalorder %s213, %s216
      %p225 = scmp.eq.s32.totalorder %s33, 3
      %p226 = por %p224, %p225
      %p227 = scmp.ne.s32.totalorder %s216, %s217
      %p228 = scmp.eq.s32.totalorder %s33, 0
      %p229 = por %p227, %p228
      %p230 = scmp.ne.s32.totalorder %s216, %s217
      %p231 = scmp.eq.s32.totalorder %s34, 3
      %p232 = por %p230, %p231
      %p234 = scmp.ne.s32.totalorder %s217, %s233
      %p235 = scmp.eq.s32.totalorder %s34, 0
      %p236 = por %p234, %p235
      %p237 = scmp.le.s32.totalorder 1, %s28
      %p238 = scmp.lt.s32.totalorder %s28, 5
      %p239 = pnand %p237, %p238
      %p240 = pneg %p239
      // Predicated region
      $region9: #{unetr_up_block_forward.2} parent=5 // pred_check
        _
      $region10: #{unetr_up_block_forward.2} parent=5 // pred_check_branch
        %242 = sbr.rel (%p239) target = $region12
      $region11: #{unetr_up_block_forward.2} parent=5 // pred_region
        %s243 = ssub.s32 %s28, 1
        // Predicated region
        $region13: #{unetr_up_block_forward.2} parent=11 // pred_check
          %p244 = pneg %p117
        $region14: #{unetr_up_block_forward.2} parent=11 // pred_check_branch
          %246 = sbr.rel (%p244) target = $region16
        $region15: #{unetr_up_block_forward.2} parent=11 // pred_region
          %s248 = ssub.s32 19584, 19584
          %249 = vsyncadd [#allocation6], %s248
          %s250 = sshll.u32 [#allocation7], 4
          %s251 = int_to_ptr.vmem [resolvable:$true] %s250
          %256 = dma.hbm_to_vmem [thread:$0]  %s2, 19584, %s251, [#allocation6], 128, 128, 8
        $region16: #{unetr_up_block_forward.2} parent=11 // pred_fallthru
          _
      $region12: #{unetr_up_block_forward.2} parent=5 // pred_fallthru
        _
      %p257 = scmp.lt.s32.totalorder %s28, 4
      // Predicated region
      $region17: #{unetr_up_block_forward.2} parent=5 // pred_check
        %p258 = pneg %p257
      $region18: #{unetr_up_block_forward.2} parent=5 // pred_check_branch
        %260 = sbr.rel (%p258) target = $region20
      $region19: #{unetr_up_block_forward.2} parent=5 // pred_region
        // Predicated region
        $region21: #{unetr_up_block_forward.2} parent=19 // pred_check
          %p261 = pneg %p62
        $region22: #{unetr_up_block_forward.2} parent=19 // pred_check_branch
          %263 = sbr.rel (%p261) target = $region24
        $region23: #{unetr_up_block_forward.2} parent=19 // pred_region
          %s264 = sand.u32 %s52, 1
          %s265 = scalar_lea.sflag [#allocation3], %s264
          %s266 = sand.u32 %s52, 1
          %s267 = smul.addr %s266, 384
          %s268 = scalar_lea.vmem [#allocation2], %s267
          %s269 = smul.u32 8, %s36
          %s271 = ssub.s32 6144, 6144
          %272 = vsyncadd %s265, %s271
          %s273 = smul.addr %s269, 6
          %s274 = smul.addr %s35, 96
          %s275 = sadd.s32 %s273, %s274
          %s276 = smul.addr %s275, 128
          %s277 = scalar_lea.hbm %s0, %s276
          %s278 = sshll.u32 %s268, 4
          %s279 = int_to_ptr.vmem [resolvable:$true] %s278
          %284 = dma.hbm_to_vmem [thread:$0]  %s277, 6144, %s279, %s265, 256, 256, 16
        $region24: #{unetr_up_block_forward.2} parent=19 // pred_fallthru
          _
        // Predicated region
        $region25: #{unetr_up_block_forward.2} parent=19 // pred_check
          %p285 = pneg %p90
        $region26: #{unetr_up_block_forward.2} parent=19 // pred_check_branch
          %287 = sbr.rel (%p285) target = $region28
        $region27: #{unetr_up_block_forward.2} parent=19 // pred_region
          %s288 = sand.u32 %s28, 1
          %s289 = scalar_lea.sflag [#allocation6], %s288
          %s290 = sand.u32 %s80, 1
          %s291 = smul.addr %s290, 96
          %s292 = scalar_lea.vmem [#allocation5], %s291
          %s294 = ssub.s32 1536, 1536
          %295 = vsyncadd %s289, %s294
          %s296 = smul.addr %s36, 12
          %s297 = smul.addr %s35, 24
          %s298 = sadd.s32 %s296, %s297
          %s299 = smul.addr %s298, 128
          %s300 = scalar_lea.hbm %s1, %s299
          %s301 = sshll.u32 %s292, 4
          %s302 = int_to_ptr.vmem [resolvable:$true] %s301
          %307 = dma.hbm_to_vmem [thread:$0]  %s300, 1536, %s302, %s289, 256, 256, 16
        $region28: #{unetr_up_block_forward.2} parent=19 // pred_fallthru
          _
      $region20: #{unetr_up_block_forward.2} parent=5 // pred_fallthru
        _
      %p308 = scmp.le.s32.totalorder 1, %s28
      %p309 = scmp.lt.s32.totalorder %s28, 5
      %p310 = pnand %p308, %p309
      %p311 = pneg %p310
      // Predicated region
      $region29: #{unetr_up_block_forward.2} parent=5 // pred_check
        _
      $region30: #{unetr_up_block_forward.2} parent=5 // pred_check_branch
        %313 = sbr.rel (%p310) target = $region32
      $region31: #{unetr_up_block_forward.2} parent=5 // pred_region
        %s314 = ssub.s32 %s28, 1
        %s315 = sand.u32 %s55, 1
        %s316 = scalar_lea.sflag [#allocation3], %s315
        %s317 = sand.u32 %s55, 1
        %s318 = smul.addr %s317, 384
        %s319 = scalar_lea.vmem [#allocation2], %s318
        // Predicated region
        $region33: #{unetr_up_block_forward.2} parent=31 // pred_check
          %p320 = pneg %p68
        $region34: #{unetr_up_block_forward.2} parent=31 // pred_check_branch
          %322 = sbr.rel (%p320) target = $region36
        $region35: #{unetr_up_block_forward.2} parent=31 // pred_region
          %323 = dma.done %s316, 6144
        $region36: #{unetr_up_block_forward.2} parent=31 // pred_fallthru
          _
        %s324 = sand.u32 %s33, 1
        %s325 = scalar_lea.sflag [#allocation6], %s324
        %s326 = sand.u32 %s83, 1
        %s327 = smul.addr %s326, 96
        %s328 = scalar_lea.vmem [#allocation5], %s327
        // Predicated region
        $region37: #{unetr_up_block_forward.2} parent=31 // pred_check
          %p329 = pneg %p96
        $region38: #{unetr_up_block_forward.2} parent=31 // pred_check_branch
          %331 = sbr.rel (%p329) target = $region40
        $region39: #{unetr_up_block_forward.2} parent=31 // pred_region
          %332 = dma.done %s325, 1536
        $region40: #{unetr_up_block_forward.2} parent=31 // pred_fallthru
          _
        // Predicated region
        $region41: #{unetr_up_block_forward.2} parent=31 // pred_check
          %p333 = pneg %p117
        $region42: #{unetr_up_block_forward.2} parent=31 // pred_check_branch
          %335 = sbr.rel (%p333) target = $region44
        $region43: #{unetr_up_block_forward.2} parent=31 // pred_region
          %336 = dma.done [#allocation6], 19584
        $region44: #{unetr_up_block_forward.2} parent=31 // pred_fallthru
          _
        %s337 = sand.u32 %s55, 1
        %s338 = scalar_lea.sflag [#allocation3], %s337
        %s339 = sand.u32 %s55, 1
        %s340 = smul.addr %s339, 384
        %s341 = scalar_lea.vmem [#allocation2], %s340
        %p342 = pneg %p68
        %p343 = pneg %p65
        %s344 = sand.u32 %s33, 1
        %s345 = scalar_lea.sflag [#allocation6], %s344
        %s346 = sand.u32 %s83, 1
        %s347 = smul.addr %s346, 96
        %s348 = scalar_lea.vmem [#allocation5], %s347
        %p349 = pneg %p96
        %p350 = pneg %p93
        %p351 = pneg %p117
        %p352 = pneg %p114
        %p353 = pneg %p145
        %p354 = pneg %p142
        %s355 = sand.u32 %s132, 1
        %s356 = scalar_lea.sflag [#allocation4], %s355
        %s357 = sand.u32 %s132, 1
        %s358 = smul.addr %s357, 192
        %s359 = scalar_lea.vmem [#allocation8], %s358
        %p360 = pneg %p173
        %p361 = pneg %p170
        %s362 = sand.u32 %s33, 1
        %s363 = scalar_lea.sflag [#allocation10], %s362
        %s364 = sand.u32 %s160, 1
        %s365 = smul.addr %s364, 48
        %s366 = scalar_lea.vmem [#allocation9], %s365
        %p367 = pneg %p201
        %p368 = pneg %p198
        %s369 = sand.u32 %s33, 1
        %s370 = scalar_lea.sflag [#allocation10], %s369
        %s371 = sand.u32 %s188, 1
        %s372 = scalar_lea.vmem [#allocation11], %s371
        %p373 = pneg %p229
        %p374 = pneg %p226
        %s375 = sand.u32 %s216, 1
        %s376 = scalar_lea.sflag [#allocation13], %s375
        %s377 = sand.u32 %s216, 1
        %s378 = scalar_lea.vmem [#allocation12], %s377
        %s379 = smul.u32 8, %s38
        %s380 = smul.u32 8, %s38
        %v381 = vld [vmem:[%s328] sm:$0xff]
        %v382 = vld [vmem:[%s328 + $0x8] sm:$0xff]
        %v383 = vld [vmem:[%s328 + $0x10] sm:$0xff]
        %v384 = vld [vmem:[%s328 + $0x18] sm:$0xff]
        %v385 = vld [vmem:[%s328 + $0x20] sm:$0x3]
        %v386 = vld [vmem:[%s328 + $0x28] sm:$0x3]
        %v387 = vld [vmem:[%s328 + $0x30] sm:$0xff]
        %v388 = vld [vmem:[%s328 + $0x38] sm:$0xff]
        %v389 = vld [vmem:[%s328 + $0x40] sm:$0xff]
        %v390 = vld [vmem:[%s328 + $0x48] sm:$0xff]
        %v391 = vld [vmem:[%s328 + $0x50] sm:$0x3]
        %v392 = vld [vmem:[%s328 + $0x58] sm:$0x3]
        %v393 = vld [vmem:[%s319] sm:$0xff]
        %v394 = vld [vmem:[%s319 + $0x8] sm:$0xff]
        %v395 = vld [vmem:[%s319 + $0x10] sm:$0xff]
        %v396 = vld [vmem:[%s319 + $0x18] sm:$0xff]
        %v397 = vld [vmem:[%s319 + $0x20] sm:$0x3]
        %v398 = vld [vmem:[%s319 + $0x28] sm:$0x3]
        %v399 = vld [vmem:[%s319 + $0x30] sm:$0xff]
        %v400 = vld [vmem:[%s319 + $0x38] sm:$0xff]
        %v401 = vld [vmem:[%s319 + $0x40] sm:$0xff]
        %v402 = vld [vmem:[%s319 + $0x48] sm:$0xff]
        %v403 = vld [vmem:[%s319 + $0x50] sm:$0x3]
        %v404 = vld [vmem:[%s319 + $0x58] sm:$0x3]
        %v405 = vld [vmem:[%s319 + $0x60] sm:$0xff]
        %v406 = vld [vmem:[%s319 + $0x68] sm:$0xff]
        %v407 = vld [vmem:[%s319 + $0x70] sm:$0xff]
        %v408 = vld [vmem:[%s319 + $0x78] sm:$0xff]
        %v409 = vld [vmem:[%s319 + $0x80] sm:$0x3]
        %v410 = vld [vmem:[%s319 + $0x88] sm:$0x3]
        %v411 = vld [vmem:[%s319 + $0x90] sm:$0xff]
        %v412 = vld [vmem:[%s319 + $0x98] sm:$0xff]
        %v413 = vld [vmem:[%s319 + $0xa0] sm:$0xff]
        %v414 = vld [vmem:[%s319 + $0xa8] sm:$0xff]
        %v415 = vld [vmem:[%s319 + $0xb0] sm:$0x3]
        %v416 = vld [vmem:[%s319 + $0xb8] sm:$0x3]
        %v417 = vld [vmem:[%s319 + $0xc0] sm:$0xff]
        %v418 = vld [vmem:[%s319 + $0xc8] sm:$0xff]
        %v419 = vld [vmem:[%s319 + $0xd0] sm:$0xff]
        %v420 = vld [vmem:[%s319 + $0xd8] sm:$0xff]
        %v421 = vld [vmem:[%s319 + $0xe0] sm:$0x3]
        %v422 = vld [vmem:[%s319 + $0xe8] sm:$0x3]
        %v423 = vld [vmem:[%s319 + $0xf0] sm:$0xff]
        %v424 = vld [vmem:[%s319 + $0xf8] sm:$0xff]
        %v425 = vld [vmem:[%s319 + $0x100] sm:$0xff]
        %v426 = vld [vmem:[%s319 + $0x108] sm:$0xff]
        %v427 = vld [vmem:[%s319 + $0x110] sm:$0x3]
        %v428 = vld [vmem:[%s319 + $0x118] sm:$0x3]
        %v429 = vld [vmem:[%s319 + $0x120] sm:$0xff]
        %v430 = vld [vmem:[%s319 + $0x128] sm:$0xff]
        %v431 = vld [vmem:[%s319 + $0x130] sm:$0xff]
        %v432 = vld [vmem:[%s319 + $0x138] sm:$0xff]
        %v433 = vld [vmem:[%s319 + $0x140] sm:$0x3]
        %v434 = vld [vmem:[%s319 + $0x148] sm:$0x3]
        %v435 = vld [vmem:[%s319 + $0x150] sm:$0xff]
        %v436 = vld [vmem:[%s319 + $0x158] sm:$0xff]
        %v437 = vld [vmem:[%s319 + $0x160] sm:$0xff]
        %v438 = vld [vmem:[%s319 + $0x168] sm:$0xff]
        %v439 = vld [vmem:[%s319 + $0x170] sm:$0x3]
        %v440 = vld [vmem:[%s319 + $0x178] sm:$0x3]
        %v441 = vld [vmem:[#allocation7] sm:$0xff]
        %v442 = vld [vmem:[#allocation7 + $0x8] sm:$0xff]
        %v443 = vld [vmem:[#allocation7 + $0x10] sm:$0xff]
        %v444 = vld [vmem:[#allocation7 + $0x18] sm:$0xff]
        %v445 = vld [vmem:[#allocation7 + $0x20] sm:$0xff]
        %v446 = vld [vmem:[#allocation7 + $0x28] sm:$0xff]
        %v447 = vld [vmem:[#allocation7 + $0x30] sm:$0xff]
        %v448 = vld [vmem:[#allocation7 + $0x38] sm:$0xff]
        %v449 = vld [vmem:[#allocation7 + $0x40] sm:$0xff]
        %v450 = vld [vmem:[#allocation7 + $0x48] sm:$0xff]
        %v451 = vld [vmem:[#allocation7 + $0x50] sm:$0xff]
        %v452 = vld [vmem:[#allocation7 + $0x58] sm:$0xff]
        %v453 = vld [vmem:[#allocation7 + $0x60] sm:$0xff]
        %v454 = vld [vmem:[#allocation7 + $0x68] sm:$0xff]
        %v455 = vld [vmem:[#allocation7 + $0x70] sm:$0xff]
        %v456 = vld [vmem:[#allocation7 + $0x78] sm:$0xff]
        %v457 = vld [vmem:[#allocation7 + $0x80] sm:$0xff]
        %vm506 = vcmask 1046528
        %v507 = vrot.slane %v381, 1
        %v508 = vrot.slane %v383, 1
        %v509 = vsel %vm506, %v507, %v508
        %v510 = vrot.slane %v382, 1
        %v511 = vrot.slane %v384, 1
        %v512 = vsel %vm506, %v510, %v511
        %v513 = vrot.slane %v385, 1
        %v514 = vsel %vm506, %v508, %v513
        %v515 = vrot.slane %v386, 1
        %v516 = vsel %vm506, %v511, %v515
        %v517 = vrot.slane %v393, 1
        %v518 = vrot.slane %v395, 1
        %v519 = vsel %vm506, %v517, %v518
        %v520 = vrot.slane %v394, 1
        %v521 = vrot.slane %v396, 1
        %v522 = vsel %vm506, %v520, %v521
        %v523 = vrot.slane %v397, 1
        %v524 = vsel %vm506, %v518, %v523
        %v525 = vrot.slane %v398, 1
        %v526 = vsel %vm506, %v521, %v525
        %v527 = vrot.slane %v399, 1
        %v528 = vrot.slane %v401, 1
        %v529 = vsel %vm506, %v527, %v528
        %v530 = vrot.slane %v400, 1
        %v531 = vrot.slane %v402, 1
        %v532 = vsel %vm506, %v530, %v531
        %v533 = vrot.slane %v403, 1
        %v534 = vsel %vm506, %v528, %v533
        %v535 = vrot.slane %v404, 1
        %v536 = vsel %vm506, %v531, %v535
        %v537 = vrot.slane %v405, 1
        %v538 = vrot.slane %v407, 1
        %v539 = vsel %vm506, %v537, %v538
        %v540 = vrot.slane %v406, 1
        %v541 = vrot.slane %v408, 1
        %v542 = vsel %vm506, %v540, %v541
        %v543 = vrot.slane %v409, 1
        %v544 = vsel %vm506, %v538, %v543
        %v545 = vrot.slane %v410, 1
        %v546 = vsel %vm506, %v541, %v545
        %v547 = vrot.slane %v411, 1
        %v548 = vrot.slane %v413, 1
        %v549 = vsel %vm506, %v547, %v548
        %v550 = vrot.slane %v412, 1
        %v551 = vrot.slane %v414, 1
        %v552 = vsel %vm506, %v550, %v551
        %v553 = vrot.slane %v415, 1
        %v554 = vsel %vm506, %v548, %v553
        %v555 = vrot.slane %v416, 1
        %v556 = vsel %vm506, %v551, %v555
        %v557 = vrot.slane %v417, 1
        %v558 = vrot.slane %v419, 1
        %v559 = vsel %vm506, %v557, %v558
        %v560 = vrot.slane %v418, 1
        %v561 = vrot.slane %v420, 1
        %v562 = vsel %vm506, %v560, %v561
        %v563 = vrot.slane %v421, 1
        %v564 = vsel %vm506, %v558, %v563
        %v565 = vrot.slane %v422, 1
        %v566 = vsel %vm506, %v561, %v565
        %v567 = vrot.slane %v423, 1
        %v568 = vrot.slane %v425, 1
        %v569 = vsel %vm506, %v567, %v568
        %v570 = vrot.slane %v424, 1
        %v571 = vrot.slane %v426, 1
        %v572 = vsel %vm506, %v570, %v571
        %v573 = vrot.slane %v427, 1
        %v574 = vsel %vm506, %v568, %v573
        %v575 = vrot.slane %v428, 1
        %v576 = vsel %vm506, %v571, %v575
        %v577 = vrot.slane %v429, 1
        %v578 = vrot.slane %v431, 1
        %v579 = vsel %vm506, %v577, %v578
        %v580 = vrot.slane %v430, 1
        %v581 = vrot.slane %v432, 1
        %v582 = vsel %vm506, %v580, %v581
        %v583 = vrot.slane %v433, 1
        %v584 = vsel %vm506, %v578, %v583
        %v585 = vrot.slane %v434, 1
        %v586 = vsel %vm506, %v581, %v585
        %s603 = scalar_lea.vmem [#allocation7], 136
        %v604 = vld [vmem:[%s603] sm:$0xff]
        %v605 = vld [vmem:[%s603 + $0x8] sm:$0xff]
        %v606 = vld [vmem:[%s603 + $0x10] sm:$0xff]
        %v607 = vld [vmem:[%s603 + $0x18] sm:$0xff]
        %v608 = vld [vmem:[%s603 + $0x20] sm:$0xff]
        %v609 = vld [vmem:[%s603 + $0x28] sm:$0xff]
        %v610 = vld [vmem:[%s603 + $0x30] sm:$0xff]
        %v611 = vld [vmem:[%s603 + $0x38] sm:$0xff]
        %v612 = vld [vmem:[%s603 + $0x40] sm:$0xff]
        %v613 = vld [vmem:[%s603 + $0x48] sm:$0xff]
        %v614 = vld [vmem:[%s603 + $0x50] sm:$0xff]
        %v615 = vld [vmem:[%s603 + $0x58] sm:$0xff]
        %v616 = vld [vmem:[%s603 + $0x60] sm:$0xff]
        %v617 = vld [vmem:[%s603 + $0x68] sm:$0xff]
        %v618 = vld [vmem:[%s603 + $0x70] sm:$0xff]
        %v619 = vld [vmem:[%s603 + $0x78] sm:$0xff]
        %v620 = vld [vmem:[%s603 + $0x80] sm:$0xff]
        %vm621 = vcmask 64512
        %v622 = vsel %vm621, %v512, 0
        %v624 = vsel %vm621, %v516, 0
        %v626 = vsel %vm621, %v522, 0
        %v628 = vsel %vm621, %v526, 0
        %v630 = vsel %vm621, %v532, 0
        %v632 = vsel %vm621, %v536, 0
        %v634 = vsel %vm621, %v542, 0
        %v636 = vsel %vm621, %v546, 0
        %v638 = vsel %vm621, %v552, 0
        %v640 = vsel %vm621, %v556, 0
        %v642 = vsel %vm621, %v562, 0
        %v644 = vsel %vm621, %v566, 0
        %v646 = vsel %vm621, %v572, 0
        %v648 = vsel %vm621, %v576, 0
        %v650 = vsel %vm621, %v582, 0
        %v652 = vsel %vm621, %v586, 0
        %654 = vmatprep.subr.mxu0 0.0
        %655 = vmatpush1.msra.mxu0 %v604
        %656 = vmatprep.subr.mxu0 0.0
        %657 = vmatpush1.msra.mxu0 %v605
        %658 = vmatprep.subr.mxu0 0.0
        %659 = vmatpush1.msra.mxu0 %v606
        %660 = vmatprep.subr.mxu0 0.0
        %661 = vmatpush1.msra.mxu0 %v607
        %662 = vmatprep.subr.mxu0 0.0
        %663 = vmatpush1.msra.mxu0 %v608
        %664 = vmatprep.subr.mxu0 0.0
        %665 = vmatpush1.msra.mxu0 %v609
        %666 = vmatprep.subr.mxu0 0.0
        %667 = vmatpush1.msra.mxu0 %v610
        %668 = vmatprep.subr.mxu0 0.0
        %669 = vmatpush1.msra.mxu0 %v611
        %670 = vmatprep.subr.mxu0 0.0
        %671 = vmatpush1.msra.mxu0 %v612
        %672 = vmatprep.subr.mxu0 0.0
        %673 = vmatpush1.msra.mxu0 %v613
        %674 = vmatprep.subr.mxu0 0.0
        %675 = vmatpush1.msra.mxu0 %v614
        %676 = vmatprep.subr.mxu0 0.0
        %677 = vmatpush1.msra.mxu0 %v615
        %678 = vmatprep.subr.mxu0 0.0
        %679 = vmatpush1.msra.mxu0 %v616
        %680 = vmatprep.subr.mxu0 0.0
        %681 = vmatpush1.msra.mxu0 %v617
        %682 = vmatprep.subr.mxu0 0.0
        %683 = vmatpush1.msra.mxu0 %v618
        %684 = vmatprep.subr.mxu0 0.0
        %685 = vmatpush1.msra.mxu0 %v619
        %686 = vmatprep.subr.mxu0 0.0
        %687 = vmatpush1.msra.mxu0 %v620
        %688 = vmatprep.subr.mxu0 0.0
        %689 = vmatpush1.msra.mxu0 0.0
        %690 = vmatprep.subr.mxu0 0.0
        %691 = vmatpush1.msra.mxu0 0.0
        %692 = vmatprep.subr.mxu0 0.0
        %693 = vmatpush1.msra.mxu0 0.0
        %694 = vmatprep.subr.mxu0 0.0
        %695 = vmatpush1.msra.mxu0 0.0
        %696 = vmatprep.subr.mxu0 0.0
        %697 = vmatpush1.msra.mxu0 0.0
        %698 = vmatprep.subr.mxu0 0.0
        %699 = vmatpush1.msra.mxu0 0.0
        %700 = vmatprep.subr.mxu0 0.0
        %701 = vmatpush1.msra.mxu0 0.0
        %702 = vmatprep.subr.mxu0 0.0
        %703 = vmatpush1.msra.mxu0 0.0
        %704 = vmatprep.subr.mxu0 0.0
        %705 = vmatpush1.msra.mxu0 0.0
        %706 = vmatprep.subr.mxu0 0.0
        %707 = vmatpush1.msra.mxu0 0.0
        %708 = vmatprep.subr.mxu0 0.0
        %709 = vmatpush1.msra.mxu0 0.0
        %710 = vmatprep.subr.mxu0 0.0
        %711 = vmatpush1.msra.mxu0 0.0
        %712 = vmatprep.subr.mxu0 0.0
        %713 = vmatpush1.msra.mxu0 0.0
        %714 = vmatprep.subr.mxu0 0.0
        %715 = vmatpush1.msra.mxu0 0.0
        %716 = vmatprep.subr.mxu0 0.0
        %717 = vmatpush1.msra.mxu0 0.0
        %718 = vmatprep.mubr.f32.mxu0 %v622
        %719 = vmatmul.mubr.f32.gmra.mrb[0].mxu0 %v509
        %v720 = vpop.f32.mrb[0].mxu0
        %v721 = vadd.f32 0.0, %v720
        %v722 = vpop.f32.mrb[0].mxu0
        %723 = vmatprep.mubr.f32.mxu0 %v624
        %724 = vmatmul.mubr.f32.gmra.mrb[0].mxu0 %v514
        %v725 = vpop.f32.mrb[0].mxu0
        %v726 = vadd.f32 0.0, %v725
        %v727 = vpop.f32.mrb[0].mxu0
        %728 = vmatprep.mubr.f32.mxu0 %v626
        %729 = vmatmul.mubr.f32.gmra.mrb[0].mxu0 %v519
        %v730 = vpop.f32.mrb[0].mxu0
        %v731 = vadd.f32 0.0, %v730
        %v732 = vpop.f32.mrb[0].mxu0
        %733 = vmatprep.mubr.f32.mxu0 %v628
        %734 = vmatmul.mubr.f32.gmra.mrb[0].mxu0 %v524
        %v735 = vpop.f32.mrb[0].mxu0
        %v736 = vadd.f32 0.0, %v735
        %v737 = vpop.f32.mrb[0].mxu0
        %738 = vmatprep.mubr.f32.mxu0 %v630
        %739 = vmatmul.mubr.f32.gmra.mrb[0].mxu0 %v529
        %v740 = vpop.f32.mrb[0].mxu0
        %v741 = vadd.f32 0.0, %v740
        %v742 = vpop.f32.mrb[0].mxu0
        %743 = vmatprep.mubr.f32.mxu0 %v632
        %744 = vmatmul.mubr.f32.gmra.mrb[0].mxu0 %v534
        %v745 = vpop.f32.mrb[0].mxu0
        %v746 = vadd.f32 0.0, %v745
        %v747 = vpop.f32.mrb[0].mxu0
        %748 = vmatprep.mubr.f32.mxu0 %v634
        %749 = vmatmul.mubr.f32.gmra.mrb[0].mxu0 %v539
        %v750 = vpop.f32.mrb[0].mxu0
        %v751 = vadd.f32 0.0, %v750
        %v752 = vpop.f32.mrb[0].mxu0
        %753 = vmatprep.mubr.f32.mxu0 %v636
        %754 = vmatmul.mubr.f32.gmra.mrb[0].mxu0 %v544
        %v755 = vpop.f32.mrb[0].mxu0
        %v756 = vadd.f32 0.0, %v755
        %v757 = vpop.f32.mrb[0].mxu0
        %758 = vmatprep.mubr.f32.mxu0 %v638
        %759 = vmatmul.mubr.f32.gmra.mrb[0].mxu0 %v549
        %v760 = vpop.f32.mrb[0].mxu0
        %v761 = vadd.f32 0.0, %v760
        %v762 = vpop.f32.mrb[0].mxu0
        %763 = vmatprep.mubr.f32.mxu0 %v640
        %764 = vmatmul.mubr.f32.gmra.mrb[0].mxu0 %v554
        %v765 = vpop.f32.mrb[0].mxu0
        %v766 = vadd.f32 0.0, %v765
        %v767 = vpop.f32.mrb[0].mxu0
        %768 = vmatprep.mubr.f32.mxu0 %v642
        %769 = vmatmul.mubr.f32.gmra.mrb[0].mxu0 %v559
        %v770 = vpop.f32.mrb[0].mxu0
        %v771 = vadd.f32 0.0, %v770
        %v772 = vpop.f32.mrb[0].mxu0
        %773 = vmatprep.mubr.f32.mxu0 %v644
        %774 = vmatmul.mubr.f32.gmra.mrb[0].mxu0 %v564
        %v775 = vpop.f32.mrb[0].mxu0
        %v776 = vadd.f32 0.0, %v775
        %v777 = vpop.f32.mrb[0].mxu0
        %778 = vmatprep.mubr.f32.mxu0 %v646
        %779 = vmatmul.mubr.f32.gmra.mrb[0].mxu0 %v569
        %v780 = vpop.f32.mrb[0].mxu0
        %v781 = vadd.f32 0.0, %v780
        %v782 = vpop.f32.mrb[0].mxu0
        %783 = vmatprep.mubr.f32.mxu0 %v648
        %784 = vmatmul.mubr.f32.gmra.mrb[0].mxu0 %v574
        %v785 = vpop.f32.mrb[0].mxu0
        %v786 = vadd.f32 0.0, %v785
        %v787 = vpop.f32.mrb[0].mxu0
        %788 = vmatprep.mubr.f32.mxu0 %v650
        %789 = vmatmul.mubr.f32.gmra.mrb[0].mxu0 %v579
        %v790 = vpop.f32.mrb[0].mxu0
        %v791 = vadd.f32 0.0, %v790
        %v792 = vpop.f32.mrb[0].mxu0
        %793 = vmatprep.mubr.f32.mxu0 %v652
        %794 = vmatmul.mubr.f32.gmra.mrb[0].mxu0 %v584
        %v795 = vpop.f32.mrb[0].mxu0
        %v796 = vadd.f32 0.0, %v795
        %v797 = vpop.f32.mrb[0].mxu0
        %798 = vdwg.mxu0
        %v799 = vsel %vm621, %v382, 0
        %v801 = vsel %vm621, %v384, 0
        %v803 = vsel %vm621, %v394, 0
        %v805 = vsel %vm621, %v396, 0
        %v807 = vsel %vm621, %v400, 0
        %v809 = vsel %vm621, %v402, 0
        %v811 = vsel %vm621, %v406, 0
        %v813 = vsel %vm621, %v408, 0
        %v815 = vsel %vm621, %v412, 0
        %v817 = vsel %vm621, %v414, 0
        %v819 = vsel %vm621, %v418, 0
        %v821 = vsel %vm621, %v420, 0
        %v823 = vsel %vm621, %v424, 0
        %v825 = vsel %vm621, %v426, 0
        %v827 = vsel %vm621, %v430, 0
        %v829 = vsel %vm621, %v432, 0
        %831 = vmatprep.subr.mxu0 0.0
        %832 = vmatpush1.msra.mxu0 %v441
        %833 = vmatprep.subr.mxu0 0.0
        %834 = vmatpush1.msra.mxu0 %v442
        %835 = vmatprep.subr.mxu0 0.0
        %836 = vmatpush1.msra.mxu0 %v443
        %837 = vmatprep.subr.mxu0 0.0
        %838 = vmatpush1.msra.mxu0 %v444
        %839 = vmatprep.subr.mxu0 0.0
        %840 = vmatpush1.msra.mxu0 %v445
        %841 = vmatprep.subr.mxu0 0.0
        %842 = vmatpush1.msra.mxu0 %v446
        %843 = vmatprep.subr.mxu0 0.0
        %844 = vmatpush1.msra.mxu0 %v447
        %845 = vmatprep.subr.mxu0 0.0
        %846 = vmatpush1.msra.mxu0 %v448
        %847 = vmatprep.subr.mxu0 0.0
        %848 = vmatpush1.msra.mxu0 %v449
        %849 = vmatprep.subr.mxu0 0.0
        %850 = vmatpush1.msra.mxu0 %v450
        %851 = vmatprep.subr.mxu0 0.0
        %852 = vmatpush1.msra.mxu0 %v451
        %853 = vmatprep.subr.mxu0 0.0
        %854 = vmatpush1.msra.mxu0 %v452
        %855 = vmatprep.subr.mxu0 0.0
        %856 = vmatpush1.msra.mxu0 %v453
        %857 = vmatprep.subr.mxu0 0.0
        %858 = vmatpush1.msra.mxu0 %v454
        %859 = vmatprep.subr.mxu0 0.0
        %860 = vmatpush1.msra.mxu0 %v455
        %861 = vmatprep.subr.mxu0 0.0
        %862 = vmatpush1.msra.mxu0 %v456
        %863 = vmatprep.subr.mxu0 0.0
        %864 = vmatpush1.msra.mxu0 %v457
        %865 = vmatprep.subr.mxu0 0.0
        %866 = vmatpush1.msra.mxu0 0.0
        %867 = vmatprep.subr.mxu0 0.0
        %868 = vmatpush1.msra.mxu0 0.0
        %869 = vmatprep.subr.mxu0 0.0
        %870 = vmatpush1.msra.mxu0 0.0
        %871 = vmatprep.subr.mxu0 0.0
        %872 = vmatpush1.msra.mxu0 0.0
        %873 = vmatprep.subr.mxu0 0.0
        %874 = vmatpush1.msra.mxu0 0.0
        %875 = vmatprep.subr.mxu0 0.0
        %876 = vmatpush1.msra.mxu0 0.0
        %877 = vmatprep.subr.mxu0 0.0
        %878 = vmatpush1.msra.mxu0 0.0
        %879 = vmatprep.subr.mxu0 0.0
        %880 = vmatpush1.msra.mxu0 0.0
        %881 = vmatprep.subr.mxu0 0.0
        %882 = vmatpush1.msra.mxu0 0.0
        %883 = vmatprep.subr.mxu0 0.0
        %884 = vmatpush1.msra.mxu0 0.0
        %885 = vmatprep.subr.mxu0 0.0
        %886 = vmatpush1.msra.mxu0 0.0
        %887 = vmatprep.subr.mxu0 0.0
        %888 = vmatpush1.msra.mxu0 0.0
        %889 = vmatprep.subr.mxu0 0.0
        %890 = vmatpush1.msra.mxu0 0.0
        %891 = vmatprep.subr.mxu0 0.0
        %892 = vmatpush1.msra.mxu0 0.0
        %893 = vmatprep.subr.mxu0 0.0
        %894 = vmatpush1.msra.mxu0 0.0
        %895 = vmatprep.mubr.f32.mxu0 %v799
        %896 = vmatmul.mubr.f32.gmra.mrb[0].mxu0 %v381
        %v897 = vpop.f32.mrb[0].mxu0
        %v898 = vadd.f32 %v721, %v897
        %v899 = vpop.f32.mrb[0].mxu0
        %900 = vmatprep.mubr.f32.mxu0 %v801
        %901 = vmatmul.mubr.f32.gmra.mrb[0].mxu0 %v383
        %v902 = vpop.f32.mrb[0].mxu0
        %v903 = vadd.f32 %v726, %v902
        %v904 = vpop.f32.mrb[0].mxu0
        %905 = vmatprep.mubr.f32.mxu0 %v803
        %906 = vmatmul.mubr.f32.gmra.mrb[0].mxu0 %v393
        %v907 = vpop.f32.mrb[0].mxu0
        %v908 = vadd.f32 %v731, %v907
        %v909 = vpop.f32.mrb[0].mxu0
        %910 = vmatprep.mubr.f32.mxu0 %v805
        %911 = vmatmul.mubr.f32.gmra.mrb[0].mxu0 %v395
        %v912 = vpop.f32.mrb[0].mxu0
        %v913 = vadd.f32 %v736, %v912
        %v914 = vpop.f32.mrb[0].mxu0
        %915 = vmatprep.mubr.f32.mxu0 %v807
        %916 = vmatmul.mubr.f32.gmra.mrb[0].mxu0 %v399
        %v917 = vpop.f32.mrb[0].mxu0
        %v918 = vadd.f32 %v741, %v917
        %v919 = vpop.f32.mrb[0].mxu0
        %920 = vmatprep.mubr.f32.mxu0 %v809
        %921 = vmatmul.mubr.f32.gmra.mrb[0].mxu0 %v401
        %v922 = vpop.f32.mrb[0].mxu0
        %v923 = vadd.f32 %v746, %v922
        %v924 = vpop.f32.mrb[0].mxu0
        %925 = vmatprep.mubr.f32.mxu0 %v811
        %926 = vmatmul.mubr.f32.gmra.mrb[0].mxu0 %v405
        %v927 = vpop.f32.mrb[0].mxu0
        %v928 = vadd.f32 %v751, %v927
        %v929 = vpop.f32.mrb[0].mxu0
        %930 = vmatprep.mubr.f32.mxu0 %v813
        %931 = vmatmul.mubr.f32.gmra.mrb[0].mxu0 %v407
        %v932 = vpop.f32.mrb[0].mxu0
        %v933 = vadd.f32 %v756, %v932
        %v934 = vpop.f32.mrb[0].mxu0
        %935 = vmatprep.mubr.f32.mxu0 %v815
        %936 = vmatmul.mubr.f32.gmra.mrb[0].mxu0 %v411
        %v937 = vpop.f32.mrb[0].mxu0
        %v938 = vadd.f32 %v761, %v937
        %v939 = vpop.f32.mrb[0].mxu0
        %940 = vmatprep.mubr.f32.mxu0 %v817
        %941 = vmatmul.mubr.f32.gmra.mrb[0].mxu0 %v413
        %v942 = vpop.f32.mrb[0].mxu0
        %v943 = vadd.f32 %v766, %v942
        %v944 = vpop.f32.mrb[0].mxu0
        %945 = vmatprep.mubr.f32.mxu0 %v819
        %946 = vmatmul.mubr.f32.gmra.mrb[0].mxu0 %v417
        %v947 = vpop.f32.mrb[0].mxu0
        %v948 = vadd.f32 %v771, %v947
        %v949 = vpop.f32.mrb[0].mxu0
        %950 = vmatprep.mubr.f32.mxu0 %v821
        %951 = vmatmul.mubr.f32.gmra.mrb[0].mxu0 %v419
        %v952 = vpop.f32.mrb[0].mxu0
        %v953 = vadd.f32 %v776, %v952
        %v954 = vpop.f32.mrb[0].mxu0
        %955 = vmatprep.mubr.f32.mxu0 %v823
        %956 = vmatmul.mubr.f32.gmra.mrb[0].mxu0 %v423
        %v957 = vpop.f32.mrb[0].mxu0
        %v958 = vadd.f32 %v781, %v957
        %v959 = vpop.f32.mrb[0].mxu0
        %960 = vmatprep.mubr.f32.mxu0 %v825
        %961 = vmatmul.mubr.f32.gmra.mrb[0].mxu0 %v425
        %v962 = vpop.f32.mrb[0].mxu0
        %v963 = vadd.f32 %v786, %v962
        %v964 = vpop.f32.mrb[0].mxu0
        %965 = vmatprep.mubr.f32.mxu0 %v827
        %966 = vmatmul.mubr.f32.gmra.mrb[0].mxu0 %v429
        %v967 = vpop.f32.mrb[0].mxu0
        %v968 = vadd.f32 %v791, %v967
        %v969 = vpop.f32.mrb[0].mxu0
        %970 = vmatprep.mubr.f32.mxu0 %v829
        %971 = vmatmul.mubr.f32.gmra.mrb[0].mxu0 %v431
        %v972 = vpop.f32.mrb[0].mxu0
        %v973 = vadd.f32 %v796, %v972
        %v974 = vpop.f32.mrb[0].mxu0
        %975 = vdwg.mxu0
        %vm976 = vcmask 1045504
        %v977 = vrot.slane %v381, 2
        %v978 = vrot.slane %v383, 2
        %v979 = vsel %vm976, %v977, %v978
        %v980 = vrot.slane %v382, 2
        %v981 = vrot.slane %v384, 2
        %v982 = vsel %vm976, %v980, %v981
        %v983 = vrot.slane %v385, 2
        %v984 = vsel %vm976, %v978, %v983
        %v985 = vrot.slane %v386, 2
        %v986 = vsel %vm976, %v981, %v985
        %v987 = vrot.slane %v393, 2
        %v988 = vrot.slane %v395, 2
        %v989 = vsel %vm976, %v987, %v988
        %v990 = vrot.slane %v394, 2
        %v991 = vrot.slane %v396, 2
        %v992 = vsel %vm976, %v990, %v991
        %v993 = vrot.slane %v397, 2
        %v994 = vsel %vm976, %v988, %v993
        %v995 = vrot.slane %v398, 2
        %v996 = vsel %vm976, %v991, %v995
        %v997 = vrot.slane %v399, 2
        %v998 = vrot.slane %v401, 2
        %v999 = vsel %vm976, %v997, %v998
        %v1000 = vrot.slane %v400, 2
        %v1001 = vrot.slane %v402, 2
        %v1002 = vsel %vm976, %v1000, %v1001
        %v1003 = vrot.slane %v403, 2
        %v1004 = vsel %vm976, %v998, %v1003
        %v1005 = vrot.slane %v404, 2
        %v1006 = vsel %vm976, %v1001, %v1005
        %v1007 = vrot.slane %v405, 2
        %v1008 = vrot.slane %v407, 2
        %v1009 = vsel %vm976, %v1007, %v1008
        %v1010 = vrot.slane %v406, 2
        %v1011 = vrot.slane %v408, 2
        %v1012 = vsel %vm976, %v1010, %v1011
        %v1013 = vrot.slane %v409, 2
        %v1014 = vsel %vm976, %v1008, %v1013
        %v1015 = vrot.slane %v410, 2
        %v1016 = vsel %vm976, %v1011, %v1015
        %v1017 = vrot.slane %v411, 2
        %v1018 = vrot.slane %v413, 2
        %v1019 = vsel %vm976, %v1017, %v1018
        %v1020 = vrot.slane %v412, 2
        %v1021 = vrot.slane %v414, 2
        %v1022 = vsel %vm976, %v1020, %v1021
        %v1023 = vrot.slane %v415, 2
        %v1024 = vsel %vm976, %v1018, %v1023
        %v1025 = vrot.slane %v416, 2
        %v1026 = vsel %vm976, %v1021, %v1025
        %v1027 = vrot.slane %v417, 2
        %v1028 = vrot.slane %v419, 2
        %v1029 = vsel %vm976, %v1027, %v1028
        %v1030 = vrot.slane %v418, 2
        %v1031 = vrot.slane %v420, 2
        %v1032 = vsel %vm976, %v1030, %v1031
        %v1033 = vrot.slane %v421, 2
        %v1034 = vsel %vm976, %v1028, %v1033
        %v1035 = vrot.slane %v422, 2
        %v1036 = vsel %vm976, %v1031, %v1035
        %v1037 = vrot.slane %v423, 2
        %v1038 = vrot.slane %v425, 2
        %v1039 = vsel %vm976, %v1037, %v1038
        %v1040 = vrot.slane %v424, 2
        %v1041 = vrot.slane %v426, 2
        %v1042 = vsel %vm976, %v1040, %v1041
        %v1043 = vrot.slane %v427, 2
        %v1044 = vsel %vm976, %v1038, %v1043
        %v1045 = vrot.slane %v428, 2
        %v1046 = vsel %vm976, %v1041, %v1045
        %v1047 = vrot.slane %v429, 2
        %v1048 = vrot.slane %v431, 2
        %v1049 = vsel %vm976, %v1047, %v1048
        %v1050 = vrot.slane %v430, 2
        %v1051 = vrot.slane %v432, 2
        %v1052 = vsel %vm976, %v1050, %v1051
        %v1053 = vrot.slane %v433, 2
        %v1054 = vsel %vm976, %v1048, %v1053
        %v1055 = vrot.slane %v434, 2
        %v1056 = vsel %vm976, %v1051, %v1055
        %s1073 = scalar_lea.vmem [#allocation7], 272
        %v1074 = vld [vmem:[%s1073] sm:$0xff]
        %v1075 = vld [vmem:[%s1073 + $0x8] sm:$0xff]
        %v1076 = vld [vmem:[%s1073 + $0x10] sm:$0xff]
        %v1077 = vld [vmem:[%s1073 + $0x18] sm:$0xff]
        %v1078 = vld [vmem:[%s1073 + $0x20] sm:$0xff]
        %v1079 = vld [vmem:[%s1073 + $0x28] sm:$0xff]
        %v1080 = vld [vmem:[%s1073 + $0x30] sm:$0xff]
        %v1081 = vld [vmem:[%s1073 + $0x38] sm:$0xff]
        %v1082 = vld [vmem:[%s1073 + $0x40] sm:$0xff]
        %v1083 = vld [vmem:[%s1073 + $0x48] sm:$0xff]
        %v1084 = vld [vmem:[%s1073 + $0x50] sm:$0xff]
        %v1085 = vld [vmem:[%s1073 + $0x58] sm:$0xff]
        %v1086 = vld [vmem:[%s1073 + $0x60] sm:$0xff]
        %v1087 = vld [vmem:[%s1073 + $0x68] sm:$0xff]
        %v1088 = vld [vmem:[%s1073 + $0x70] sm:$0xff]
        %v1089 = vld [vmem:[%s1073 + $0x78] sm:$0xff]
        %v1090 = vld [vmem:[%s1073 + $0x80] sm:$0xff]
        %v1091 = vsel %vm621, %v982, 0
        %v1093 = vsel %vm621, %v986, 0
        %v1095 = vsel %vm621, %v992, 0
        %v1097 = vsel %vm621, %v996, 0
        %v1099 = vsel %vm621, %v1002, 0
        %v1101 = vsel %vm621, %v1006, 0
        %v1103 = vsel %vm621, %v1012, 0
        %v1105 = vsel %vm621, %v1016, 0
        %v1107 = vsel %vm621, %v1022, 0
        %v1109 = vsel %vm621, %v1026, 0
        %v1111 = vsel %vm621, %v1032, 0
        %v1113 = vsel %vm621, %v1036, 0
        %v1115 = vsel %vm621, %v1042, 0
        %v1117 = vsel %vm621, %v1046, 0
        %v1119 = vsel %vm621, %v1052, 0
        %v1121 = vsel %vm621, %v1056, 0
        %1123 = vmatprep.subr.mxu0 0.0
        %1124 = vmatpush1.msra.mxu0 %v1074
        %1125 = vmatprep.subr.mxu0 0.0
        %1126 = vmatpush1.msra.mxu0 %v1075
        %1127 = vmatprep.subr.mxu0 0.0
        %1128 = vmatpush1.msra.mxu0 %v1076
        %1129 = vmatprep.subr.mxu0 0.0
        %1130 = vmatpush1.msra.mxu0 %v1077
        %1131 = vmatprep.subr.mxu0 0.0
        %1132 = vmatpush1.msra.mxu0 %v1078
        %1133 = vmatprep.subr.mxu0 0.0
        %1134 = vmatpush1.msra.mxu0 %v1079
        %1135 = vmatprep.subr.mxu0 0.0
        %1136 = vmatpush1.msra.mxu0 %v1080
        %1137 = vmatprep.subr.mxu0 0.0
        %1138 = vmatpush1.msra.mxu0 %v1081
        %1139 = vmatprep.subr.mxu0 0.0
        %1140 = vmatpush1.msra.mxu0 %v1082
        %1141 = vmatprep.subr.mxu0 0.0
        %1142 = vmatpush1.msra.mxu0 %v1083
        %1143 = vmatprep.subr.mxu0 0.0
        %1144 = vmatpush1.msra.mxu0 %v1084
        %1145 = vmatprep.subr.mxu0 0.0
        %1146 = vmatpush1.msra.mxu0 %v1085
        %1147 = vmatprep.subr.mxu0 0.0
        %1148 = vmatpush1.msra.mxu0 %v1086
        %1149 = vmatprep.subr.mxu0 0.0
        %1150 = vmatpush1.msra.mxu0 %v1087
        %1151 = vmatprep.subr.mxu0 0.0
        %1152 = vmatpush1.msra.mxu0 %v1088
        %1153 = vmatprep.subr.mxu0 0.0
        %1154 = vmatpush1.msra.mxu0 %v1089
        %1155 = vmatprep.subr.mxu0 0.0
        %1156 = vmatpush1.msra.mxu0 %v1090
        %1157 = vmatprep.subr.mxu0 0.0
        %1158 = vmatpush1.msra.mxu0 0.0
        %1159 = vmatprep.subr.mxu0 0.0
        %1160 = vmatpush1.msra.mxu0 0.0
        %1161 = vmatprep.subr.mxu0 0.0
        %1162 = vmatpush1.msra.mxu0 0.0
        %1163 = vmatprep.subr.mxu0 0.0
        %1164 = vmatpush1.msra.mxu0 0.0
        %1165 = vmatprep.subr.mxu0 0.0
        %1166 = vmatpush1.msra.mxu0 0.0
        %1167 = vmatprep.subr.mxu0 0.0
        %1168 = vmatpush1.msra.mxu0 0.0
        %1169 = vmatprep.subr.mxu0 0.0
        %1170 = vmatpush1.msra.mxu0 0.0
        %1171 = vmatprep.subr.mxu0 0.0
        %1172 = vmatpush1.msra.mxu0 0.0
        %1173 = vmatprep.subr.mxu0 0.0
        %1174 = vmatpush1.msra.mxu0 0.0
        %1175 = vmatprep.subr.mxu0 0.0
        %1176 = vmatpush1.msra.mxu0 0.0
        %1177 = vmatprep.subr.mxu0 0.0
        %1178 = vmatpush1.msra.mxu0 0.0
        %1179 = vmatprep.subr.mxu0 0.0
        %1180 = vmatpush1.msra.mxu0 0.0
        %1181 = vmatprep.subr.mxu0 0.0
        %1182 = vmatpush1.msra.mxu0 0.0
        %1183 = vmatprep.subr.mxu0 0.0
        %1184 = vmatpush1.msra.mxu0 0.0
        %1185 = vmatprep.subr.mxu0 0.0
        %1186 = vmatpush1.msra.mxu0 0.0
        %1187 = vmatprep.mubr.f32.mxu0 %v1091
        %1188 = vmatmul.mubr.f32.gmra.mrb[0].mxu0 %v979
        %v1189 = vpop.f32.mrb[0].mxu0
        %v1190 = vadd.f32 0.0, %v1189
        %v1191 = vpop.f32.mrb[0].mxu0
        %1192 = vmatprep.mubr.f32.mxu0 %v1093
        %1193 = vmatmul.mubr.f32.gmra.mrb[0].mxu0 %v984
        %v1194 = vpop.f32.mrb[0].mxu0
        %v1195 = vadd.f32 0.0, %v1194
        %v1196 = vpop.f32.mrb[0].mxu0
        %1197 = vmatprep.mubr.f32.mxu0 %v1095
        %1198 = vmatmul.mubr.f32.gmra.mrb[0].mxu0 %v989
        %v1199 = vpop.f32.mrb[0].mxu0
        %v1200 = vadd.f32 0.0, %v1199
        %v1201 = vpop.f32.mrb[0].mxu0
        %1202 = vmatprep.mubr.f32.mxu0 %v1097
        %1203 = vmatmul.mubr.f32.gmra.mrb[0].mxu0 %v994
        %v1204 = vpop.f32.mrb[0].mxu0
        %v1205 = vadd.f32 0.0, %v1204
        %v1206 = vpop.f32.mrb[0].mxu0
        %1207 = vmatprep.mubr.f32.mxu0 %v1099
        %1208 = vmatmul.mubr.f32.gmra.mrb[0].mxu0 %v999
        %v1209 = vpop.f32.mrb[0].mxu0
        %v1210 = vadd.f32 0.0, %v1209
        %v1211 = vpop.f32.mrb[0].mxu0
        %1212 = vmatprep.mubr.f32.mxu0 %v1101
        %1213 = vmatmul.mubr.f32.gmra.mrb[0].mxu0 %v1004
        %v1214 = vpop.f32.mrb[0].mxu0
        %v1215 = vadd.f32 0.0, %v1214
        %v1216 = vpop.f32.mrb[0].mxu0
        %1217 = vmatprep.mubr.f32.mxu0 %v1103
        %1218 = vmatmul.mubr.f32.gmra.mrb[0].mxu0 %v1009
        %v1219 = vpop.f32.mrb[0].mxu0
        %v1220 = vadd.f32 0.0, %v1219
        %v1221 = vpop.f32.mrb[0].mxu0
        %1222 = vmatprep.mubr.f32.mxu0 %v1105
        %1223 = vmatmul.mubr.f32.gmra.mrb[0].mxu0 %v1014
        %v1224 = vpop.f32.mrb[0].mxu0
        %v1225 = vadd.f32 0.0, %v1224
        %v1226 = vpop.f32.mrb[0].mxu0
        %1227 = vmatprep.mubr.f32.mxu0 %v1107
        %1228 = vmatmul.mubr.f32.gmra.mrb[0].mxu0 %v1019
        %v1229 = vpop.f32.mrb[0].mxu0
        %v1230 = vadd.f32 0.0, %v1229
        %v1231 = vpop.f32.mrb[0].mxu0
        %1232 = vmatprep.mubr.f32.mxu0 %v1109
        %1233 = vmatmul.mubr.f32.gmra.mrb[0].mxu0 %v1024
        %v1234 = vpop.f32.mrb[0].mxu0
        %v1235 = vadd.f32 0.0, %v1234
        %v1236 = vpop.f32.mrb[0].mxu0
        %1237 = vmatprep.mubr.f32.mxu0 %v1111
        %1238 = vmatmul.mubr.f32.gmra.mrb[0].mxu0 %v1029
        %v1239 = vpop.f32.mrb[0].mxu0
        %v1240 = vadd.f32 0.0, %v1239
        %v1241 = vpop.f32.mrb[0].mxu0
        %1242 = vmatprep.mubr.f32.mxu0 %v1113
        %1243 = vmatmul.mubr.f32.gmra.mrb[0].mxu0 %v1034
        %v1244 = vpop.f32.mrb[0].mxu0
        %v1245 = vadd.f32 0.0, %v1244
        %v1246 = vpop.f32.mrb[0].mxu0
        %1247 = vmatprep.mubr.f32.mxu0 %v1115
        %1248 = vmatmul.mubr.f32.gmra.mrb[0].mxu0 %v1039
        %v1249 = vpop.f32.mrb[0].mxu0
        %v1250 = vadd.f32 0.0, %v1249
        %v1251 = vpop.f32.mrb[0].mxu0
        %1252 = vmatprep.mubr.f32.mxu0 %v1117
        %1253 = vmatmul.mubr.f32.gmra.mrb[0].mxu0 %v1044
        %v1254 = vpop.f32.mrb[0].mxu0
        %v1255 = vadd.f32 0.0, %v1254
        %v1256 = vpop.f32.mrb[0].mxu0
        %1257 = vmatprep.mubr.f32.mxu0 %v1119
        %1258 = vmatmul.mubr.f32.gmra.mrb[0].mxu0 %v1049
        %v1259 = vpop.f32.mrb[0].mxu0
        %v1260 = vadd.f32 0.0, %v1259
        %v1261 = vpop.f32.mrb[0].mxu0
        %1262 = vmatprep.mubr.f32.mxu0 %v1121
        %1263 = vmatmul.mubr.f32.gmra.mrb[0].mxu0 %v1054
        %v1264 = vpop.f32.mrb[0].mxu0
        %v1265 = vadd.f32 0.0, %v1264
        %v1266 = vpop.f32.mrb[0].mxu0
        %1267 = vdwg.mxu0
        %v1268 = vadd.f32 %v898, %v1190
        %v1269 = vadd.f32 %v903, %v1195
        %v1270 = vadd.f32 %v908, %v1200
        %v1271 = vadd.f32 %v913, %v1205
        %v1272 = vadd.f32 %v918, %v1210
        %v1273 = vadd.f32 %v923, %v1215
        %v1274 = vadd.f32 %v928, %v1220
        %v1275 = vadd.f32 %v933, %v1225
        %v1276 = vadd.f32 %v938, %v1230
        %v1277 = vadd.f32 %v943, %v1235
        %v1278 = vadd.f32 %v948, %v1240
        %v1279 = vadd.f32 %v953, %v1245
        %v1280 = vadd.f32 %v958, %v1250
        %v1281 = vadd.f32 %v963, %v1255
        %v1282 = vadd.f32 %v968, %v1260
        %v1283 = vadd.f32 %v973, %v1265
        %s1284 = scalar_lea.vmem [#allocation7], 408
        %v1285 = vld [vmem:[%s1284] sm:$0xff]
        %v1286 = vld [vmem:[%s1284 + $0x8] sm:$0xff]
        %v1287 = vld [vmem:[%s1284 + $0x10] sm:$0xff]
        %v1288 = vld [vmem:[%s1284 + $0x18] sm:$0xff]
        %v1289 = vld [vmem:[%s1284 + $0x20] sm:$0xff]
        %v1290 = vld [vmem:[%s1284 + $0x28] sm:$0xff]
        %v1291 = vld [vmem:[%s1284 + $0x30] sm:$0xff]
        %v1292 = vld [vmem:[%s1284 + $0x38] sm:$0xff]
        %v1293 = vld [vmem:[%s1284 + $0x40] sm:$0xff]
        %v1294 = vld [vmem:[%s1284 + $0x48] sm:$0xff]
        %v1295 = vld [vmem:[%s1284 + $0x50] sm:$0xff]
        %v1296 = vld [vmem:[%s1284 + $0x58] sm:$0xff]
        %v1297 = vld [vmem:[%s1284 + $0x60] sm:$0xff]
        %v1298 = vld [vmem:[%s1284 + $0x68] sm:$0xff]
        %v1299 = vld [vmem:[%s1284 + $0x70] sm:$0xff]
        %v1300 = vld [vmem:[%s1284 + $0x78] sm:$0xff]
        %v1301 = vld [vmem:[%s1284 + $0x80] sm:$0xff]
        %v1303 = vsel %vm621, %v436, 0
        %v1306 = vsel %vm621, %v438, 0
        %1308 = vmatprep.subr.mxu0 0.0
        %1309 = vmatpush1.msra.mxu0 %v1285
        %1310 = vmatprep.subr.mxu0 0.0
        %1311 = vmatpush1.msra.mxu0 %v1286
        %1312 = vmatprep.subr.mxu0 0.0
        %1313 = vmatpush1.msra.mxu0 %v1287
        %1314 = vmatprep.subr.mxu0 0.0
        %1315 = vmatpush1.msra.mxu0 %v1288
        %1316 = vmatprep.subr.mxu0 0.0
        %1317 = vmatpush1.msra.mxu0 %v1289
        %1318 = vmatprep.subr.mxu0 0.0
        %1319 = vmatpush1.msra.mxu0 %v1290
        %1320 = vmatprep.subr.mxu0 0.0
        %1321 = vmatpush1.msra.mxu0 %v1291
        %1322 = vmatprep.subr.mxu0 0.0
        %1323 = vmatpush1.msra.mxu0 %v1292
        %1324 = vmatprep.subr.mxu0 0.0
        %1325 = vmatpush1.msra.mxu0 %v1293
        %1326 = vmatprep.subr.mxu0 0.0
        %1327 = vmatpush1.msra.mxu0 %v1294
        %1328 = vmatprep.subr.mxu0 0.0
        %1329 = vmatpush1.msra.mxu0 %v1295
        %1330 = vmatprep.subr.mxu0 0.0
        %1331 = vmatpush1.msra.mxu0 %v1296
        %1332 = vmatprep.subr.mxu0 0.0
        %1333 = vmatpush1.msra.mxu0 %v1297
        %1334 = vmatprep.subr.mxu0 0.0
        %1335 = vmatpush1.msra.mxu0 %v1298
        %1336 = vmatprep.subr.mxu0 0.0
        %1337 = vmatpush1.msra.mxu0 %v1299
        %1338 = vmatprep.subr.mxu0 0.0
        %1339 = vmatpush1.msra.mxu0 %v1300
        %1340 = vmatprep.subr.mxu0 0.0
        %1341 = vmatpush1.msra.mxu0 %v1301
        %1342 = vmatprep.subr.mxu0 0.0
        %1343 = vmatpush1.msra.mxu0 0.0
        %1344 = vmatprep.subr.mxu0 0.0
        %1345 = vmatpush1.msra.mxu0 0.0
        %1346 = vmatprep.subr.mxu0 0.0
        %1347 = vmatpush1.msra.mxu0 0.0
        %1348 = vmatprep.subr.mxu0 0.0
        %1349 = vmatpush1.msra.mxu0 0.0
        %1350 = vmatprep.subr.mxu0 0.0
        %1351 = vmatpush1.msra.mxu0 0.0
        %1352 = vmatprep.subr.mxu0 0.0
        %1353 = vmatpush1.msra.mxu0 0.0
        %1354 = vmatprep.subr.mxu0 0.0
        %1355 = vmatpush1.msra.mxu0 0.0
        %1356 = vmatprep.subr.mxu0 0.0
        %1357 = vmatpush1.msra.mxu0 0.0
        %1358 = vmatprep.subr.mxu0 0.0
        %1359 = vmatpush1.msra.mxu0 0.0
        %1360 = vmatprep.subr.mxu0 0.0
        %1361 = vmatpush1.msra.mxu0 0.0
        %1362 = vmatprep.subr.mxu0 0.0
        %1363 = vmatpush1.msra.mxu0 0.0
        %1364 = vmatprep.subr.mxu0 0.0
        %1365 = vmatpush1.msra.mxu0 0.0
        %1366 = vmatprep.subr.mxu0 0.0
        %1367 = vmatpush1.msra.mxu0 0.0
        %1368 = vmatprep.subr.mxu0 0.0
        %1369 = vmatpush1.msra.mxu0 0.0
        %1370 = vmatprep.subr.mxu0 0.0
        %1371 = vmatpush1.msra.mxu0 0.0
        %1372 = vmatprep.mubr.f32.mxu0 %v803
        %1373 = vmatmul.mubr.f32.gmra.mrb[0].mxu0 %v393
        %v1374 = vpop.f32.mrb[0].mxu0
        %v1375 = vadd.f32 0.0, %v1374
        %v1376 = vpop.f32.mrb[0].mxu0
        %1377 = vmatprep.mubr.f32.mxu0 %v805
        %1378 = vmatmul.mubr.f32.gmra.mrb[0].mxu0 %v395
        %v1379 = vpop.f32.mrb[0].mxu0
        %v1380 = vadd.f32 0.0, %v1379
        %v1381 = vpop.f32.mrb[0].mxu0
        %1382 = vmatprep.mubr.f32.mxu0 %v807
        %1383 = vmatmul.mubr.f32.gmra.mrb[0].mxu0 %v399
        %v1384 = vpop.f32.mrb[0].mxu0
        %v1385 = vadd.f32 0.0, %v1384
        %v1386 = vpop.f32.mrb[0].mxu0
        %1387 = vmatprep.mubr.f32.mxu0 %v809
        %1388 = vmatmul.mubr.f32.gmra.mrb[0].mxu0 %v401
        %v1389 = vpop.f32.mrb[0].mxu0
        %v1390 = vadd.f32 0.0, %v1389
        %v1391 = vpop.f32.mrb[0].mxu0
        %1392 = vmatprep.mubr.f32.mxu0 %v811
        %1393 = vmatmul.mubr.f32.gmra.mrb[0].mxu0 %v405
        %v1394 = vpop.f32.mrb[0].mxu0
        %v1395 = vadd.f32 0.0, %v1394
        %v1396 = vpop.f32.mrb[0].mxu0
        %1397 = vmatprep.mubr.f32.mxu0 %v813
        %1398 = vmatmul.mubr.f32.gmra.mrb[0].mxu0 %v407
        %v1399 = vpop.f32.mrb[0].mxu0
        %v1400 = vadd.f32 0.0, %v1399
        %v1401 = vpop.f32.mrb[0].mxu0
        %1402 = vmatprep.mubr.f32.mxu0 %v815
        %1403 = vmatmul.mubr.f32.gmra.mrb[0].mxu0 %v411
        %v1404 = vpop.f32.mrb[0].mxu0
        %v1405 = vadd.f32 0.0, %v1404
        %v1406 = vpop.f32.mrb[0].mxu0
        %1407 = vmatprep.mubr.f32.mxu0 %v817
        %1408 = vmatmul.mubr.f32.gmra.mrb[0].mxu0 %v413
        %v1409 = vpop.f32.mrb[0].mxu0
        %v1410 = vadd.f32 0.0, %v1409
        %v1411 = vpop.f32.mrb[0].mxu0
        %1412 = vmatprep.mubr.f32.mxu0 %v819
        %1413 = vmatmul.mubr.f32.gmra.mrb[0].mxu0 %v417
        %v1414 = vpop.f32.mrb[0].mxu0
        %v1415 = vadd.f32 0.0, %v1414
        %v1416 = vpop.f32.mrb[0].mxu0
        %1417 = vmatprep.mubr.f32.mxu0 %v821
        %1418 = vmatmul.mubr.f32.gmra.mrb[0].mxu0 %v419
        %v1419 = vpop.f32.mrb[0].mxu0
        %v1420 = vadd.f32 0.0, %v1419
        %v1421 = vpop.f32.mrb[0].mxu0
        %1422 = vmatprep.mubr.f32.mxu0 %v823
        %1423 = vmatmul.mubr.f32.gmra.mrb[0].mxu0 %v423
        %v1424 = vpop.f32.mrb[0].mxu0
        %v1425 = vadd.f32 0.0, %v1424
        %v1426 = vpop.f32.mrb[0].mxu0
        %1427 = vmatprep.mubr.f32.mxu0 %v825
        %1428 = vmatmul.mubr.f32.gmra.mrb[0].mxu0 %v425
        %v1429 = vpop.f32.mrb[0].mxu0
        %v1430 = vadd.f32 0.0, %v1429
        %v1431 = vpop.f32.mrb[0].mxu0
        %1432 = vmatprep.mubr.f32.mxu0 %v827
        %1433 = vmatmul.mubr.f32.gmra.mrb[0].mxu0 %v429
        %v1434 = vpop.f32.mrb[0].mxu0
        %v1435 = vadd.f32 0.0, %v1434
        %v1436 = vpop.f32.mrb[0].mxu0
        %1437 = vmatprep.mubr.f32.mxu0 %v829
        %1438 = vmatmul.mubr.f32.gmra.mrb[0].mxu0 %v431
        %v1439 = vpop.f32.mrb[0].mxu0
        %v1440 = vadd.f32 0.0, %v1439
        %v1441 = vpop.f32.mrb[0].mxu0
        %1442 = vmatprep.mubr.f32.mxu0 %v1303
        %1443 = vmatmul.mubr.f32.gmra.mrb[0].mxu0 %v435
        %v1444 = vpop.f32.mrb[0].mxu0
        %v1445 = vadd.f32 0.0, %v1444
        %v1446 = vpop.f32.mrb[0].mxu0
        %1447 = vmatprep.mubr.f32.mxu0 %v1306
        %1448 = vmatmul.mubr.f32.gmra.mrb[0].mxu0 %v437
        %v1449 = vpop.f32.mrb[0].mxu0
        %v1450 = vadd.f32 0.0, %v1449
        %v1451 = vpop.f32.mrb[0].mxu0
        %1452 = vdwg.mxu0
        %v1453 = vadd.f32 %v1268, %v1375
        %v1454 = vadd.f32 %v1269, %v1380
        %v1455 = vadd.f32 %v1270, %v1385
        %v1456 = vadd.f32 %v1271, %v1390
        %v1457 = vadd.f32 %v1272, %v1395
        %v1458 = vadd.f32 %v1273, %v1400
        %v1459 = vadd.f32 %v1274, %v1405
        %v1460 = vadd.f32 %v1275, %v1410
        %v1461 = vadd.f32 %v1276, %v1415
        %v1462 = vadd.f32 %v1277, %v1420
        %v1463 = vadd.f32 %v1278, %v1425
        %v1464 = vadd.f32 %v1279, %v1430
        %v1465 = vadd.f32 %v1280, %v1435
        %v1466 = vadd.f32 %v1281, %v1440
        %v1467 = vadd.f32 %v1282, %v1445
        %v1468 = vadd.f32 %v1283, %v1450
        %v1473 = vrot.slane %v435, 1
        %v1474 = vrot.slane %v437, 1
        %v1475 = vsel %vm506, %v1473, %v1474
        %v1476 = vrot.slane %v436, 1
        %v1477 = vrot.slane %v438, 1
        %v1478 = vsel %vm506, %v1476, %v1477
        %v1479 = vrot.slane %v439, 1
        %v1480 = vsel %vm506, %v1474, %v1479
        %v1481 = vrot.slane %v440, 1
        %v1482 = vsel %vm506, %v1477, %v1481
        %s1485 = scalar_lea.vmem [#allocation7], 544
        %v1486 = vld [vmem:[%s1485] sm:$0xff]
        %v1487 = vld [vmem:[%s1485 + $0x8] sm:$0xff]
        %v1488 = vld [vmem:[%s1485 + $0x10] sm:$0xff]
        %v1489 = vld [vmem:[%s1485 + $0x18] sm:$0xff]
        %v1490 = vld [vmem:[%s1485 + $0x20] sm:$0xff]
        %v1491 = vld [vmem:[%s1485 + $0x28] sm:$0xff]
        %v1492 = vld [vmem:[%s1485 + $0x30] sm:$0xff]
        %v1493 = vld [vmem:[%s1485 + $0x38] sm:$0xff]
        %v1494 = vld [vmem:[%s1485 + $0x40] sm:$0xff]
        %v1495 = vld [vmem:[%s1485 + $0x48] sm:$0xff]
        %v1496 = vld [vmem:[%s1485 + $0x50] sm:$0xff]
        %v1497 = vld [vmem:[%s1485 + $0x58] sm:$0xff]
        %v1498 = vld [vmem:[%s1485 + $0x60] sm:$0xff]
        %v1499 = vld [vmem:[%s1485 + $0x68] sm:$0xff]
        %v1500 = vld [vmem:[%s1485 + $0x70] sm:$0xff]
        %v1501 = vld [vmem:[%s1485 + $0x78] sm:$0xff]
        %v1502 = vld [vmem:[%s1485 + $0x80] sm:$0xff]
        %v1503 = vsel %vm621, %v1478, 0
        %v1505 = vsel %vm621, %v1482, 0
        %1507 = vmatprep.subr.mxu0 0.0
        %1508 = vmatpush1.msra.mxu0 %v1486
        %1509 = vmatprep.subr.mxu0 0.0
        %1510 = vmatpush1.msra.mxu0 %v1487
        %1511 = vmatprep.subr.mxu0 0.0
        %1512 = vmatpush1.msra.mxu0 %v1488
        %1513 = vmatprep.subr.mxu0 0.0
        %1514 = vmatpush1.msra.mxu0 %v1489
        %1515 = vmatprep.subr.mxu0 0.0
        %1516 = vmatpush1.msra.mxu0 %v1490
        %1517 = vmatprep.subr.mxu0 0.0
        %1518 = vmatpush1.msra.mxu0 %v1491
        %1519 = vmatprep.subr.mxu0 0.0
        %1520 = vmatpush1.msra.mxu0 %v1492
        %1521 = vmatprep.subr.mxu0 0.0
        %1522 = vmatpush1.msra.mxu0 %v1493
        %1523 = vmatprep.subr.mxu0 0.0
        %1524 = vmatpush1.msra.mxu0 %v1494
        %1525 = vmatprep.subr.mxu0 0.0
        %1526 = vmatpush1.msra.mxu0 %v1495
        %1527 = vmatprep.subr.mxu0 0.0
        %1528 = vmatpush1.msra.mxu0 %v1496
        %1529 = vmatprep.subr.mxu0 0.0
        %1530 = vmatpush1.msra.mxu0 %v1497
        %1531 = vmatprep.subr.mxu0 0.0
        %1532 = vmatpush1.msra.mxu0 %v1498
        %1533 = vmatprep.subr.mxu0 0.0
        %1534 = vmatpush1.msra.mxu0 %v1499
        %1535 = vmatprep.subr.mxu0 0.0
        %1536 = vmatpush1.msra.mxu0 %v1500
        %1537 = vmatprep.subr.mxu0 0.0
        %1538 = vmatpush1.msra.mxu0 %v1501
        %1539 = vmatprep.subr.mxu0 0.0
        %1540 = vmatpush1.msra.mxu0 %v1502
        %1541 = vmatprep.subr.mxu0 0.0
        %1542 = vmatpush1.msra.mxu0 0.0
        %1543 = vmatprep.subr.mxu0 0.0
        %1544 = vmatpush1.msra.mxu0 0.0
        %1545 = vmatprep.subr.mxu0 0.0
        %1546 = vmatpush1.msra.mxu0 0.0
        %1547 = vmatprep.subr.mxu0 0.0
        %1548 = vmatpush1.msra.mxu0 0.0
        %1549 = vmatprep.subr.mxu0 0.0
        %1550 = vmatpush1.msra.mxu0 0.0
        %1551 = vmatprep.subr.mxu0 0.0
        %1552 = vmatpush1.msra.mxu0 0.0
        %1553 = vmatprep.subr.mxu0 0.0
        %1554 = vmatpush1.msra.mxu0 0.0
        %1555 = vmatprep.subr.mxu0 0.0
        %1556 = vmatpush1.msra.mxu0 0.0
        %1557 = vmatprep.subr.mxu0 0.0
        %1558 = vmatpush1.msra.mxu0 0.0
        %1559 = vmatprep.subr.mxu0 0.0
        %1560 = vmatpush1.msra.mxu0 0.0
        %1561 = vmatprep.subr.mxu0 0.0
        %1562 = vmatpush1.msra.mxu0 0.0
        %1563 = vmatprep.subr.mxu0 0.0
        %1564 = vmatpush1.msra.mxu0 0.0
        %1565 = vmatprep.subr.mxu0 0.0
        %1566 = vmatpush1.msra.mxu0 0.0
        %1567 = vmatprep.subr.mxu0 0.0
        %1568 = vmatpush1.msra.mxu0 0.0
        %1569 = vmatprep.subr.mxu0 0.0
        %1570 = vmatpush1.msra.mxu0 0.0
        %1571 = vmatprep.mubr.f32.mxu0 %v626
        %1572 = vmatmul.mubr.f32.gmra.mrb[0].mxu0 %v519
        %v1573 = vpop.f32.mrb[0].mxu0
        %v1574 = vadd.f32 0.0, %v1573
        %v1575 = vpop.f32.mrb[0].mxu0
        %1576 = vmatprep.mubr.f32.mxu0 %v628
        %1577 = vmatmul.mubr.f32.gmra.mrb[0].mxu0 %v524
        %v1578 = vpop.f32.mrb[0].mxu0
        %v1579 = vadd.f32 0.0, %v1578
        %v1580 = vpop.f32.mrb[0].mxu0
        %1581 = vmatprep.mubr.f32.mxu0 %v630
        %1582 = vmatmul.mubr.f32.gmra.mrb[0].mxu0 %v529
        %v1583 = vpop.f32.mrb[0].mxu0
        %v1584 = vadd.f32 0.0, %v1583
        %v1585 = vpop.f32.mrb[0].mxu0
        %1586 = vmatprep.mubr.f32.mxu0 %v632
        %1587 = vmatmul.mubr.f32.gmra.mrb[0].mxu0 %v534
        %v1588 = vpop.f32.mrb[0].mxu0
        %v1589 = vadd.f32 0.0, %v1588
        %v1590 = vpop.f32.mrb[0].mxu0
        %1591 = vmatprep.mubr.f32.mxu0 %v634
        %1592 = vmatmul.mubr.f32.gmra.mrb[0].mxu0 %v539
        %v1593 = vpop.f32.mrb[0].mxu0
        %v1594 = vadd.f32 0.0, %v1593
        %v1595 = vpop.f32.mrb[0].mxu0
        %1596 = vmatprep.mubr.f32.mxu0 %v636
        %1597 = vmatmul.mubr.f32.gmra.mrb[0].mxu0 %v544
        %v1598 = vpop.f32.mrb[0].mxu0
        %v1599 = vadd.f32 0.0, %v1598
        %v1600 = vpop.f32.mrb[0].mxu0
        %1601 = vmatprep.mubr.f32.mxu0 %v638
        %1602 = vmatmul.mubr.f32.gmra.mrb[0].mxu0 %v549
        %v1603 = vpop.f32.mrb[0].mxu0
        %v1604 = vadd.f32 0.0, %v1603
        %v1605 = vpop.f32.mrb[0].mxu0
        %1606 = vmatprep.mubr.f32.mxu0 %v640
        %1607 = vmatmul.mubr.f32.gmra.mrb[0].mxu0 %v554
        %v1608 = vpop.f32.mrb[0].mxu0
        %v1609 = vadd.f32 0.0, %v1608
        %v1610 = vpop.f32.mrb[0].mxu0
        %1611 = vmatprep.mubr.f32.mxu0 %v642
        %1612 = vmatmul.mubr.f32.gmra.mrb[0].mxu0 %v559
        %v1613 = vpop.f32.mrb[0].mxu0
        %v1614 = vadd.f32 0.0, %v1613
        %v1615 = vpop.f32.mrb[0].mxu0
        %1616 = vmatprep.mubr.f32.mxu0 %v644
        %1617 = vmatmul.mubr.f32.gmra.mrb[0].mxu0 %v564
        %v1618 = vpop.f32.mrb[0].mxu0
        %v1619 = vadd.f32 0.0, %v1618
        %v1620 = vpop.f32.mrb[0].mxu0
        %1621 = vmatprep.mubr.f32.mxu0 %v646
        %1622 = vmatmul.mubr.f32.gmra.mrb[0].mxu0 %v569
        %v1623 = vpop.f32.mrb[0].mxu0
        %v1624 = vadd.f32 0.0, %v1623
        %v1625 = vpop.f32.mrb[0].mxu0
        %1626 = vmatprep.mubr.f32.mxu0 %v648
        %1627 = vmatmul.mubr.f32.gmra.mrb[0].mxu0 %v574
        %v1628 = vpop.f32.mrb[0].mxu0
        %v1629 = vadd.f32 0.0, %v1628
        %v1630 = vpop.f32.mrb[0].mxu0
        %1631 = vmatprep.mubr.f32.mxu0 %v650
        %1632 = vmatmul.mubr.f32.gmra.mrb[0].mxu0 %v579
        %v1633 = vpop.f32.mrb[0].mxu0
        %v1634 = vadd.f32 0.0, %v1633
        %v1635 = vpop.f32.mrb[0].mxu0
        %1636 = vmatprep.mubr.f32.mxu0 %v652
        %1637 = vmatmul.mubr.f32.gmra.mrb[0].mxu0 %v584
        %v1638 = vpop.f32.mrb[0].mxu0
        %v1639 = vadd.f32 0.0, %v1638
        %v1640 = vpop.f32.mrb[0].mxu0
        %1641 = vmatprep.mubr.f32.mxu0 %v1503
        %1642 = vmatmul.mubr.f32.gmra.mrb[0].mxu0 %v1475
        %v1643 = vpop.f32.mrb[0].mxu0
        %v1644 = vadd.f32 0.0, %v1643
        %v1645 = vpop.f32.mrb[0].mxu0
        %1646 = vmatprep.mubr.f32.mxu0 %v1505
        %1647 = vmatmul.mubr.f32.gmra.mrb[0].mxu0 %v1480
        %v1648 = vpop.f32.mrb[0].mxu0
        %v1649 = vadd.f32 0.0, %v1648
        %v1650 = vpop.f32.mrb[0].mxu0
        %1651 = vdwg.mxu0
        %v1652 = vadd.f32 %v1453, %v1574
        %v1653 = vadd.f32 %v1454, %v1579
        %v1654 = vadd.f32 %v1455, %v1584
        %v1655 = vadd.f32 %v1456, %v1589
        %v1656 = vadd.f32 %v1457, %v1594
        %v1657 = vadd.f32 %v1458, %v1599
        %v1658 = vadd.f32 %v1459, %v1604
        %v1659 = vadd.f32 %v1460, %v1609
        %v1660 = vadd.f32 %v1461, %v1614
        %v1661 = vadd.f32 %v1462, %v1619
        %v1662 = vadd.f32 %v1463, %v1624
        %v1663 = vadd.f32 %v1464, %v1629
        %v1664 = vadd.f32 %v1465, %v1634
        %v1665 = vadd.f32 %v1466, %v1639
        %v1666 = vadd.f32 %v1467, %v1644
        %v1667 = vadd.f32 %v1468, %v1649
        %v1668 = vrot.slane %v435, 2
        %v1669 = vrot.slane %v437, 2
        %v1670 = vsel %vm976, %v1668, %v1669
        %v1671 = vrot.slane %v436, 2
        %v1672 = vrot.slane %v438, 2
        %v1673 = vsel %vm976, %v1671, %v1672
        %v1674 = vrot.slane %v439, 2
        %v1675 = vsel %vm976, %v1669, %v1674
        %v1676 = vrot.slane %v440, 2
        %v1677 = vsel %vm976, %v1672, %v1676
        %s1680 = scalar_lea.vmem [#allocation7], 680
        %v1681 = vld [vmem:[%s1680] sm:$0xff]
        %v1682 = vld [vmem:[%s1680 + $0x8] sm:$0xff]
        %v1683 = vld [vmem:[%s1680 + $0x10] sm:$0xff]
        %v1684 = vld [vmem:[%s1680 + $0x18] sm:$0xff]
        %v1685 = vld [vmem:[%s1680 + $0x20] sm:$0xff]
        %v1686 = vld [vmem:[%s1680 + $0x28] sm:$0xff]
        %v1687 = vld [vmem:[%s1680 + $0x30] sm:$0xff]
        %v1688 = vld [vmem:[%s1680 + $0x38] sm:$0xff]
        %v1689 = vld [vmem:[%s1680 + $0x40] sm:$0xff]
        %v1690 = vld [vmem:[%s1680 + $0x48] sm:$0xff]
        %v1691 = vld [vmem:[%s1680 + $0x50] sm:$0xff]
        %v1692 = vld [vmem:[%s1680 + $0x58] sm:$0xff]
        %v1693 = vld [vmem:[%s1680 + $0x60] sm:$0xff]
        %v1694 = vld [vmem:[%s1680 + $0x68] sm:$0xff]
        %v1695 = vld [vmem:[%s1680 + $0x70] sm:$0xff]
        %v1696 = vld [vmem:[%s1680 + $0x78] sm:$0xff]
        %v1697 = vld [vmem:[%s1680 + $0x80] sm:$0xff]
        %v1698 = vsel %vm621, %v1673, 0
        %v1700 = vsel %vm621, %v1677, 0
        %1702 = vmatprep.subr.mxu0 0.0
        %1703 = vmatpush1.msra.mxu0 %v1681
        %1704 = vmatprep.subr.mxu0 0.0
        %1705 = vmatpush1.msra.mxu0 %v1682
        %1706 = vmatprep.subr.mxu0 0.0
        %1707 = vmatpush1.msra.mxu0 %v1683
        %1708 = vmatprep.subr.mxu0 0.0
        %1709 = vmatpush1.msra.mxu0 %v1684
        %1710 = vmatprep.subr.mxu0 0.0
        %1711 = vmatpush1.msra.mxu0 %v1685
        %1712 = vmatprep.subr.mxu0 0.0
        %1713 = vmatpush1.msra.mxu0 %v1686
        %1714 = vmatprep.subr.mxu0 0.0
        %1715 = vmatpush1.msra.mxu0 %v1687
        %1716 = vmatprep.subr.mxu0 0.0
        %1717 = vmatpush1.msra.mxu0 %v1688
        %1718 = vmatprep.subr.mxu0 0.0
        %1719 = vmatpush1.msra.mxu0 %v1689
        %1720 = vmatprep.subr.mxu0 0.0
        %1721 = vmatpush1.msra.mxu0 %v1690
        %1722 = vmatprep.subr.mxu0 0.0
        %1723 = vmatpush1.msra.mxu0 %v1691
        %1724 = vmatprep.subr.mxu0 0.0
        %1725 = vmatpush1.msra.mxu0 %v1692
        %1726 = vmatprep.subr.mxu0 0.0
        %1727 = vmatpush1.msra.mxu0 %v1693
        %1728 = vmatprep.subr.mxu0 0.0
        %1729 = vmatpush1.msra.mxu0 %v1694
        %1730 = vmatprep.subr.mxu0 0.0
        %1731 = vmatpush1.msra.mxu0 %v1695
        %1732 = vmatprep.subr.mxu0 0.0
        %1733 = vmatpush1.msra.mxu0 %v1696
        %1734 = vmatprep.subr.mxu0 0.0
        %1735 = vmatpush1.msra.mxu0 %v1697
        %1736 = vmatprep.subr.mxu0 0.0
        %1737 = vmatpush1.msra.mxu0 0.0
        %1738 = vmatprep.subr.mxu0 0.0
        %1739 = vmatpush1.msra.mxu0 0.0
        %1740 = vmatprep.subr.mxu0 0.0
        %1741 = vmatpush1.msra.mxu0 0.0
        %1742 = vmatprep.subr.mxu0 0.0
        %1743 = vmatpush1.msra.mxu0 0.0
        %1744 = vmatprep.subr.mxu0 0.0
        %1745 = vmatpush1.msra.mxu0 0.0
        %1746 = vmatprep.subr.mxu0 0.0
        %1747 = vmatpush1.msra.mxu0 0.0
        %1748 = vmatprep.subr.mxu0 0.0
        %1749 = vmatpush1.msra.mxu0 0.0
        %1750 = vmatprep.subr.mxu0 0.0
        %1751 = vmatpush1.msra.mxu0 0.0
        %1752 = vmatprep.subr.mxu0 0.0
        %1753 = vmatpush1.msra.mxu0 0.0
        %1754 = vmatprep.subr.mxu0 0.0
        %1755 = vmatpush1.msra.mxu0 0.0
        %1756 = vmatprep.subr.mxu0 0.0
        %1757 = vmatpush1.msra.mxu0 0.0
        %1758 = vmatprep.subr.mxu0 0.0
        %1759 = vmatpush1.msra.mxu0 0.0
        %1760 = vmatprep.subr.mxu0 0.0
        %1761 = vmatpush1.msra.mxu0 0.0
        %1762 = vmatprep.subr.mxu0 0.0
        %1763 = vmatpush1.msra.mxu0 0.0
        %1764 = vmatprep.subr.mxu0 0.0
        %1765 = vmatpush1.msra.mxu0 0.0
        %1766 = vmatprep.mubr.f32.mxu0 %v1095
        %1767 = vmatmul.mubr.f32.gmra.mrb[0].mxu0 %v989
        %v1768 = vpop.f32.mrb[0].mxu0
        %v1769 = vadd.f32 0.0, %v1768
        %v1770 = vpop.f32.mrb[0].mxu0
        %1771 = vmatprep.mubr.f32.mxu0 %v1097
        %1772 = vmatmul.mubr.f32.gmra.mrb[0].mxu0 %v994
        %v1773 = vpop.f32.mrb[0].mxu0
        %v1774 = vadd.f32 0.0, %v1773
        %v1775 = vpop.f32.mrb[0].mxu0
        %1776 = vmatprep.mubr.f32.mxu0 %v1099
        %1777 = vmatmul.mubr.f32.gmra.mrb[0].mxu0 %v999
        %v1778 = vpop.f32.mrb[0].mxu0
        %v1779 = vadd.f32 0.0, %v1778
        %v1780 = vpop.f32.mrb[0].mxu0
        %1781 = vmatprep.mubr.f32.mxu0 %v1101
        %1782 = vmatmul.mubr.f32.gmra.mrb[0].mxu0 %v1004
        %v1783 = vpop.f32.mrb[0].mxu0
        %v1784 = vadd.f32 0.0, %v1783
        %v1785 = vpop.f32.mrb[0].mxu0
        %1786 = vmatprep.mubr.f32.mxu0 %v1103
        %1787 = vmatmul.mubr.f32.gmra.mrb[0].mxu0 %v1009
        %v1788 = vpop.f32.mrb[0].mxu0
        %v1789 = vadd.f32 0.0, %v1788
        %v1790 = vpop.f32.mrb[0].mxu0
        %1791 = vmatprep.mubr.f32.mxu0 %v1105
        %1792 = vmatmul.mubr.f32.gmra.mrb[0].mxu0 %v1014
        %v1793 = vpop.f32.mrb[0].mxu0
        %v1794 = vadd.f32 0.0, %v1793
        %v1795 = vpop.f32.mrb[0].mxu0
        %1796 = vmatprep.mubr.f32.mxu0 %v1107
        %1797 = vmatmul.mubr.f32.gmra.mrb[0].mxu0 %v1019
        %v1798 = vpop.f32.mrb[0].mxu0
        %v1799 = vadd.f32 0.0, %v1798
        %v1800 = vpop.f32.mrb[0].mxu0
        %1801 = vmatprep.mubr.f32.mxu0 %v1109
        %1802 = vmatmul.mubr.f32.gmra.mrb[0].mxu0 %v1024
        %v1803 = vpop.f32.mrb[0].mxu0
        %v1804 = vadd.f32 0.0, %v1803
        %v1805 = vpop.f32.mrb[0].mxu0
        %1806 = vmatprep.mubr.f32.mxu0 %v1111
        %1807 = vmatmul.mubr.f32.gmra.mrb[0].mxu0 %v1029
        %v1808 = vpop.f32.mrb[0].mxu0
        %v1809 = vadd.f32 0.0, %v1808
        %v1810 = vpop.f32.mrb[0].mxu0
        %1811 = vmatprep.mubr.f32.mxu0 %v1113
        %1812 = vmatmul.mubr.f32.gmra.mrb[0].mxu0 %v1034
        %v1813 = vpop.f32.mrb[0].mxu0
        %v1814 = vadd.f32 0.0, %v1813
        %v1815 = vpop.f32.mrb[0].mxu0
        %1816 = vmatprep.mubr.f32.mxu0 %v1115
        %1817 = vmatmul.mubr.f32.gmra.mrb[0].mxu0 %v1039
        %v1818 = vpop.f32.mrb[0].mxu0
        %v1819 = vadd.f32 0.0, %v1818
        %v1820 = vpop.f32.mrb[0].mxu0
        %1821 = vmatprep.mubr.f32.mxu0 %v1117
        %1822 = vmatmul.mubr.f32.gmra.mrb[0].mxu0 %v1044
        %v1823 = vpop.f32.mrb[0].mxu0
        %v1824 = vadd.f32 0.0, %v1823
        %v1825 = vpop.f32.mrb[0].mxu0
        %1826 = vmatprep.mubr.f32.mxu0 %v1119
        %1827 = vmatmul.mubr.f32.gmra.mrb[0].mxu0 %v1049
        %v1828 = vpop.f32.mrb[0].mxu0
        %v1829 = vadd.f32 0.0, %v1828
        %v1830 = vpop.f32.mrb[0].mxu0
        %1831 = vmatprep.mubr.f32.mxu0 %v1121
        %1832 = vmatmul.mubr.f32.gmra.mrb[0].mxu0 %v1054
        %v1833 = vpop.f32.mrb[0].mxu0
        %v1834 = vadd.f32 0.0, %v1833
        %v1835 = vpop.f32.mrb[0].mxu0
        %1836 = vmatprep.mubr.f32.mxu0 %v1698
        %1837 = vmatmul.mubr.f32.gmra.mrb[0].mxu0 %v1670
        %v1838 = vpop.f32.mrb[0].mxu0
        %v1839 = vadd.f32 0.0, %v1838
        %v1840 = vpop.f32.mrb[0].mxu0
        %1841 = vmatprep.mubr.f32.mxu0 %v1700
        %1842 = vmatmul.mubr.f32.gmra.mrb[0].mxu0 %v1675
        %v1843 = vpop.f32.mrb[0].mxu0
        %v1844 = vadd.f32 0.0, %v1843
        %v1845 = vpop.f32.mrb[0].mxu0
        %1846 = vdwg.mxu0
        %v1847 = vadd.f32 %v1652, %v1769
        %v1848 = vadd.f32 %v1653, %v1774
        %v1849 = vadd.f32 %v1654, %v1779
        %v1850 = vadd.f32 %v1655, %v1784
        %v1851 = vadd.f32 %v1656, %v1789
        %v1852 = vadd.f32 %v1657, %v1794
        %v1853 = vadd.f32 %v1658, %v1799
        %v1854 = vadd.f32 %v1659, %v1804
        %v1855 = vadd.f32 %v1660, %v1809
        %v1856 = vadd.f32 %v1661, %v1814
        %v1857 = vadd.f32 %v1662, %v1819
        %v1858 = vadd.f32 %v1663, %v1824
        %v1859 = vadd.f32 %v1664, %v1829
        %v1860 = vadd.f32 %v1665, %v1834
        %v1861 = vadd.f32 %v1666, %v1839
        %v1862 = vadd.f32 %v1667, %v1844
        %s1863 = scalar_lea.vmem [#allocation7], 816
        %v1864 = vld [vmem:[%s1863] sm:$0xff]
        %v1865 = vld [vmem:[%s1863 + $0x8] sm:$0xff]
        %v1866 = vld [vmem:[%s1863 + $0x10] sm:$0xff]
        %v1867 = vld [vmem:[%s1863 + $0x18] sm:$0xff]
        %v1868 = vld [vmem:[%s1863 + $0x20] sm:$0xff]
        %v1869 = vld [vmem:[%s1863 + $0x28] sm:$0xff]
        %v1870 = vld [vmem:[%s1863 + $0x30] sm:$0xff]
        %v1871 = vld [vmem:[%s1863 + $0x38] sm:$0xff]
        %v1872 = vld [vmem:[%s1863 + $0x40] sm:$0xff]
        %v1873 = vld [vmem:[%s1863 + $0x48] sm:$0xff]
        %v1874 = vld [vmem:[%s1863 + $0x50] sm:$0xff]
        %v1875 = vld [vmem:[%s1863 + $0x58] sm:$0xff]
        %v1876 = vld [vmem:[%s1863 + $0x60] sm:$0xff]
        %v1877 = vld [vmem:[%s1863 + $0x68] sm:$0xff]
        %v1878 = vld [vmem:[%s1863 + $0x70] sm:$0xff]
        %v1879 = vld [vmem:[%s1863 + $0x78] sm:$0xff]
        %v1880 = vld [vmem:[%s1863 + $0x80] sm:$0xff]
        %v1882 = vsel %vm621, %v388, 0
        %v1885 = vsel %vm621, %v390, 0
        %1887 = vmatprep.subr.mxu0 0.0
        %1888 = vmatpush1.msra.mxu0 %v1864
        %1889 = vmatprep.subr.mxu0 0.0
        %1890 = vmatpush1.msra.mxu0 %v1865
        %1891 = vmatprep.subr.mxu0 0.0
        %1892 = vmatpush1.msra.mxu0 %v1866
        %1893 = vmatprep.subr.mxu0 0.0
        %1894 = vmatpush1.msra.mxu0 %v1867
        %1895 = vmatprep.subr.mxu0 0.0
        %1896 = vmatpush1.msra.mxu0 %v1868
        %1897 = vmatprep.subr.mxu0 0.0
        %1898 = vmatpush1.msra.mxu0 %v1869
        %1899 = vmatprep.subr.mxu0 0.0
        %1900 = vmatpush1.msra.mxu0 %v1870
        %1901 = vmatprep.subr.mxu0 0.0
        %1902 = vmatpush1.msra.mxu0 %v1871
        %1903 = vmatprep.subr.mxu0 0.0
        %1904 = vmatpush1.msra.mxu0 %v1872
        %1905 = vmatprep.subr.mxu0 0.0
        %1906 = vmatpush1.msra.mxu0 %v1873
        %1907 = vmatprep.subr.mxu0 0.0
        %1908 = vmatpush1.msra.mxu0 %v1874
        %1909 = vmatprep.subr.mxu0 0.0
        %1910 = vmatpush1.msra.mxu0 %v1875
        %1911 = vmatprep.subr.mxu0 0.0
        %1912 = vmatpush1.msra.mxu0 %v1876
        %1913 = vmatprep.subr.mxu0 0.0
        %1914 = vmatpush1.msra.mxu0 %v1877
        %1915 = vmatprep.subr.mxu0 0.0
        %1916 = vmatpush1.msra.mxu0 %v1878
        %1917 = vmatprep.subr.mxu0 0.0
        %1918 = vmatpush1.msra.mxu0 %v1879
        %1919 = vmatprep.subr.mxu0 0.0
        %1920 = vmatpush1.msra.mxu0 %v1880
        %1921 = vmatprep.subr.mxu0 0.0
        %1922 = vmatpush1.msra.mxu0 0.0
        %1923 = vmatprep.subr.mxu0 0.0
        %1924 = vmatpush1.msra.mxu0 0.0
        %1925 = vmatprep.subr.mxu0 0.0
        %1926 = vmatpush1.msra.mxu0 0.0
        %1927 = vmatprep.subr.mxu0 0.0
        %1928 = vmatpush1.msra.mxu0 0.0
        %1929 = vmatprep.subr.mxu0 0.0
        %1930 = vmatpush1.msra.mxu0 0.0
        %1931 = vmatprep.subr.mxu0 0.0
        %1932 = vmatpush1.msra.mxu0 0.0
        %1933 = vmatprep.subr.mxu0 0.0
        %1934 = vmatpush1.msra.mxu0 0.0
        %1935 = vmatprep.subr.mxu0 0.0
        %1936 = vmatpush1.msra.mxu0 0.0
        %1937 = vmatprep.subr.mxu0 0.0
        %1938 = vmatpush1.msra.mxu0 0.0
        %1939 = vmatprep.subr.mxu0 0.0
        %1940 = vmatpush1.msra.mxu0 0.0
        %1941 = vmatprep.subr.mxu0 0.0
        %1942 = vmatpush1.msra.mxu0 0.0
        %1943 = vmatprep.subr.mxu0 0.0
        %1944 = vmatpush1.msra.mxu0 0.0
        %1945 = vmatprep.subr.mxu0 0.0
        %1946 = vmatpush1.msra.mxu0 0.0
        %1947 = vmatprep.subr.mxu0 0.0
        %1948 = vmatpush1.msra.mxu0 0.0
        %1949 = vmatprep.subr.mxu0 0.0
        %1950 = vmatpush1.msra.mxu0 0.0
        %1951 = vmatprep.mubr.f32.mxu0 %v807
        %1952 = vmatmul.mubr.f32.gmra.mrb[0].mxu0 %v399
        %v1953 = vpop.f32.mrb[0].mxu0
        %v1954 = vadd.f32 0.0, %v1953
        %v1955 = vpop.f32.mrb[0].mxu0
        %1956 = vmatprep.mubr.f32.mxu0 %v809
        %1957 = vmatmul.mubr.f32.gmra.mrb[0].mxu0 %v401
        %v1958 = vpop.f32.mrb[0].mxu0
        %v1959 = vadd.f32 0.0, %v1958
        %v1960 = vpop.f32.mrb[0].mxu0
        %1961 = vmatprep.mubr.f32.mxu0 %v811
        %1962 = vmatmul.mubr.f32.gmra.mrb[0].mxu0 %v405
        %v1963 = vpop.f32.mrb[0].mxu0
        %v1964 = vadd.f32 0.0, %v1963
        %v1965 = vpop.f32.mrb[0].mxu0
        %1966 = vmatprep.mubr.f32.mxu0 %v813
        %1967 = vmatmul.mubr.f32.gmra.mrb[0].mxu0 %v407
        %v1968 = vpop.f32.mrb[0].mxu0
        %v1969 = vadd.f32 0.0, %v1968
        %v1970 = vpop.f32.mrb[0].mxu0
        %1971 = vmatprep.mubr.f32.mxu0 %v815
        %1972 = vmatmul.mubr.f32.gmra.mrb[0].mxu0 %v411
        %v1973 = vpop.f32.mrb[0].mxu0
        %v1974 = vadd.f32 0.0, %v1973
        %v1975 = vpop.f32.mrb[0].mxu0
        %1976 = vmatprep.mubr.f32.mxu0 %v817
        %1977 = vmatmul.mubr.f32.gmra.mrb[0].mxu0 %v413
        %v1978 = vpop.f32.mrb[0].mxu0
        %v1979 = vadd.f32 0.0, %v1978
        %v1980 = vpop.f32.mrb[0].mxu0
        %1981 = vmatprep.mubr.f32.mxu0 %v819
        %1982 = vmatmul.mubr.f32.gmra.mrb[0].mxu0 %v417
        %v1983 = vpop.f32.mrb[0].mxu0
        %v1984 = vadd.f32 0.0, %v1983
        %v1985 = vpop.f32.mrb[0].mxu0
        %1986 = vmatprep.mubr.f32.mxu0 %v821
        %1987 = vmatmul.mubr.f32.gmra.mrb[0].mxu0 %v419
        %v1988 = vpop.f32.mrb[0].mxu0
        %v1989 = vadd.f32 0.0, %v1988
        %v1990 = vpop.f32.mrb[0].mxu0
        %1991 = vmatprep.mubr.f32.mxu0 %v823
        %1992 = vmatmul.mubr.f32.gmra.mrb[0].mxu0 %v423
        %v1993 = vpop.f32.mrb[0].mxu0
        %v1994 = vadd.f32 0.0, %v1993
        %v1995 = vpop.f32.mrb[0].mxu0
        %1996 = vmatprep.mubr.f32.mxu0 %v825
        %1997 = vmatmul.mubr.f32.gmra.mrb[0].mxu0 %v425
        %v1998 = vpop.f32.mrb[0].mxu0
        %v1999 = vadd.f32 0.0, %v1998
        %v2000 = vpop.f32.mrb[0].mxu0
        %2001 = vmatprep.mubr.f32.mxu0 %v827
        %2002 = vmatmul.mubr.f32.gmra.mrb[0].mxu0 %v429
        %v2003 = vpop.f32.mrb[0].mxu0
        %v2004 = vadd.f32 0.0, %v2003
        %v2005 = vpop.f32.mrb[0].mxu0
        %2006 = vmatprep.mubr.f32.mxu0 %v829
        %2007 = vmatmul.mubr.f32.gmra.mrb[0].mxu0 %v431
        %v2008 = vpop.f32.mrb[0].mxu0
        %v2009 = vadd.f32 0.0, %v2008
        %v2010 = vpop.f32.mrb[0].mxu0
        %2011 = vmatprep.mubr.f32.mxu0 %v1303
        %2012 = vmatmul.mubr.f32.gmra.mrb[0].mxu0 %v435
        %v2013 = vpop.f32.mrb[0].mxu0
        %v2014 = vadd.f32 0.0, %v2013
        %v2015 = vpop.f32.mrb[0].mxu0
        %2016 = vmatprep.mubr.f32.mxu0 %v1306
        %2017 = vmatmul.mubr.f32.gmra.mrb[0].mxu0 %v437
        %v2018 = vpop.f32.mrb[0].mxu0
        %v2019 = vadd.f32 0.0, %v2018
        %v2020 = vpop.f32.mrb[0].mxu0
        %2021 = vmatprep.mubr.f32.mxu0 %v1882
        %2022 = vmatmul.mubr.f32.gmra.mrb[0].mxu0 %v387
        %v2023 = vpop.f32.mrb[0].mxu0
        %v2024 = vadd.f32 0.0, %v2023
        %v2025 = vpop.f32.mrb[0].mxu0
        %2026 = vmatprep.mubr.f32.mxu0 %v1885
        %2027 = vmatmul.mubr.f32.gmra.mrb[0].mxu0 %v389
        %v2028 = vpop.f32.mrb[0].mxu0
        %v2029 = vadd.f32 0.0, %v2028
        %v2030 = vpop.f32.mrb[0].mxu0
        %2031 = vdwg.mxu0
        %v2032 = vadd.f32 %v1847, %v1954
        %v2033 = vadd.f32 %v1848, %v1959
        %v2034 = vadd.f32 %v1849, %v1964
        %v2035 = vadd.f32 %v1850, %v1969
        %v2036 = vadd.f32 %v1851, %v1974
        %v2037 = vadd.f32 %v1852, %v1979
        %v2038 = vadd.f32 %v1853, %v1984
        %v2039 = vadd.f32 %v1854, %v1989
        %v2040 = vadd.f32 %v1855, %v1994
        %v2041 = vadd.f32 %v1856, %v1999
        %v2042 = vadd.f32 %v1857, %v2004
        %v2043 = vadd.f32 %v1858, %v2009
        %v2044 = vadd.f32 %v1859, %v2014
        %v2045 = vadd.f32 %v1860, %v2019
        %v2046 = vadd.f32 %v1861, %v2024
        %v2047 = vadd.f32 %v1862, %v2029
        %v2052 = vrot.slane %v387, 1
        %v2053 = vrot.slane %v389, 1
        %v2054 = vsel %vm506, %v2052, %v2053
        %v2055 = vrot.slane %v388, 1
        %v2056 = vrot.slane %v390, 1
        %v2057 = vsel %vm506, %v2055, %v2056
        %v2058 = vrot.slane %v391, 1
        %v2059 = vsel %vm506, %v2053, %v2058
        %v2060 = vrot.slane %v392, 1
        %v2061 = vsel %vm506, %v2056, %v2060
        %s2064 = scalar_lea.vmem [#allocation7], 952
        %v2065 = vld [vmem:[%s2064] sm:$0xff]
        %v2066 = vld [vmem:[%s2064 + $0x8] sm:$0xff]
        %v2067 = vld [vmem:[%s2064 + $0x10] sm:$0xff]
        %v2068 = vld [vmem:[%s2064 + $0x18] sm:$0xff]
        %v2069 = vld [vmem:[%s2064 + $0x20] sm:$0xff]
        %v2070 = vld [vmem:[%s2064 + $0x28] sm:$0xff]
        %v2071 = vld [vmem:[%s2064 + $0x30] sm:$0xff]
        %v2072 = vld [vmem:[%s2064 + $0x38] sm:$0xff]
        %v2073 = vld [vmem:[%s2064 + $0x40] sm:$0xff]
        %v2074 = vld [vmem:[%s2064 + $0x48] sm:$0xff]
        %v2075 = vld [vmem:[%s2064 + $0x50] sm:$0xff]
        %v2076 = vld [vmem:[%s2064 + $0x58] sm:$0xff]
        %v2077 = vld [vmem:[%s2064 + $0x60] sm:$0xff]
        %v2078 = vld [vmem:[%s2064 + $0x68] sm:$0xff]
        %v2079 = vld [vmem:[%s2064 + $0x70] sm:$0xff]
        %v2080 = vld [vmem:[%s2064 + $0x78] sm:$0xff]
        %v2081 = vld [vmem:[%s2064 + $0x80] sm:$0xff]
        %v2082 = vsel %vm621, %v2057, 0
        %v2084 = vsel %vm621, %v2061, 0
        %2086 = vmatprep.subr.mxu0 0.0
        %2087 = vmatpush1.msra.mxu0 %v2065
        %2088 = vmatprep.subr.mxu0 0.0
        %2089 = vmatpush1.msra.mxu0 %v2066
        %2090 = vmatprep.subr.mxu0 0.0
        %2091 = vmatpush1.msra.mxu0 %v2067
        %2092 = vmatprep.subr.mxu0 0.0
        %2093 = vmatpush1.msra.mxu0 %v2068
        %2094 = vmatprep.subr.mxu0 0.0
        %2095 = vmatpush1.msra.mxu0 %v2069
        %2096 = vmatprep.subr.mxu0 0.0
        %2097 = vmatpush1.msra.mxu0 %v2070
        %2098 = vmatprep.subr.mxu0 0.0
        %2099 = vmatpush1.msra.mxu0 %v2071
        %2100 = vmatprep.subr.mxu0 0.0
        %2101 = vmatpush1.msra.mxu0 %v2072
        %2102 = vmatprep.subr.mxu0 0.0
        %2103 = vmatpush1.msra.mxu0 %v2073
        %2104 = vmatprep.subr.mxu0 0.0
        %2105 = vmatpush1.msra.mxu0 %v2074
        %2106 = vmatprep.subr.mxu0 0.0
        %2107 = vmatpush1.msra.mxu0 %v2075
        %2108 = vmatprep.subr.mxu0 0.0
        %2109 = vmatpush1.msra.mxu0 %v2076
        %2110 = vmatprep.subr.mxu0 0.0
        %2111 = vmatpush1.msra.mxu0 %v2077
        %2112 = vmatprep.subr.mxu0 0.0
        %2113 = vmatpush1.msra.mxu0 %v2078
        %2114 = vmatprep.subr.mxu0 0.0
        %2115 = vmatpush1.msra.mxu0 %v2079
        %2116 = vmatprep.subr.mxu0 0.0
        %2117 = vmatpush1.msra.mxu0 %v2080
        %2118 = vmatprep.subr.mxu0 0.0
        %2119 = vmatpush1.msra.mxu0 %v2081
        %2120 = vmatprep.subr.mxu0 0.0
        %2121 = vmatpush1.msra.mxu0 0.0
        %2122 = vmatprep.subr.mxu0 0.0
        %2123 = vmatpush1.msra.mxu0 0.0
        %2124 = vmatprep.subr.mxu0 0.0
        %2125 = vmatpush1.msra.mxu0 0.0
        %2126 = vmatprep.subr.mxu0 0.0
        %2127 = vmatpush1.msra.mxu0 0.0
        %2128 = vmatprep.subr.mxu0 0.0
        %2129 = vmatpush1.msra.mxu0 0.0
        %2130 = vmatprep.subr.mxu0 0.0
        %2131 = vmatpush1.msra.mxu0 0.0
        %2132 = vmatprep.subr.mxu0 0.0
        %2133 = vmatpush1.msra.mxu0 0.0
        %2134 = vmatprep.subr.mxu0 0.0
        %2135 = vmatpush1.msra.mxu0 0.0
        %2136 = vmatprep.subr.mxu0 0.0
        %2137 = vmatpush1.msra.mxu0 0.0
        %2138 = vmatprep.subr.mxu0 0.0
        %2139 = vmatpush1.msra.mxu0 0.0
        %2140 = vmatprep.subr.mxu0 0.0
        %2141 = vmatpush1.msra.mxu0 0.0
        %2142 = vmatprep.subr.mxu0 0.0
        %2143 = vmatpush1.msra.mxu0 0.0
        %2144 = vmatprep.subr.mxu0 0.0
        %2145 = vmatpush1.msra.mxu0 0.0
        %2146 = vmatprep.subr.mxu0 0.0
        %2147 = vmatpush1.msra.mxu0 0.0
        %2148 = vmatprep.subr.mxu0 0.0
        %2149 = vmatpush1.msra.mxu0 0.0
        %2150 = vmatprep.mubr.f32.mxu0 %v630
        %2151 = vmatmul.mubr.f32.gmra.mrb[0].mxu0 %v529
        %v2152 = vpop.f32.mrb[0].mxu0
        %v2153 = vadd.f32 0.0, %v2152
        %v2154 = vpop.f32.mrb[0].mxu0
        %2155 = vmatprep.mubr.f32.mxu0 %v632
        %2156 = vmatmul.mubr.f32.gmra.mrb[0].mxu0 %v534
        %v2157 = vpop.f32.mrb[0].mxu0
        %v2158 = vadd.f32 0.0, %v2157
        %v2159 = vpop.f32.mrb[0].mxu0
        %2160 = vmatprep.mubr.f32.mxu0 %v634
        %2161 = vmatmul.mubr.f32.gmra.mrb[0].mxu0 %v539
        %v2162 = vpop.f32.mrb[0].mxu0
        %v2163 = vadd.f32 0.0, %v2162
        %v2164 = vpop.f32.mrb[0].mxu0
        %2165 = vmatprep.mubr.f32.mxu0 %v636
        %2166 = vmatmul.mubr.f32.gmra.mrb[0].mxu0 %v544
        %v2167 = vpop.f32.mrb[0].mxu0
        %v2168 = vadd.f32 0.0, %v2167
        %v2169 = vpop.f32.mrb[0].mxu0
        %2170 = vmatprep.mubr.f32.mxu0 %v638
        %2171 = vmatmul.mubr.f32.gmra.mrb[0].mxu0 %v549
        %v2172 = vpop.f32.mrb[0].mxu0
        %v2173 = vadd.f32 0.0, %v2172
        %v2174 = vpop.f32.mrb[0].mxu0
        %2175 = vmatprep.mubr.f32.mxu0 %v640
        %2176 = vmatmul.mubr.f32.gmra.mrb[0].mxu0 %v554
        %v2177 = vpop.f32.mrb[0].mxu0
        %v2178 = vadd.f32 0.0, %v2177
        %v2179 = vpop.f32.mrb[0].mxu0
        %2180 = vmatprep.mubr.f32.mxu0 %v642
        %2181 = vmatmul.mubr.f32.gmra.mrb[0].mxu0 %v559
        %v2182 = vpop.f32.mrb[0].mxu0
        %v2183 = vadd.f32 0.0, %v2182
        %v2184 = vpop.f32.mrb[0].mxu0
        %2185 = vmatprep.mubr.f32.mxu0 %v644
        %2186 = vmatmul.mubr.f32.gmra.mrb[0].mxu0 %v564
        %v2187 = vpop.f32.mrb[0].mxu0
        %v2188 = vadd.f32 0.0, %v2187
        %v2189 = vpop.f32.mrb[0].mxu0
        %2190 = vmatprep.mubr.f32.mxu0 %v646
        %2191 = vmatmul.mubr.f32.gmra.mrb[0].mxu0 %v569
        %v2192 = vpop.f32.mrb[0].mxu0
        %v2193 = vadd.f32 0.0, %v2192
        %v2194 = vpop.f32.mrb[0].mxu0
        %2195 = vmatprep.mubr.f32.mxu0 %v648
        %2196 = vmatmul.mubr.f32.gmra.mrb[0].mxu0 %v574
        %v2197 = vpop.f32.mrb[0].mxu0
        %v2198 = vadd.f32 0.0, %v2197
        %v2199 = vpop.f32.mrb[0].mxu0
        %2200 = vmatprep.mubr.f32.mxu0 %v650
        %2201 = vmatmul.mubr.f32.gmra.mrb[0].mxu0 %v579
        %v2202 = vpop.f32.mrb[0].mxu0
        %v2203 = vadd.f32 0.0, %v2202
        %v2204 = vpop.f32.mrb[0].mxu0
        %2205 = vmatprep.mubr.f32.mxu0 %v652
        %2206 = vmatmul.mubr.f32.gmra.mrb[0].mxu0 %v584
        %v2207 = vpop.f32.mrb[0].mxu0
        %v2208 = vadd.f32 0.0, %v2207
        %v2209 = vpop.f32.mrb[0].mxu0
        %2210 = vmatprep.mubr.f32.mxu0 %v1503
        %2211 = vmatmul.mubr.f32.gmra.mrb[0].mxu0 %v1475
        %v2212 = vpop.f32.mrb[0].mxu0
        %v2213 = vadd.f32 0.0, %v2212
        %v2214 = vpop.f32.mrb[0].mxu0
        %2215 = vmatprep.mubr.f32.mxu0 %v1505
        %2216 = vmatmul.mubr.f32.gmra.mrb[0].mxu0 %v1480
        %v2217 = vpop.f32.mrb[0].mxu0
        %v2218 = vadd.f32 0.0, %v2217
        %v2219 = vpop.f32.mrb[0].mxu0
        %2220 = vmatprep.mubr.f32.mxu0 %v2082
        %2221 = vmatmul.mubr.f32.gmra.mrb[0].mxu0 %v2054
        %v2222 = vpop.f32.mrb[0].mxu0
        %v2223 = vadd.f32 0.0, %v2222
        %v2224 = vpop.f32.mrb[0].mxu0
        %2225 = vmatprep.mubr.f32.mxu0 %v2084
        %2226 = vmatmul.mubr.f32.gmra.mrb[0].mxu0 %v2059
        %v2227 = vpop.f32.mrb[0].mxu0
        %v2228 = vadd.f32 0.0, %v2227
        %v2229 = vpop.f32.mrb[0].mxu0
        %2230 = vdwg.mxu0
        %v2231 = vadd.f32 %v2032, %v2153
        %v2232 = vadd.f32 %v2033, %v2158
        %v2233 = vadd.f32 %v2034, %v2163
        %v2234 = vadd.f32 %v2035, %v2168
        %v2235 = vadd.f32 %v2036, %v2173
        %v2236 = vadd.f32 %v2037, %v2178
        %v2237 = vadd.f32 %v2038, %v2183
        %v2238 = vadd.f32 %v2039, %v2188
        %v2239 = vadd.f32 %v2040, %v2193
        %v2240 = vadd.f32 %v2041, %v2198
        %v2241 = vadd.f32 %v2042, %v2203
        %v2242 = vadd.f32 %v2043, %v2208
        %v2243 = vadd.f32 %v2044, %v2213
        %v2244 = vadd.f32 %v2045, %v2218
        %v2245 = vadd.f32 %v2046, %v2223
        %v2246 = vadd.f32 %v2047, %v2228
        %v2247 = vrot.slane %v387, 2
        %v2248 = vrot.slane %v389, 2
        %v2249 = vsel %vm976, %v2247, %v2248
        %v2250 = vrot.slane %v388, 2
        %v2251 = vrot.slane %v390, 2
        %v2252 = vsel %vm976, %v2250, %v2251
        %v2253 = vrot.slane %v391, 2
        %v2254 = vsel %vm976, %v2248, %v2253
        %v2255 = vrot.slane %v392, 2
        %v2256 = vsel %vm976, %v2251, %v2255
        %s2259 = scalar_lea.vmem [#allocation7], 1088
        %v2260 = vld [vmem:[%s2259] sm:$0xff]
        %v2261 = vld [vmem:[%s2259 + $0x8] sm:$0xff]
        %v2262 = vld [vmem:[%s2259 + $0x10] sm:$0xff]
        %v2263 = vld [vmem:[%s2259 + $0x18] sm:$0xff]
        %v2264 = vld [vmem:[%s2259 + $0x20] sm:$0xff]
        %v2265 = vld [vmem:[%s2259 + $0x28] sm:$0xff]
        %v2266 = vld [vmem:[%s2259 + $0x30] sm:$0xff]
        %v2267 = vld [vmem:[%s2259 + $0x38] sm:$0xff]
        %v2268 = vld [vmem:[%s2259 + $0x40] sm:$0xff]
        %v2269 = vld [vmem:[%s2259 + $0x48] sm:$0xff]
        %v2270 = vld [vmem:[%s2259 + $0x50] sm:$0xff]
        %v2271 = vld [vmem:[%s2259 + $0x58] sm:$0xff]
        %v2272 = vld [vmem:[%s2259 + $0x60] sm:$0xff]
        %v2273 = vld [vmem:[%s2259 + $0x68] sm:$0xff]
        %v2274 = vld [vmem:[%s2259 + $0x70] sm:$0xff]
        %v2275 = vld [vmem:[%s2259 + $0x78] sm:$0xff]
        %v2276 = vld [vmem:[%s2259 + $0x80] sm:$0xff]
        %v2277 = vsel %vm621, %v2252, 0
        %v2279 = vsel %vm621, %v2256, 0
        %2281 = vmatprep.subr.mxu0 0.0
        %2282 = vmatpush1.msra.mxu0 %v2260
        %2283 = vmatprep.subr.mxu0 0.0
        %2284 = vmatpush1.msra.mxu0 %v2261
        %2285 = vmatprep.subr.mxu0 0.0
        %2286 = vmatpush1.msra.mxu0 %v2262
        %2287 = vmatprep.subr.mxu0 0.0
        %2288 = vmatpush1.msra.mxu0 %v2263
        %2289 = vmatprep.subr.mxu0 0.0
        %2290 = vmatpush1.msra.mxu0 %v2264
        %2291 = vmatprep.subr.mxu0 0.0
        %2292 = vmatpush1.msra.mxu0 %v2265
        %2293 = vmatprep.subr.mxu0 0.0
        %2294 = vmatpush1.msra.mxu0 %v2266
        %2295 = vmatprep.subr.mxu0 0.0
        %2296 = vmatpush1.msra.mxu0 %v2267
        %2297 = vmatprep.subr.mxu0 0.0
        %2298 = vmatpush1.msra.mxu0 %v2268
        %2299 = vmatprep.subr.mxu0 0.0
        %2300 = vmatpush1.msra.mxu0 %v2269
        %2301 = vmatprep.subr.mxu0 0.0
        %2302 = vmatpush1.msra.mxu0 %v2270
        %2303 = vmatprep.subr.mxu0 0.0
        %2304 = vmatpush1.msra.mxu0 %v2271
        %2305 = vmatprep.subr.mxu0 0.0
        %2306 = vmatpush1.msra.mxu0 %v2272
        %2307 = vmatprep.subr.mxu0 0.0
        %2308 = vmatpush1.msra.mxu0 %v2273
        %2309 = vmatprep.subr.mxu0 0.0
        %2310 = vmatpush1.msra.mxu0 %v2274
        %2311 = vmatprep.subr.mxu0 0.0
        %2312 = vmatpush1.msra.mxu0 %v2275
        %2313 = vmatprep.subr.mxu0 0.0
        %2314 = vmatpush1.msra.mxu0 %v2276
        %2315 = vmatprep.subr.mxu0 0.0
        %2316 = vmatpush1.msra.mxu0 0.0
        %2317 = vmatprep.subr.mxu0 0.0
        %2318 = vmatpush1.msra.mxu0 0.0
        %2319 = vmatprep.subr.mxu0 0.0
        %2320 = vmatpush1.msra.mxu0 0.0
        %2321 = vmatprep.subr.mxu0 0.0
        %2322 = vmatpush1.msra.mxu0 0.0
        %2323 = vmatprep.subr.mxu0 0.0
        %2324 = vmatpush1.msra.mxu0 0.0
        %2325 = vmatprep.subr.mxu0 0.0
        %2326 = vmatpush1.msra.mxu0 0.0
        %2327 = vmatprep.subr.mxu0 0.0
        %2328 = vmatpush1.msra.mxu0 0.0
        %2329 = vmatprep.subr.mxu0 0.0
        %2330 = vmatpush1.msra.mxu0 0.0
        %2331 = vmatprep.subr.mxu0 0.0
        %2332 = vmatpush1.msra.mxu0 0.0
        %2333 = vmatprep.subr.mxu0 0.0
        %2334 = vmatpush1.msra.mxu0 0.0
        %2335 = vmatprep.subr.mxu0 0.0
        %2336 = vmatpush1.msra.mxu0 0.0
        %2337 = vmatprep.subr.mxu0 0.0
        %2338 = vmatpush1.msra.mxu0 0.0
        %2339 = vmatprep.subr.mxu0 0.0
        %2340 = vmatpush1.msra.mxu0 0.0
        %2341 = vmatprep.subr.mxu0 0.0
        %2342 = vmatpush1.msra.mxu0 0.0
        %2343 = vmatprep.subr.mxu0 0.0
        %2344 = vmatpush1.msra.mxu0 0.0
        %2345 = vmatprep.mubr.f32.mxu0 %v1099
        %2346 = vmatmul.mubr.f32.gmra.mrb[0].mxu0 %v999
        %v2347 = vpop.f32.mrb[0].mxu0
        %v2348 = vadd.f32 0.0, %v2347
        %v2349 = vpop.f32.mrb[0].mxu0
        %2350 = vmatprep.mubr.f32.mxu0 %v1101
        %2351 = vmatmul.mubr.f32.gmra.mrb[0].mxu0 %v1004
        %v2352 = vpop.f32.mrb[0].mxu0
        %v2353 = vadd.f32 0.0, %v2352
        %v2354 = vpop.f32.mrb[0].mxu0
        %2355 = vmatprep.mubr.f32.mxu0 %v1103
        %2356 = vmatmul.mubr.f32.gmra.mrb[0].mxu0 %v1009
        %v2357 = vpop.f32.mrb[0].mxu0
        %v2358 = vadd.f32 0.0, %v2357
        %v2359 = vpop.f32.mrb[0].mxu0
        %2360 = vmatprep.mubr.f32.mxu0 %v1105
        %2361 = vmatmul.mubr.f32.gmra.mrb[0].mxu0 %v1014
        %v2362 = vpop.f32.mrb[0].mxu0
        %v2363 = vadd.f32 0.0, %v2362
        %v2364 = vpop.f32.mrb[0].mxu0
        %2365 = vmatprep.mubr.f32.mxu0 %v1107
        %2366 = vmatmul.mubr.f32.gmra.mrb[0].mxu0 %v1019
        %v2367 = vpop.f32.mrb[0].mxu0
        %v2368 = vadd.f32 0.0, %v2367
        %v2369 = vpop.f32.mrb[0].mxu0
        %2370 = vmatprep.mubr.f32.mxu0 %v1109
        %2371 = vmatmul.mubr.f32.gmra.mrb[0].mxu0 %v1024
        %v2372 = vpop.f32.mrb[0].mxu0
        %v2373 = vadd.f32 0.0, %v2372
        %v2374 = vpop.f32.mrb[0].mxu0
        %2375 = vmatprep.mubr.f32.mxu0 %v1111
        %2376 = vmatmul.mubr.f32.gmra.mrb[0].mxu0 %v1029
        %v2377 = vpop.f32.mrb[0].mxu0
        %v2378 = vadd.f32 0.0, %v2377
        %v2379 = vpop.f32.mrb[0].mxu0
        %2380 = vmatprep.mubr.f32.mxu0 %v1113
        %2381 = vmatmul.mubr.f32.gmra.mrb[0].mxu0 %v1034
        %v2382 = vpop.f32.mrb[0].mxu0
        %v2383 = vadd.f32 0.0, %v2382
        %v2384 = vpop.f32.mrb[0].mxu0
        %2385 = vmatprep.mubr.f32.mxu0 %v1115
        %2386 = vmatmul.mubr.f32.gmra.mrb[0].mxu0 %v1039
        %v2387 = vpop.f32.mrb[0].mxu0
        %v2388 = vadd.f32 0.0, %v2387
        %v2389 = vpop.f32.mrb[0].mxu0
        %2390 = vmatprep.mubr.f32.mxu0 %v1117
        %2391 = vmatmul.mubr.f32.gmra.mrb[0].mxu0 %v1044
        %v2392 = vpop.f32.mrb[0].mxu0
        %v2393 = vadd.f32 0.0, %v2392
        %v2394 = vpop.f32.mrb[0].mxu0
        %2395 = vmatprep.mubr.f32.mxu0 %v1119
        %2396 = vmatmul.mubr.f32.gmra.mrb[0].mxu0 %v1049
        %v2397 = vpop.f32.mrb[0].mxu0
        %v2398 = vadd.f32 0.0, %v2397
        %v2399 = vpop.f32.mrb[0].mxu0
        %2400 = vmatprep.mubr.f32.mxu0 %v1121
        %2401 = vmatmul.mubr.f32.gmra.mrb[0].mxu0 %v1054
        %v2402 = vpop.f32.mrb[0].mxu0
        %v2403 = vadd.f32 0.0, %v2402
        %v2404 = vpop.f32.mrb[0].mxu0
        %2405 = vmatprep.mubr.f32.mxu0 %v1698
        %2406 = vmatmul.mubr.f32.gmra.mrb[0].mxu0 %v1670
        %v2407 = vpop.f32.mrb[0].mxu0
        %v2408 = vadd.f32 0.0, %v2407
        %v2409 = vpop.f32.mrb[0].mxu0
        %2410 = vmatprep.mubr.f32.mxu0 %v1700
        %2411 = vmatmul.mubr.f32.gmra.mrb[0].mxu0 %v1675
        %v2412 = vpop.f32.mrb[0].mxu0
        %v2413 = vadd.f32 0.0, %v2412
        %v2414 = vpop.f32.mrb[0].mxu0
        %2415 = vmatprep.mubr.f32.mxu0 %v2277
        %2416 = vmatmul.mubr.f32.gmra.mrb[0].mxu0 %v2249
        %v2417 = vpop.f32.mrb[0].mxu0
        %v2418 = vadd.f32 0.0, %v2417
        %v2419 = vpop.f32.mrb[0].mxu0
        %2420 = vmatprep.mubr.f32.mxu0 %v2279
        %2421 = vmatmul.mubr.f32.gmra.mrb[0].mxu0 %v2254
        %v2422 = vpop.f32.mrb[0].mxu0
        %v2423 = vadd.f32 0.0, %v2422
        %v2424 = vpop.f32.mrb[0].mxu0
        %2425 = vdwg.mxu0
        %v2426 = vadd.f32 %v2231, %v2348
        %v2427 = vadd.f32 %v2232, %v2353
        %v2428 = vadd.f32 %v2233, %v2358
        %v2429 = vadd.f32 %v2234, %v2363
        %v2430 = vadd.f32 %v2235, %v2368
        %v2431 = vadd.f32 %v2236, %v2373
        %v2432 = vadd.f32 %v2237, %v2378
        %v2433 = vadd.f32 %v2238, %v2383
        %v2434 = vadd.f32 %v2239, %v2388
        %v2435 = vadd.f32 %v2240, %v2393
        %v2436 = vadd.f32 %v2241, %v2398
        %v2437 = vadd.f32 %v2242, %v2403
        %v2438 = vadd.f32 %v2243, %v2408
        %v2439 = vadd.f32 %v2244, %v2413
        %v2440 = vadd.f32 %v2245, %v2418
        %v2441 = vadd.f32 %v2246, %v2423
        %v2442 = vadd.f32 %v2426, %v2427
        %v2443 = vadd.f32 %v2442, %v2428
        %v2444 = vadd.f32 %v2443, %v2429
        %v2445 = vadd.f32 %v2444, %v2430
        %v2446 = vadd.f32 %v2445, %v2431
        %v2447 = vadd.f32 %v2446, %v2432
        %v2448 = vadd.f32 %v2447, %v2433
        %v2449 = vadd.f32 %v2448, %v2434
        %v2450 = vadd.f32 %v2449, %v2435
        %v2451 = vadd.f32 %v2450, %v2436
        %v2452 = vadd.f32 %v2451, %v2437
        %v2453 = vadd.f32 %v2452, %v2438
        %v2454 = vadd.f32 %v2453, %v2439
        %v2455 = vadd.f32 %v2454, %v2440
        %v2456 = vadd.f32 %v2455, %v2441
        %v2457 = vrot.slane %v2456, 4
        %v2458 = vadd.f32 %v2456, %v2457
        %v2459 = vrot.slane %v2458, 2
        %v2460 = vadd.f32 %v2458, %v2459
        %v2461 = vrot.slane %v2460, 1
        %v2462 = vadd.f32 %v2460, %v2461
        %2463 = vst [vmem:[%s372] sm:$0x1] %v2462
        %v2464 = vmul.f32 %v2426, %v2426
        %v2465 = vmul.f32 %v2427, %v2427
        %v2466 = vmul.f32 %v2428, %v2428
        %v2467 = vmul.f32 %v2429, %v2429
        %v2468 = vmul.f32 %v2430, %v2430
        %v2469 = vmul.f32 %v2431, %v2431
        %v2470 = vmul.f32 %v2432, %v2432
        %v2471 = vmul.f32 %v2433, %v2433
        %v2472 = vmul.f32 %v2434, %v2434
        %v2473 = vmul.f32 %v2435, %v2435
        %v2474 = vmul.f32 %v2436, %v2436
        %v2475 = vmul.f32 %v2437, %v2437
        %v2476 = vmul.f32 %v2438, %v2438
        %v2477 = vmul.f32 %v2439, %v2439
        %v2478 = vmul.f32 %v2440, %v2440
        %v2479 = vmul.f32 %v2441, %v2441
        %v2480 = vadd.f32 %v2464, %v2465
        %v2481 = vadd.f32 %v2480, %v2466
        %v2482 = vadd.f32 %v2481, %v2467
        %v2483 = vadd.f32 %v2482, %v2468
        %v2484 = vadd.f32 %v2483, %v2469
        %v2485 = vadd.f32 %v2484, %v2470
        %v2486 = vadd.f32 %v2485, %v2471
        %v2487 = vadd.f32 %v2486, %v2472
        %v2488 = vadd.f32 %v2487, %v2473
        %v2489 = vadd.f32 %v2488, %v2474
        %v2490 = vadd.f32 %v2489, %v2475
        %v2491 = vadd.f32 %v2490, %v2476
        %v2492 = vadd.f32 %v2491, %v2477
        %v2493 = vadd.f32 %v2492, %v2478
        %v2494 = vadd.f32 %v2493, %v2479
        %v2495 = vrot.slane %v2494, 4
        %v2496 = vadd.f32 %v2494, %v2495
        %v2497 = vrot.slane %v2496, 2
        %v2498 = vadd.f32 %v2496, %v2497
        %v2499 = vrot.slane %v2498, 1
        %v2500 = vadd.f32 %v2498, %v2499
        %2501 = vst [vmem:[%s378] sm:$0x1] %v2500
        %vm2518 = vcmask 1040384
        %v2519 = vrot.slane %v2426, 7
        %v2520 = vrot.slane %v2427, 7
        %v2521 = vsel %vm2518, %v2519, %v2520
        %v2522 = vrot.slane %v2428, 7
        %v2523 = vrot.slane %v2429, 7
        %v2524 = vsel %vm2518, %v2522, %v2523
        %v2525 = vrot.slane %v2430, 7
        %v2526 = vrot.slane %v2431, 7
        %v2527 = vsel %vm2518, %v2525, %v2526
        %v2528 = vrot.slane %v2432, 7
        %v2529 = vrot.slane %v2433, 7
        %v2530 = vsel %vm2518, %v2528, %v2529
        %v2531 = vrot.slane %v2434, 7
        %v2532 = vrot.slane %v2435, 7
        %v2533 = vsel %vm2518, %v2531, %v2532
        %v2534 = vrot.slane %v2436, 7
        %v2535 = vrot.slane %v2437, 7
        %v2536 = vsel %vm2518, %v2534, %v2535
        %v2537 = vrot.slane %v2438, 7
        %v2538 = vrot.slane %v2439, 7
        %v2539 = vsel %vm2518, %v2537, %v2538
        %v2540 = vrot.slane %v2440, 7
        %v2541 = vrot.slane %v2441, 7
        %v2542 = vsel %vm2518, %v2540, %v2541
        %v2567 = vsel %vm2518, 0.0, %v2519
        %v2568 = vsel %vm2518, 0.0, %v2522
        %v2569 = vsel %vm2518, 0.0, %v2525
        %v2570 = vsel %vm2518, 0.0, %v2528
        %v2571 = vsel %vm2518, 0.0, %v2531
        %v2572 = vsel %vm2518, 0.0, %v2534
        %v2573 = vsel %vm2518, 0.0, %v2537
        %v2574 = vsel %vm2518, 0.0, %v2540
        %v2575 = vsel %vm2518, %v2520, 0.0
        %v2576 = vsel %vm2518, %v2523, 0.0
        %v2577 = vsel %vm2518, %v2526, 0.0
        %v2578 = vsel %vm2518, %v2529, 0.0
        %v2579 = vsel %vm2518, %v2532, 0.0
        %v2580 = vsel %vm2518, %v2535, 0.0
        %v2581 = vsel %vm2518, %v2538, 0.0
        %v2582 = vsel %vm2518, %v2541, 0.0
        %2583 = vst [vmem:[%s359] sm:$0xff] %v2567
        %2584 = vst [vmem:[%s359 + $0x8] sm:$0xff] %v2521
        %2585 = vst [vmem:[%s359 + $0x10] sm:$0x3] %v2575
        %2586 = vst [vmem:[%s359 + $0x18] sm:$0xff] %v2568
        %2587 = vst [vmem:[%s359 + $0x20] sm:$0xff] %v2524
        %2588 = vst [vmem:[%s359 + $0x28] sm:$0x3] %v2576
        %2589 = vst [vmem:[%s359 + $0x30] sm:$0xff] %v2569
        %2590 = vst [vmem:[%s359 + $0x38] sm:$0xff] %v2527
        %2591 = vst [vmem:[%s359 + $0x40] sm:$0x3] %v2577
        %2592 = vst [vmem:[%s359 + $0x48] sm:$0xff] %v2570
        %2593 = vst [vmem:[%s359 + $0x50] sm:$0xff] %v2530
        %2594 = vst [vmem:[%s359 + $0x58] sm:$0x3] %v2578
        %2595 = vst [vmem:[%s359 + $0x60] sm:$0xff] %v2571
        %2596 = vst [vmem:[%s359 + $0x68] sm:$0xff] %v2533
        %2597 = vst [vmem:[%s359 + $0x70] sm:$0x3] %v2579
        %2598 = vst [vmem:[%s359 + $0x78] sm:$0xff] %v2572
        %2599 = vst [vmem:[%s359 + $0x80] sm:$0xff] %v2536
        %2600 = vst [vmem:[%s359 + $0x88] sm:$0x3] %v2580
        %2601 = vst [vmem:[%s359 + $0x90] sm:$0xff] %v2573
        %2602 = vst [vmem:[%s359 + $0x98] sm:$0xff] %v2539
        %2603 = vst [vmem:[%s359 + $0xa0] sm:$0x3] %v2581
        %2604 = vst [vmem:[%s359 + $0xa8] sm:$0xff] %v2574
        %2605 = vst [vmem:[%s359 + $0xb0] sm:$0xff] %v2542
        %2606 = vst [vmem:[%s359 + $0xb8] sm:$0x3] %v2582
        %2607 = vst [vmem:[%s366] sm:$0xff] %v2567
        %2608 = vst [vmem:[%s366 + $0x8] sm:$0xff] %v2521
        %2609 = vst [vmem:[%s366 + $0x10] sm:$0x3] %v2575
        %2610 = vst [vmem:[%s366 + $0x18] sm:$0xff] %v2574
        %2611 = vst [vmem:[%s366 + $0x20] sm:$0xff] %v2542
        %2612 = vst [vmem:[%s366 + $0x28] sm:$0x3] %v2582
        %s2613 = sand.u32 %s132, 1
        %s2614 = scalar_lea.sflag [#allocation4], %s2613
        %s2615 = sand.u32 %s132, 1
        %s2616 = smul.addr %s2615, 192
        %s2617 = scalar_lea.vmem [#allocation8], %s2616
        %s2618 = sand.u32 %s33, 1
        %s2619 = scalar_lea.sflag [#allocation10], %s2618
        %s2620 = sand.u32 %s160, 1
        %s2621 = smul.addr %s2620, 48
        %s2622 = scalar_lea.vmem [#allocation9], %s2621
        %s2623 = sand.u32 %s33, 1
        %s2624 = scalar_lea.sflag [#allocation10], %s2623
        %s2625 = sand.u32 %s188, 1
        %s2626 = scalar_lea.vmem [#allocation11], %s2625
        %s2627 = sand.u32 %s216, 1
        %s2628 = scalar_lea.sflag [#allocation13], %s2627
        %s2629 = sand.u32 %s216, 1
        %s2630 = scalar_lea.vmem [#allocation12], %s2629
        // Predicated region
        $region45: #{unetr_up_block_forward.2} parent=31 // pred_check
          %p2631 = pneg %p142
        $region46: #{unetr_up_block_forward.2} parent=31 // pred_check_branch
          %2633 = sbr.rel (%p2631) target = $region48
        $region47: #{unetr_up_block_forward.2} parent=31 // pred_region
          %s2634 = smul.u32 8, %s38
          %s2636 = ssub.s32 3072, 3072
          %2637 = vsyncadd %s2614, %s2636
          %s2638 = smul.addr %s2634, 3
          %s2639 = smul.addr %s37, 48
          %s2640 = sadd.s32 %s2638, %s2639
          %s2641 = smul.addr %s2640, 128
          %s2642 = scalar_lea.hbm %s3, %s2641
          %s2643 = sshll.u32 %s2617, 4
          %s2644 = int_to_ptr.vmem [resolvable:$true] %s2643
          %2649 = dma.vmem_to_hbm [thread:$0]  %s2644, 3072, %s2642, %s2614, 128, 128, 8
        $region48: #{unetr_up_block_forward.2} parent=31 // pred_fallthru
          _
        // Predicated region
        $region49: #{unetr_up_block_forward.2} parent=31 // pred_check
          %p2650 = pneg %p170
        $region50: #{unetr_up_block_forward.2} parent=31 // pred_check_branch
          %2652 = sbr.rel (%p2650) target = $region52
        $region51: #{unetr_up_block_forward.2} parent=31 // pred_region
          %s2654 = ssub.s32 768, 768
          %2655 = vsyncadd %s2619, %s2654
          %s2656 = smul.addr %s38, 6
          %s2657 = smul.addr %s37, 12
          %s2658 = sadd.s32 %s2656, %s2657
          %s2659 = smul.addr %s2658, 128
          %s2660 = scalar_lea.hbm %s4, %s2659
          %s2661 = sshll.u32 %s2622, 4
          %s2662 = int_to_ptr.vmem [resolvable:$true] %s2661
          %2667 = dma.vmem_to_hbm [thread:$0]  %s2662, 768, %s2660, %s2619, 128, 128, 8
        $region52: #{unetr_up_block_forward.2} parent=31 // pred_fallthru
          _
        // Predicated region
        $region53: #{unetr_up_block_forward.2} parent=31 // pred_check
          %p2668 = pneg %p198
        $region54: #{unetr_up_block_forward.2} parent=31 // pred_check_branch
          %2670 = sbr.rel (%p2668) target = $region56
        $region55: #{unetr_up_block_forward.2} parent=31 // pred_region
          %s2672 = ssub.s32 16, 16
          %2673 = vsyncadd %s2624, %s2672
          %s2674 = smul.addr %s37, 2
          %s2675 = sadd.s32 %s38, %s2674
          %s2676 = smul.addr %s2675, 16
          %s2677 = scalar_lea.hbm %s5, %s2676
          %s2679 = sshll.u32 %s2626, 4
          %s2680 = int_to_ptr.vmem [resolvable:$true] %s2679
          %2682 = dma.vmem_to_hbm [thread:$0]  %s2680, 16, %s2677, %s2624
        $region56: #{unetr_up_block_forward.2} parent=31 // pred_fallthru
          _
        // Predicated region
        $region57: #{unetr_up_block_forward.2} parent=31 // pred_check
          %p2683 = pneg %p226
        $region58: #{unetr_up_block_forward.2} parent=31 // pred_check_branch
          %2685 = sbr.rel (%p2683) target = $region60
        $region59: #{unetr_up_block_forward.2} parent=31 // pred_region
          %s2687 = ssub.s32 16, 16
          %2688 = vsyncadd %s2628, %s2687
          %s2689 = smul.addr %s37, 2
          %s2690 = sadd.s32 %s38, %s2689
          %s2691 = smul.addr %s2690, 16
          %s2692 = scalar_lea.hbm %s6, %s2691
          %s2694 = sshll.u32 %s2630, 4
          %s2695 = int_to_ptr.vmem [resolvable:$true] %s2694
          %2697 = dma.vmem_to_hbm [thread:$0]  %s2695, 16, %s2692, %s2628
        $region60: #{unetr_up_block_forward.2} parent=31 // pred_fallthru
          _
      $region32: #{unetr_up_block_forward.2} parent=5 // pred_fallthru
        _
      %p2698 = scmp.le.s32.totalorder 2, %s28
      // Predicated region
      $region61: #{unetr_up_block_forward.2} parent=5 // pred_check
        %p2699 = pneg %p2698
      $region62: #{unetr_up_block_forward.2} parent=5 // pred_check_branch
        %2701 = sbr.rel (%p2699) target = $region64
      $region63: #{unetr_up_block_forward.2} parent=5 // pred_region
        %s2702 = ssub.s32 %s28, 2
        // Predicated region
        $region65: #{unetr_up_block_forward.2} parent=63 // pred_check
          %p2703 = pneg %p148
        $region66: #{unetr_up_block_forward.2} parent=63 // pred_check_branch
          %2705 = sbr.rel (%p2703) target = $region68
        $region67: #{unetr_up_block_forward.2} parent=63 // pred_region
          %s2706 = sand.u32 %s133, 1
          %s2707 = scalar_lea.sflag [#allocation4], %s2706
          %s2708 = sand.u32 %s133, 1
          %s2709 = smul.addr %s2708, 192
          %s2710 = scalar_lea.vmem [#allocation8], %s2709
          %2711 = dma.done %s2707, 3072
        $region68: #{unetr_up_block_forward.2} parent=63 // pred_fallthru
          _
        // Predicated region
        $region69: #{unetr_up_block_forward.2} parent=63 // pred_check
          %p2712 = pneg %p176
        $region70: #{unetr_up_block_forward.2} parent=63 // pred_check_branch
          %2714 = sbr.rel (%p2712) target = $region72
        $region71: #{unetr_up_block_forward.2} parent=63 // pred_region
          %s2715 = sand.u32 %s34, 1
          %s2716 = scalar_lea.sflag [#allocation10], %s2715
          %s2717 = sand.u32 %s161, 1
          %s2718 = smul.addr %s2717, 48
          %s2719 = scalar_lea.vmem [#allocation9], %s2718
          %2720 = dma.done %s2716, 768
        $region72: #{unetr_up_block_forward.2} parent=63 // pred_fallthru
          _
        // Predicated region
        $region73: #{unetr_up_block_forward.2} parent=63 // pred_check
          %p2721 = pneg %p204
        $region74: #{unetr_up_block_forward.2} parent=63 // pred_check_branch
          %2723 = sbr.rel (%p2721) target = $region76
        $region75: #{unetr_up_block_forward.2} parent=63 // pred_region
          %s2724 = sand.u32 %s34, 1
          %s2725 = scalar_lea.sflag [#allocation10], %s2724
          %s2726 = sand.u32 %s189, 1
          %s2727 = scalar_lea.vmem [#allocation11], %s2726
          %2728 = dma.done %s2725, 16
        $region76: #{unetr_up_block_forward.2} parent=63 // pred_fallthru
          _
        // Predicated region
        $region77: #{unetr_up_block_forward.2} parent=63 // pred_check
          %p2729 = pneg %p232
        $region78: #{unetr_up_block_forward.2} parent=63 // pred_check_branch
          %2731 = sbr.rel (%p2729) target = $region80
        $region79: #{unetr_up_block_forward.2} parent=63 // pred_region
          %s2732 = sand.u32 %s217, 1
          %s2733 = scalar_lea.sflag [#allocation13], %s2732
          %s2734 = sand.u32 %s217, 1
          %s2735 = scalar_lea.vmem [#allocation12], %s2734
          %2736 = dma.done %s2733, 16
        $region80: #{unetr_up_block_forward.2} parent=63 // pred_fallthru
          _
      $region64: #{unetr_up_block_forward.2} parent=5 // pred_fallthru
        _
    $region6: #{unetr_up_block_forward.2} parent=1 // loop_footer
      %s32 = sadd.s32 1, %s28
    $region7: #{unetr_up_block_forward.2} parent=1 // loop_footer_branch
      %27 = sbr.rel target = $region3
    $region8: #{unetr_up_block_forward.2} parent=1 // loop_exit
      _
    %2737 = vsyncpa [#allocation3], 1
    %s2738 = scalar_lea.sflag [#allocation3], 1
    %2739 = vsyncpa %s2738, 1
    %2740 = vsyncpa [#allocation6], 1
    %s2741 = scalar_lea.sflag [#allocation6], 1
    %2742 = vsyncpa %s2741, 1
    %2743 = vsyncpa [#allocation4], 1
    %s2744 = scalar_lea.sflag [#allocation4], 1
    %2745 = vsyncpa %s2744, 1
    %2746 = vsyncpa [#allocation10], 1
    %s2747 = scalar_lea.sflag [#allocation10], 1
    %2748 = vsyncpa %s2747, 1
    %2749 = vsyncpa [#allocation13], 1
    %s2750 = scalar_lea.sflag [#allocation13], 1
    %2751 = vsyncpa %s2750, 1

// kernel: mul.12
$region0: #{mul.12}
  %s0 = inlined_call_operand.vmem [shape: f32[2,4,32], index: 0, kind: input, shape index: {}]
  %s1 = inlined_call_operand.vmem [shape: f32[2,128], index: 1, kind: output, shape index: {}]
  $region1: #{mul.12} parent=0
    #allocation0 [shape = 'u8[4096]{0}', space=vmem, size = 0x1000, scoped, tag = 'scoped mem for output reshape']
    #allocation1 [shape = 'u8[8192]{0}', space=vmem, size = 0x2000, scoped, tag = 'scoped mem for input reshape']
    %s3 = sshllo.u32 0, 4
    %s4 = scalar_lea.vmem %s0, 4
    %v5 = vld [vmem:[%s4] sm:%s3]
    %s6 = scalar_lea.vmem [#allocation1], 8
    %7 = vst [vmem:[%s6] sm:%s3] %v5
    %v8 = vld [vmem:[%s0] sm:%s3]
    %9 = vst [vmem:[#allocation1] sm:%s3] %v8
    %s10 = smov 3
    %v11 = vld [vmem:[#allocation1] ss:$8 sm:%s10]
    %vm12 = vcmask 261120
    %13 = vst.msk [vmem:[#allocation0] sm:$0x3] %vm12, %v11
    %s14 = scalar_lea.vmem [#allocation1], 3
    %s15 = smov 3
    %v16 = vld [vmem:[%s14] ss:$8 sm:%s15]
    %17 = vrot.lane.b32.xlu0 %v16, 96
    %v18 = vpop.permute.xlu0 %17
    %vm19 = vcmask 1048320
    %20 = vst.msk [vmem:[#allocation0] sm:$0x3] %vm19, %v18
    %s21 = scalar_lea.vmem [#allocation1], 2
    %s22 = smov 3
    %v23 = vld [vmem:[%s21] ss:$8 sm:%s22]
    %24 = vrot.lane.b32.xlu0 %v23, 64
    %v25 = vpop.permute.xlu0 %24
    %vm26 = vcmask 785920
    %27 = vst.msk [vmem:[#allocation0] sm:$0x3] %vm26, %v25
    %s28 = scalar_lea.vmem [#allocation1], 1
    %s29 = smov 3
    %v30 = vld [vmem:[%s28] ss:$8 sm:%s29]
    %31 = vrot.lane.b32.xlu0 %v30, 32
    %v32 = vpop.permute.xlu0 %31
    %vm33 = vcmask 523520
    %34 = vst.msk [vmem:[#allocation0] sm:$0x3] %vm33, %v32
    %s36 = sshllo.u32 0, 2
    %v38 = vld [vmem:[#allocation0] sm:%s36]
    %s39 = sshllo.u32 0, 2
    %40 = vst [vmem:[%s1] sm:%s39] %v38

// kernel: unetr_up_block_forward.3
$region0: #{unetr_up_block_forward.3}
  #allocation0 [shape = 'u32[]', space=smem, size = 0x4, offset = 0x4, fixed_abs, tag = 'smem constant byte address 0x4 - core index']
  #allocation1 [shape = 'u32[144,128]{1,0:T(1,128)}', space=vmem, size = 0x12000, scoped, tag = 'internal scratch']
  %s0 = inlined_call_operand.hbm [shape: f32[2,16,18,128], index: 0, kind: input, shape index: {}]
  %s1 = inlined_call_operand.hbm [shape: f32[2,2,2,18,128], index: 1, kind: input, shape index: {}]
  %s2 = inlined_call_operand.hbm [shape: f32[2,1,128], index: 2, kind: input, shape index: {}]
  %s3 = inlined_call_operand.hbm [shape: f32[2,1,128], index: 3, kind: input, shape index: {}]
  %s4 = inlined_call_operand.hbm [shape: f32[3,3,128,128], index: 4, kind: input, shape index: {}]
  %s5 = inlined_call_operand.hbm [shape: f32[2,16,16,128], index: 5, kind: output, shape index: {0}]
  %s6 = inlined_call_operand.hbm [shape: f32[2,2,1,128], index: 6, kind: output, shape index: {1}]
  %s7 = inlined_call_operand.hbm [shape: f32[2,2,1,128], index: 7, kind: output, shape index: {2}]
  %8 = xla_tuple %s5, %s6, %s7
  %s9 = sld [smem:[#allocation0]]
  $region89: #{unetr_up_block_forward.3} parent=0
    _
  %s11 = ssub.s32 1, %s9
  %s12 = scalar_select 0, %s11, %s9
  $region1: #{unetr_up_block_forward.3} parent=0
    #allocation2 [shape = 'u8[196608]{0}', space=vmem, size = 0x30000, scoped, tag = 'input window, operand 0']
    #allocation3 [shape = 's32[2]{0}', space=sflag, size = 0x8, scoped, tag = 'scoped memory for unetr_up_block_forward.3']
    #allocation4 [shape = 's32[2]{0}', space=sflag, size = 0x8, scoped, tag = 'scoped memory for unetr_up_block_forward.3']
    #allocation5 [shape = 'u8[49152]{0}', space=vmem, size = 0xc000, scoped, tag = 'input window, operand 1']
    #allocation6 [shape = 's32[2]{0}', space=sflag, size = 0x8, scoped, tag = 'scoped memory for unetr_up_block_forward.3']
    #allocation7 [shape = 'u8[1024]{0}', space=vmem, size = 0x400, scoped, tag = 'input window, operand 2']
    #allocation8 [shape = 'u8[1024]{0}', space=vmem, size = 0x400, scoped, tag = 'input window, operand 3']
    #allocation9 [shape = 's32[2]{0}', space=sflag, size = 0x8, scoped, tag = 'scoped memory for unetr_up_block_forward.3']
    #allocation10 [shape = 'u8[589824]{0}', space=vmem, size = 0x90000, scoped, tag = 'input window, operand 4, single buffered']
    #allocation11 [shape = 'u8[131072]{0}', space=vmem, size = 0x20000, scoped, tag = 'output window, operand 0']
    #allocation12 [shape = 'u8[1024]{0}', space=vmem, size = 0x400, scoped, tag = 'output window, operand 1']
    #allocation13 [shape = 's32[2]{0}', space=sflag, size = 0x8, scoped, tag = 'scoped memory for unetr_up_block_forward.3']
    #allocation14 [shape = 'u8[1024]{0}', space=vmem, size = 0x400, scoped, tag = 'output window, operand 2']
    %13 = vsyncpa [#allocation3], 0
    %s14 = scalar_lea.sflag [#allocation3], 1
    %15 = vsyncpa %s14, 0
    %16 = vsyncpa [#allocation6], 0
    %s17 = scalar_lea.sflag [#allocation6], 1
    %18 = vsyncpa %s17, 0
    %19 = vsyncpa [#allocation9], 0
    %s20 = scalar_lea.sflag [#allocation9], 1
    %21 = vsyncpa %s20, 0
    %22 = vsyncpa [#allocation4], 0
    %s23 = scalar_lea.sflag [#allocation4], 1
    %24 = vsyncpa %s23, 0
    %25 = vsyncpa [#allocation13], 0
    %s26 = scalar_lea.sflag [#allocation13], 1
    %27 = vsyncpa %s26, 0
    loop: start=0, step=1, limit=6
    $region2: #{unetr_up_block_forward.3} parent=1 // loop_pre_header
      _
    $region3: #{unetr_up_block_forward.3} parent=1 // loop_header
      %s29 = sphi 0, %s33
      %p30 = scmp.ge.s32.totalorder %s29, 6
      %s36 = sphi 0, %s48
      %s37 = sphi 0, %s44
      %s38 = sphi 0, %s36
      %s39 = sphi 0, %s37
      %s40 = sphi 0, %s38
      %s41 = sphi 0, %s39
      %s53 = sphi 0, %s55
      %s56 = sphi 0, %s53
      %s57 = sphi 0, %s56
      %s73 = sphi 0, %s57
      %s81 = sphi 0, %s83
      %s84 = sphi 0, %s81
      %s85 = sphi 0, %s84
      %s101 = sphi 0, %s85
      %s107 = sphi 0, %s109
      %s110 = sphi 0, %s107
      %s111 = sphi 0, %s110
      %s127 = sphi 0, %s111
      %s133 = sphi 0, %s135
      %s136 = sphi 0, %s133
      %s137 = sphi 0, %s136
      %s153 = sphi 0, %s137
      %s157 = sphi 0, %s157
      %s159 = sphi 0, %s157
      %s160 = sphi 0, %s159
      %s174 = sphi 0, %s160
      %s182 = sphi 0, %s184
      %s185 = sphi 0, %s182
      %s186 = sphi 0, %s185
      %s202 = sphi 0, %s186
      %s210 = sphi 0, %s212
      %s213 = sphi 0, %s210
      %s214 = sphi 0, %s213
      %s230 = sphi 0, %s214
      %s238 = sphi 0, %s240
      %s241 = sphi 0, %s238
      %s242 = sphi 0, %s241
      %s258 = sphi 0, %s242
    $region4: #{unetr_up_block_forward.3} parent=1 // loop_header_branch
      %32 = sbr.rel (%p30) target = $region8
    $region5: #{unetr_up_block_forward.3} parent=1 // loop_body
      %s34 = ssub.s32 %s29, 1
      %s35 = ssub.s32 %s29, 2
      %s42 = sadd.s32 1, %s37
      %p43 = scmp.ge.s32.totalorder %s42, 2
      %s44 = scalar_select %p43, 0, %s42
      %s45 = sadd.s32 1, %s36
      %s46 = scalar_select %p43, %s45, %s36
      %p47 = scmp.ge.s32.totalorder %s46, 2
      %s48 = scalar_select %p47, 0, %s46
      %s49 = ssub.s32 %s36, %s48
      %s50 = ssub.s32 %s37, %s44
      %s51 = sor.u32 %s49, %s50
      %p52 = scmp.eq.s32.totalorder %s51, 0
      %s54 = sadd.s32 %s53, 1
      %s55 = scalar_select %p52, %s53, %s54
      %p58 = pneg %p52
      %p59 = scmp.eq.s32.totalorder %s29, 3
      %p60 = por %p58, %p59
      %p61 = scmp.ne.s32.totalorder %s53, %s56
      %p62 = scmp.eq.s32.totalorder %s29, 0
      %p63 = por %p61, %p62
      %p64 = scmp.ne.s32.totalorder %s53, %s56
      %p65 = scmp.eq.s32.totalorder %s34, 3
      %p66 = por %p64, %p65
      %p67 = scmp.ne.s32.totalorder %s56, %s57
      %p68 = scmp.eq.s32.totalorder %s34, 0
      %p69 = por %p67, %p68
      %p70 = scmp.ne.s32.totalorder %s56, %s57
      %p71 = scmp.eq.s32.totalorder %s35, 3
      %p72 = por %p70, %p71
      %p74 = scmp.ne.s32.totalorder %s57, %s73
      %p75 = scmp.eq.s32.totalorder %s35, 0
      %p76 = por %p74, %p75
      %s77 = ssub.s32 %s36, %s48
      %s78 = ssub.s32 %s37, %s44
      %s79 = sor.u32 %s77, %s78
      %p80 = scmp.eq.s32.totalorder %s79, 0
      %s82 = sadd.s32 %s81, 1
      %s83 = scalar_select %p80, %s81, %s82
      %p86 = pneg %p80
      %p87 = scmp.eq.s32.totalorder %s29, 3
      %p88 = por %p86, %p87
      %p89 = scmp.ne.s32.totalorder %s81, %s84
      %p90 = scmp.eq.s32.totalorder %s29, 0
      %p91 = por %p89, %p90
      %p92 = scmp.ne.s32.totalorder %s81, %s84
      %p93 = scmp.eq.s32.totalorder %s34, 3
      %p94 = por %p92, %p93
      %p95 = scmp.ne.s32.totalorder %s84, %s85
      %p96 = scmp.eq.s32.totalorder %s34, 0
      %p97 = por %p95, %p96
      %p98 = scmp.ne.s32.totalorder %s84, %s85
      %p99 = scmp.eq.s32.totalorder %s35, 3
      %p100 = por %p98, %p99
      %p102 = scmp.ne.s32.totalorder %s85, %s101
      %p103 = scmp.eq.s32.totalorder %s35, 0
      %p104 = por %p102, %p103
      %s105 = ssub.s32 %s36, %s48
      %p106 = scmp.eq.s32.totalorder %s105, 0
      %s108 = sadd.s32 %s107, 1
      %s109 = scalar_select %p106, %s107, %s108
      %p112 = pneg %p106
      %p113 = scmp.eq.s32.totalorder %s29, 3
      %p114 = por %p112, %p113
      %p115 = scmp.ne.s32.totalorder %s107, %s110
      %p116 = scmp.eq.s32.totalorder %s29, 0
      %p117 = por %p115, %p116
      %p118 = scmp.ne.s32.totalorder %s107, %s110
      %p119 = scmp.eq.s32.totalorder %s34, 3
      %p120 = por %p118, %p119
      %p121 = scmp.ne.s32.totalorder %s110, %s111
      %p122 = scmp.eq.s32.totalorder %s34, 0
      %p123 = por %p121, %p122
      %p124 = scmp.ne.s32.totalorder %s110, %s111
      %p125 = scmp.eq.s32.totalorder %s35, 3
      %p126 = por %p124, %p125
      %p128 = scmp.ne.s32.totalorder %s111, %s127
      %p129 = scmp.eq.s32.totalorder %s35, 0
      %p130 = por %p128, %p129
      %s131 = ssub.s32 %s36, %s48
      %p132 = scmp.eq.s32.totalorder %s131, 0
      %s134 = sadd.s32 %s133, 1
      %s135 = scalar_select %p132, %s133, %s134
      %p138 = pneg %p132
      %p139 = scmp.eq.s32.totalorder %s29, 3
      %p140 = por %p138, %p139
      %p141 = scmp.ne.s32.totalorder %s133, %s136
      %p142 = scmp.eq.s32.totalorder %s29, 0
      %p143 = por %p141, %p142
      %p144 = scmp.ne.s32.totalorder %s133, %s136
      %p145 = scmp.eq.s32.totalorder %s34, 3
      %p146 = por %p144, %p145
      %p147 = scmp.ne.s32.totalorder %s136, %s137
      %p148 = scmp.eq.s32.totalorder %s34, 0
      %p149 = por %p147, %p148
      %p150 = scmp.ne.s32.totalorder %s136, %s137
      %p151 = scmp.eq.s32.totalorder %s35, 3
      %p152 = por %p150, %p151
      %p154 = scmp.ne.s32.totalorder %s137, %s153
      %p155 = scmp.eq.s32.totalorder %s35, 0
      %p156 = por %p154, %p155
      %s158 = sadd.s32 %s157, 1
      %p161 = scmp.eq.s32.totalorder %s29, 3
      %p162 = scmp.ne.s32.totalorder %s157, %s159
      %p163 = scmp.eq.s32.totalorder %s29, 0
      %p164 = por %p162, %p163
      %p165 = scmp.ne.s32.totalorder %s157, %s159
      %p166 = scmp.eq.s32.totalorder %s34, 3
      %p167 = por %p165, %p166
      %p168 = scmp.ne.s32.totalorder %s159, %s160
      %p169 = scmp.eq.s32.totalorder %s34, 0
      %p170 = por %p168, %p169
      %p171 = scmp.ne.s32.totalorder %s159, %s160
      %p172 = scmp.eq.s32.totalorder %s35, 3
      %p173 = por %p171, %p172
      %p175 = scmp.ne.s32.totalorder %s160, %s174
      %p176 = scmp.eq.s32.totalorder %s35, 0
      %p177 = por %p175, %p176
      %s178 = ssub.s32 %s36, %s48
      %s179 = ssub.s32 %s37, %s44
      %s180 = sor.u32 %s178, %s179
      %p181 = scmp.eq.s32.totalorder %s180, 0
      %s183 = sadd.s32 %s182, 1
      %s184 = scalar_select %p181, %s182, %s183
      %p187 = pneg %p181
      %p188 = scmp.eq.s32.totalorder %s29, 3
      %p189 = por %p187, %p188
      %p190 = scmp.ne.s32.totalorder %s182, %s185
      %p191 = scmp.eq.s32.totalorder %s29, 0
      %p192 = por %p190, %p191
      %p193 = scmp.ne.s32.totalorder %s182, %s185
      %p194 = scmp.eq.s32.totalorder %s34, 3
      %p195 = por %p193, %p194
      %p196 = scmp.ne.s32.totalorder %s185, %s186
      %p197 = scmp.eq.s32.totalorder %s34, 0
      %p198 = por %p196, %p197
      %p199 = scmp.ne.s32.totalorder %s185, %s186
      %p200 = scmp.eq.s32.totalorder %s35, 3
      %p201 = por %p199, %p200
      %p203 = scmp.ne.s32.totalorder %s186, %s202
      %p204 = scmp.eq.s32.totalorder %s35, 0
      %p205 = por %p203, %p204
      %s206 = ssub.s32 %s36, %s48
      %s207 = ssub.s32 %s37, %s44
      %s208 = sor.u32 %s206, %s207
      %p209 = scmp.eq.s32.totalorder %s208, 0
      %s211 = sadd.s32 %s210, 1
      %s212 = scalar_select %p209, %s210, %s211
      %p215 = pneg %p209
      %p216 = scmp.eq.s32.totalorder %s29, 3
      %p217 = por %p215, %p216
      %p218 = scmp.ne.s32.totalorder %s210, %s213
      %p219 = scmp.eq.s32.totalorder %s29, 0
      %p220 = por %p218, %p219
      %p221 = scmp.ne.s32.totalorder %s210, %s213
      %p222 = scmp.eq.s32.totalorder %s34, 3
      %p223 = por %p221, %p222
      %p224 = scmp.ne.s32.totalorder %s213, %s214
      %p225 = scmp.eq.s32.totalorder %s34, 0
      %p226 = por %p224, %p225
      %p227 = scmp.ne.s32.totalorder %s213, %s214
      %p228 = scmp.eq.s32.totalorder %s35, 3
      %p229 = por %p227, %p228
      %p231 = scmp.ne.s32.totalorder %s214, %s230
      %p232 = scmp.eq.s32.totalorder %s35, 0
      %p233 = por %p231, %p232
      %s234 = ssub.s32 %s36, %s48
      %s235 = ssub.s32 %s37, %s44
      %s236 = sor.u32 %s234, %s235
      %p237 = scmp.eq.s32.totalorder %s236, 0
      %s239 = sadd.s32 %s238, 1
      %s240 = scalar_select %p237, %s238, %s239
      %p243 = pneg %p237
      %p244 = scmp.eq.s32.totalorder %s29, 3
      %p245 = por %p243, %p244
      %p246 = scmp.ne.s32.totalorder %s238, %s241
      %p247 = scmp.eq.s32.totalorder %s29, 0
      %p248 = por %p246, %p247
      %p249 = scmp.ne.s32.totalorder %s238, %s241
      %p250 = scmp.eq.s32.totalorder %s34, 3
      %p251 = por %p249, %p250
      %p252 = scmp.ne.s32.totalorder %s241, %s242
      %p253 = scmp.eq.s32.totalorder %s34, 0
      %p254 = por %p252, %p253
      %p255 = scmp.ne.s32.totalorder %s241, %s242
      %p256 = scmp.eq.s32.totalorder %s35, 3
      %p257 = por %p255, %p256
      %p259 = scmp.ne.s32.totalorder %s242, %s258
      %p260 = scmp.eq.s32.totalorder %s35, 0
      %p261 = por %p259, %p260
      %p262 = scmp.le.s32.totalorder 1, %s29
      %p263 = scmp.lt.s32.totalorder %s29, 5
      %p264 = pnand %p262, %p263
      %p265 = pneg %p264
      // Predicated region
      $region9: #{unetr_up_block_forward.3} parent=5 // pred_check
        _
      $region10: #{unetr_up_block_forward.3} parent=5 // pred_check_branch
        %267 = sbr.rel (%p264) target = $region12
      $region11: #{unetr_up_block_forward.3} parent=5 // pred_region
        %s268 = ssub.s32 %s29, 1
        // Predicated region
        $region13: #{unetr_up_block_forward.3} parent=11 // pred_check
          %p269 = pneg %p170
        $region14: #{unetr_up_block_forward.3} parent=11 // pred_check_branch
          %271 = sbr.rel (%p269) target = $region16
        $region15: #{unetr_up_block_forward.3} parent=11 // pred_region
          %s273 = ssub.s32 18432, 18432
          %274 = vsyncadd [#allocation9], %s273
          %s275 = sshll.u32 [#allocation10], 4
          %s276 = int_to_ptr.vmem [resolvable:$true] %s275
          %281 = dma.hbm_to_vmem [thread:$0]  %s4, 18432, %s276, [#allocation9], 128, 128, 8
        $region16: #{unetr_up_block_forward.3} parent=11 // pred_fallthru
          _
      $region12: #{unetr_up_block_forward.3} parent=5 // pred_fallthru
        _
      %p282 = scmp.lt.s32.totalorder %s29, 4
      // Predicated region
      $region17: #{unetr_up_block_forward.3} parent=5 // pred_check
        %p283 = pneg %p282
      $region18: #{unetr_up_block_forward.3} parent=5 // pred_check_branch
        %285 = sbr.rel (%p283) target = $region20
      $region19: #{unetr_up_block_forward.3} parent=5 // pred_region
        // Predicated region
        $region21: #{unetr_up_block_forward.3} parent=19 // pred_check
          %p286 = pneg %p63
        $region22: #{unetr_up_block_forward.3} parent=19 // pred_check_branch
          %288 = sbr.rel (%p286) target = $region24
        $region23: #{unetr_up_block_forward.3} parent=19 // pred_region
          %s289 = sand.u32 %s53, 1
          %s290 = scalar_lea.sflag [#allocation3], %s289
          %s291 = sand.u32 %s53, 1
          %s292 = smul.addr %s291, 192
          %s293 = scalar_lea.vmem [#allocation2], %s292
          %s294 = smul.u32 8, %s37
          %s296 = ssub.s32 3072, 3072
          %297 = vsyncadd %s290, %s296
          %s298 = smul.addr %s294, 3
          %s299 = smul.addr %s36, 48
          %s300 = sadd.s32 %s298, %s299
          %s301 = smul.addr %s300, 128
          %s302 = scalar_lea.hbm %s0, %s301
          %s303 = sshll.u32 %s293, 4
          %s304 = int_to_ptr.vmem [resolvable:$true] %s303
          %309 = dma.hbm_to_vmem [thread:$0]  %s302, 3072, %s304, %s290, 128, 128, 8
        $region24: #{unetr_up_block_forward.3} parent=19 // pred_fallthru
          _
        // Predicated region
        $region25: #{unetr_up_block_forward.3} parent=19 // pred_check
          %p310 = pneg %p91
        $region26: #{unetr_up_block_forward.3} parent=19 // pred_check_branch
          %312 = sbr.rel (%p310) target = $region28
        $region27: #{unetr_up_block_forward.3} parent=19 // pred_region
          %s313 = sand.u32 %s29, 1
          %s314 = scalar_lea.sflag [#allocation6], %s313
          %s315 = sand.u32 %s81, 1
          %s316 = smul.addr %s315, 48
          %s317 = scalar_lea.vmem [#allocation5], %s316
          %s319 = ssub.s32 768, 768
          %320 = vsyncadd %s314, %s319
          %s321 = smul.addr %s37, 6
          %s322 = smul.addr %s36, 12
          %s323 = sadd.s32 %s321, %s322
          %s324 = smul.addr %s323, 128
          %s325 = scalar_lea.hbm %s1, %s324
          %s326 = sshll.u32 %s317, 4
          %s327 = int_to_ptr.vmem [resolvable:$true] %s326
          %332 = dma.hbm_to_vmem [thread:$0]  %s325, 768, %s327, %s314, 128, 128, 8
        $region28: #{unetr_up_block_forward.3} parent=19 // pred_fallthru
          _
        // Predicated region
        $region29: #{unetr_up_block_forward.3} parent=19 // pred_check
          %p333 = pneg %p117
        $region30: #{unetr_up_block_forward.3} parent=19 // pred_check_branch
          %335 = sbr.rel (%p333) target = $region32
        $region31: #{unetr_up_block_forward.3} parent=19 // pred_region
          %s336 = sand.u32 %s29, 1
          %s337 = scalar_lea.sflag [#allocation6], %s336
          %s338 = sand.u32 %s107, 1
          %s339 = scalar_lea.vmem [#allocation7], %s338
          %s341 = ssub.s32 16, 16
          %342 = vsyncadd %s337, %s341
          %s343 = smul.addr %s36, 16
          %s344 = scalar_lea.hbm %s2, %s343
          %s346 = sshll.u32 %s339, 4
          %s347 = int_to_ptr.vmem [resolvable:$true] %s346
          %349 = dma.hbm_to_vmem [thread:$0]  %s344, 16, %s347, %s337
        $region32: #{unetr_up_block_forward.3} parent=19 // pred_fallthru
          _
        // Predicated region
        $region33: #{unetr_up_block_forward.3} parent=19 // pred_check
          %p350 = pneg %p143
        $region34: #{unetr_up_block_forward.3} parent=19 // pred_check_branch
          %352 = sbr.rel (%p350) target = $region36
        $region35: #{unetr_up_block_forward.3} parent=19 // pred_region
          %s353 = sand.u32 %s29, 1
          %s354 = scalar_lea.sflag [#allocation9], %s353
          %s355 = sand.u32 %s133, 1
          %s356 = scalar_lea.vmem [#allocation8], %s355
          %s358 = ssub.s32 16, 16
          %359 = vsyncadd %s354, %s358
          %s360 = smul.addr %s36, 16
          %s361 = scalar_lea.hbm %s3, %s360
          %s363 = sshll.u32 %s356, 4
          %s364 = int_to_ptr.vmem [resolvable:$true] %s363
          %366 = dma.hbm_to_vmem [thread:$0]  %s361, 16, %s364, %s354
        $region36: #{unetr_up_block_forward.3} parent=19 // pred_fallthru
          _
      $region20: #{unetr_up_block_forward.3} parent=5 // pred_fallthru
        _
      %p367 = scmp.le.s32.totalorder 1, %s29
      %p368 = scmp.lt.s32.totalorder %s29, 5
      %p369 = pnand %p367, %p368
      %p370 = pneg %p369
      // Predicated region
      $region37: #{unetr_up_block_forward.3} parent=5 // pred_check
        _
      $region38: #{unetr_up_block_forward.3} parent=5 // pred_check_branch
        %372 = sbr.rel (%p369) target = $region40
      $region39: #{unetr_up_block_forward.3} parent=5 // pred_region
        %s373 = ssub.s32 %s29, 1
        %s374 = sand.u32 %s56, 1
        %s375 = scalar_lea.sflag [#allocation3], %s374
        %s376 = sand.u32 %s56, 1
        %s377 = smul.addr %s376, 192
        %s378 = scalar_lea.vmem [#allocation2], %s377
        // Predicated region
        $region41: #{unetr_up_block_forward.3} parent=39 // pred_check
          %p379 = pneg %p69
        $region42: #{unetr_up_block_forward.3} parent=39 // pred_check_branch
          %381 = sbr.rel (%p379) target = $region44
        $region43: #{unetr_up_block_forward.3} parent=39 // pred_region
          %382 = dma.done %s375, 3072
        $region44: #{unetr_up_block_forward.3} parent=39 // pred_fallthru
          _
        %s383 = sand.u32 %s34, 1
        %s384 = scalar_lea.sflag [#allocation6], %s383
        %s385 = sand.u32 %s84, 1
        %s386 = smul.addr %s385, 48
        %s387 = scalar_lea.vmem [#allocation5], %s386
        // Predicated region
        $region45: #{unetr_up_block_forward.3} parent=39 // pred_check
          %p388 = pneg %p97
        $region46: #{unetr_up_block_forward.3} parent=39 // pred_check_branch
          %390 = sbr.rel (%p388) target = $region48
        $region47: #{unetr_up_block_forward.3} parent=39 // pred_region
          %391 = dma.done %s384, 768
        $region48: #{unetr_up_block_forward.3} parent=39 // pred_fallthru
          _
        %s392 = sand.u32 %s34, 1
        %s393 = scalar_lea.sflag [#allocation6], %s392
        %s394 = sand.u32 %s110, 1
        %s395 = scalar_lea.vmem [#allocation7], %s394
        // Predicated region
        $region49: #{unetr_up_block_forward.3} parent=39 // pred_check
          %p396 = pneg %p123
        $region50: #{unetr_up_block_forward.3} parent=39 // pred_check_branch
          %398 = sbr.rel (%p396) target = $region52
        $region51: #{unetr_up_block_forward.3} parent=39 // pred_region
          %399 = dma.done %s393, 16
        $region52: #{unetr_up_block_forward.3} parent=39 // pred_fallthru
          _
        %s400 = sand.u32 %s34, 1
        %s401 = scalar_lea.sflag [#allocation9], %s400
        %s402 = sand.u32 %s136, 1
        %s403 = scalar_lea.vmem [#allocation8], %s402
        // Predicated region
        $region53: #{unetr_up_block_forward.3} parent=39 // pred_check
          %p404 = pneg %p149
        $region54: #{unetr_up_block_forward.3} parent=39 // pred_check_branch
          %406 = sbr.rel (%p404) target = $region56
        $region55: #{unetr_up_block_forward.3} parent=39 // pred_region
          %407 = dma.done %s401, 16
        $region56: #{unetr_up_block_forward.3} parent=39 // pred_fallthru
          _
        // Predicated region
        $region57: #{unetr_up_block_forward.3} parent=39 // pred_check
          %p408 = pneg %p170
        $region58: #{unetr_up_block_forward.3} parent=39 // pred_check_branch
          %410 = sbr.rel (%p408) target = $region60
        $region59: #{unetr_up_block_forward.3} parent=39 // pred_region
          %411 = dma.done [#allocation9], 18432
        $region60: #{unetr_up_block_forward.3} parent=39 // pred_fallthru
          _
        %s412 = sand.u32 %s56, 1
        %s413 = scalar_lea.sflag [#allocation3], %s412
        %s414 = sand.u32 %s56, 1
        %s415 = smul.addr %s414, 192
        %s416 = scalar_lea.vmem [#allocation2], %s415
        %p417 = pneg %p69
        %p418 = pneg %p66
        %s419 = sand.u32 %s34, 1
        %s420 = scalar_lea.sflag [#allocation6], %s419
        %s421 = sand.u32 %s84, 1
        %s422 = smul.addr %s421, 48
        %s423 = scalar_lea.vmem [#allocation5], %s422
        %p424 = pneg %p97
        %p425 = pneg %p94
        %s426 = sand.u32 %s34, 1
        %s427 = scalar_lea.sflag [#allocation6], %s426
        %s428 = sand.u32 %s110, 1
        %s429 = scalar_lea.vmem [#allocation7], %s428
        %p430 = pneg %p123
        %p431 = pneg %p120
        %s432 = sand.u32 %s34, 1
        %s433 = scalar_lea.sflag [#allocation9], %s432
        %s434 = sand.u32 %s136, 1
        %s435 = scalar_lea.vmem [#allocation8], %s434
        %p436 = pneg %p149
        %p437 = pneg %p146
        %p438 = pneg %p170
        %p439 = pneg %p167
        %p440 = pneg %p198
        %p441 = pneg %p195
        %s442 = sand.u32 %s185, 1
        %s443 = scalar_lea.sflag [#allocation4], %s442
        %s444 = sand.u32 %s185, 1
        %s445 = smul.addr %s444, 128
        %s446 = scalar_lea.vmem [#allocation11], %s445
        %p447 = pneg %p226
        %p448 = pneg %p223
        %s449 = sand.u32 %s34, 1
        %s450 = scalar_lea.sflag [#allocation13], %s449
        %s451 = sand.u32 %s213, 1
        %s452 = scalar_lea.vmem [#allocation12], %s451
        %p453 = pneg %p254
        %p454 = pneg %p251
        %s455 = sand.u32 %s34, 1
        %s456 = scalar_lea.sflag [#allocation13], %s455
        %s457 = sand.u32 %s241, 1
        %s458 = scalar_lea.vmem [#allocation14], %s457
        %s459 = smul.u32 8, %s39
        %s460 = smul.u32 8, %s39
        %v461 = vld [vmem:[%s395] sm:$0x1]
        %v462 = vld [vmem:[%s403] sm:$0x1]
        %v463 = vlaneseq
        %v464 = vand.u32 %v463, 127
        %vm465 = vcmp.ge.s32.totalorder %v464, 1
        %vm466 = vcmp.le.s32.totalorder %v464, 16
        %vm467 = vmand %vm465, %vm466
        %v468 = vsel %vm467, 1, 0
        %v469 = vcvt.s32.f32 %v468
        %471 = vbcast.lane.b32.xlu0 %v469, 256
        %v472 = vpop.permute.xlu0 %471
        %s474 = sor.u32 256, 8
        %475 = vbcast.lane.b32.xlu0 %v469, %s474
        %v476 = vpop.permute.xlu0 %475
        %s478 = sor.u32 256, 16
        %479 = vbcast.lane.b32.xlu0 %v469, %s478
        %v480 = vpop.permute.xlu0 %479
        %v481 = vld [vmem:[%s387] sm:$0xff]
        %v482 = vld [vmem:[%s387 + $0x8] sm:$0xff]
        %v483 = vld [vmem:[%s387 + $0x10] sm:$0x3]
        %v484 = vld [vmem:[%s387 + $0x18] sm:$0xff]
        %v485 = vld [vmem:[%s387 + $0x20] sm:$0xff]
        %v486 = vld [vmem:[%s387 + $0x28] sm:$0x3]
        %v488 = vlaneseq
        %v489 = vshrl.u32 %v488, 7
        %v490 = vsub.s32 0, %v489
        %v491 = vrot.slane %v461, %v490
        %v493 = vsub.f32 %v481, %v491
        %v494 = vsub.f32 %v482, %v491
        %v495 = vsub.f32 %v483, %v491
        %v497 = vlaneseq
        %v498 = vshrl.u32 %v497, 7
        %v499 = vsub.s32 0, %v498
        %v500 = vrot.slane %v462, %v499
        %v502 = vmul.f32 %v493, %v500
        %v503 = vmul.f32 %v494, %v500
        %v504 = vmul.f32 %v495, %v500
        %vm505 = vcmp.ge.f32.partialorder %v502, 0.0
        %vm506 = vcmp.ge.f32.partialorder %v503, 0.0
        %vm507 = vcmp.ge.f32.partialorder %v504, 0.0
        %v508 = vmul.f32 %v502, 0.01
        %v509 = vmul.f32 %v503, 0.01
        %v510 = vmul.f32 %v504, 0.01
        %v511 = vsel %vm505, %v502, %v508
        %v512 = vsel %vm506, %v503, %v509
        %v513 = vsel %vm507, %v504, %v510
        %v514 = vmul.f32 %v511, %v472
        %v515 = vmul.f32 %v512, %v476
        %v516 = vmul.f32 %v513, %v480
        %p517 = scmp.gt.s32.totalorder %s39, 0
        %s518 = scalar_select %p517, 1, 0
        %s519 = scvt.s32.f32 %s518
        %v520 = vstv %s519
        %v521 = vmul.f32 %v514, %v520
        %v522 = vmul.f32 %v515, %v520
        %v523 = vmul.f32 %v516, %v520
        %v524 = vsub.f32 %v484, %v491
        %v525 = vsub.f32 %v485, %v491
        %v526 = vsub.f32 %v486, %v491
        %v527 = vmul.f32 %v524, %v500
        %v528 = vmul.f32 %v525, %v500
        %v529 = vmul.f32 %v526, %v500
        %vm530 = vcmp.ge.f32.partialorder %v527, 0.0
        %vm531 = vcmp.ge.f32.partialorder %v528, 0.0
        %vm532 = vcmp.ge.f32.partialorder %v529, 0.0
        %v533 = vmul.f32 %v527, 0.01
        %v534 = vmul.f32 %v528, 0.01
        %v535 = vmul.f32 %v529, 0.01
        %v536 = vsel %vm530, %v527, %v533
        %v537 = vsel %vm531, %v528, %v534
        %v538 = vsel %vm532, %v529, %v535
        %v539 = vmul.f32 %v536, %v472
        %v540 = vmul.f32 %v537, %v476
        %v541 = vmul.f32 %v538, %v480
        %p542 = scmp.lt.s32.totalorder %s39, 1
        %s543 = scalar_select %p542, 1, 0
        %s544 = scvt.s32.f32 %s543
        %v545 = vstv %s544
        %v546 = vmul.f32 %v539, %v545
        %v547 = vmul.f32 %v540, %v545
        %v548 = vmul.f32 %v541, %v545
        %v549 = vld [vmem:[%s378] sm:$0xff]
        %v550 = vld [vmem:[%s378 + $0x8] sm:$0xff]
        %v551 = vld [vmem:[%s378 + $0x10] sm:$0x3]
        %v552 = vld [vmem:[%s378 + $0x18] sm:$0xff]
        %v553 = vld [vmem:[%s378 + $0x20] sm:$0xff]
        %v554 = vld [vmem:[%s378 + $0x28] sm:$0x3]
        %v555 = vld [vmem:[%s378 + $0x30] sm:$0xff]
        %v556 = vld [vmem:[%s378 + $0x38] sm:$0xff]
        %v557 = vld [vmem:[%s378 + $0x40] sm:$0x3]
        %v558 = vld [vmem:[%s378 + $0x48] sm:$0xff]
        %v559 = vld [vmem:[%s378 + $0x50] sm:$0xff]
        %v560 = vld [vmem:[%s378 + $0x58] sm:$0x3]
        %v561 = vld [vmem:[%s378 + $0x60] sm:$0xff]
        %v562 = vld [vmem:[%s378 + $0x68] sm:$0xff]
        %v563 = vld [vmem:[%s378 + $0x70] sm:$0x3]
        %v564 = vld [vmem:[%s378 + $0x78] sm:$0xff]
        %v565 = vld [vmem:[%s378 + $0x80] sm:$0xff]
        %v566 = vld [vmem:[%s378 + $0x88] sm:$0x3]
        %v567 = vld [vmem:[%s378 + $0x90] sm:$0xff]
        %v568 = vld [vmem:[%s378 + $0x98] sm:$0xff]
        %v569 = vld [vmem:[%s378 + $0xa0] sm:$0x3]
        %v570 = vld [vmem:[%s378 + $0xa8] sm:$0xff]
        %v571 = vld [vmem:[%s378 + $0xb0] sm:$0xff]
        %v572 = vld [vmem:[%s378 + $0xb8] sm:$0x3]
        %v573 = vsub.f32 %v549, %v491
        %v574 = vsub.f32 %v550, %v491
        %v575 = vsub.f32 %v551, %v491
        %v576 = vsub.f32 %v552, %v491
        %v577 = vsub.f32 %v553, %v491
        %v578 = vsub.f32 %v554, %v491
        %v579 = vsub.f32 %v555, %v491
        %v580 = vsub.f32 %v556, %v491
        %v581 = vsub.f32 %v557, %v491
        %v582 = vsub.f32 %v558, %v491
        %v583 = vsub.f32 %v559, %v491
        %v584 = vsub.f32 %v560, %v491
        %v585 = vsub.f32 %v561, %v491
        %v586 = vsub.f32 %v562, %v491
        %v587 = vsub.f32 %v563, %v491
        %v588 = vsub.f32 %v564, %v491
        %v589 = vsub.f32 %v565, %v491
        %v590 = vsub.f32 %v566, %v491
        %v591 = vsub.f32 %v567, %v491
        %v592 = vsub.f32 %v568, %v491
        %v593 = vsub.f32 %v569, %v491
        %v594 = vsub.f32 %v570, %v491
        %v595 = vsub.f32 %v571, %v491
        %v596 = vsub.f32 %v572, %v491
        %v597 = vmul.f32 %v573, %v500
        %v598 = vmul.f32 %v574, %v500
        %v599 = vmul.f32 %v575, %v500
        %v600 = vmul.f32 %v576, %v500
        %v601 = vmul.f32 %v577, %v500
        %v602 = vmul.f32 %v578, %v500
        %v603 = vmul.f32 %v579, %v500
        %v604 = vmul.f32 %v580, %v500
        %v605 = vmul.f32 %v581, %v500
        %v606 = vmul.f32 %v582, %v500
        %v607 = vmul.f32 %v583, %v500
        %v608 = vmul.f32 %v584, %v500
        %v609 = vmul.f32 %v585, %v500
        %v610 = vmul.f32 %v586, %v500
        %v611 = vmul.f32 %v587, %v500
        %v612 = vmul.f32 %v588, %v500
        %v613 = vmul.f32 %v589, %v500
        %v614 = vmul.f32 %v590, %v500
        %v615 = vmul.f32 %v591, %v500
        %v616 = vmul.f32 %v592, %v500
        %v617 = vmul.f32 %v593, %v500
        %v618 = vmul.f32 %v594, %v500
        %v619 = vmul.f32 %v595, %v500
        %v620 = vmul.f32 %v596, %v500
        %vm621 = vcmp.ge.f32.partialorder %v597, 0.0
        %vm622 = vcmp.ge.f32.partialorder %v598, 0.0
        %vm623 = vcmp.ge.f32.partialorder %v599, 0.0
        %vm624 = vcmp.ge.f32.partialorder %v600, 0.0
        %vm625 = vcmp.ge.f32.partialorder %v601, 0.0
        %vm626 = vcmp.ge.f32.partialorder %v602, 0.0
        %vm627 = vcmp.ge.f32.partialorder %v603, 0.0
        %vm628 = vcmp.ge.f32.partialorder %v604, 0.0
        %vm629 = vcmp.ge.f32.partialorder %v605, 0.0
        %vm630 = vcmp.ge.f32.partialorder %v606, 0.0
        %vm631 = vcmp.ge.f32.partialorder %v607, 0.0
        %vm632 = vcmp.ge.f32.partialorder %v608, 0.0
        %vm633 = vcmp.ge.f32.partialorder %v609, 0.0
        %vm634 = vcmp.ge.f32.partialorder %v610, 0.0
        %vm635 = vcmp.ge.f32.partialorder %v611, 0.0
        %vm636 = vcmp.ge.f32.partialorder %v612, 0.0
        %vm637 = vcmp.ge.f32.partialorder %v613, 0.0
        %vm638 = vcmp.ge.f32.partialorder %v614, 0.0
        %vm639 = vcmp.ge.f32.partialorder %v615, 0.0
        %vm640 = vcmp.ge.f32.partialorder %v616, 0.0
        %vm641 = vcmp.ge.f32.partialorder %v617, 0.0
        %vm642 = vcmp.ge.f32.partialorder %v618, 0.0
        %vm643 = vcmp.ge.f32.partialorder %v619, 0.0
        %vm644 = vcmp.ge.f32.partialorder %v620, 0.0
        %v645 = vmul.f32 %v597, 0.01
        %v646 = vmul.f32 %v598, 0.01
        %v647 = vmul.f32 %v599, 0.01
        %v648 = vmul.f32 %v600, 0.01
        %v649 = vmul.f32 %v601, 0.01
        %v650 = vmul.f32 %v602, 0.01
        %v651 = vmul.f32 %v603, 0.01
        %v652 = vmul.f32 %v604, 0.01
        %v653 = vmul.f32 %v605, 0.01
        %v654 = vmul.f32 %v606, 0.01
        %v655 = vmul.f32 %v607, 0.01
        %v656 = vmul.f32 %v608, 0.01
        %v657 = vmul.f32 %v609, 0.01
        %v658 = vmul.f32 %v610, 0.01
        %v659 = vmul.f32 %v611, 0.01
        %v660 = vmul.f32 %v612, 0.01
        %v661 = vmul.f32 %v613, 0.01
        %v662 = vmul.f32 %v614, 0.01
        %v663 = vmul.f32 %v615, 0.01
        %v664 = vmul.f32 %v616, 0.01
        %v665 = vmul.f32 %v617, 0.01
        %v666 = vmul.f32 %v618, 0.01
        %v667 = vmul.f32 %v619, 0.01
        %v668 = vmul.f32 %v620, 0.01
        %v669 = vsel %vm621, %v597, %v645
        %v670 = vsel %vm622, %v598, %v646
        %v671 = vsel %vm623, %v599, %v647
        %v672 = vsel %vm624, %v600, %v648
        %v673 = vsel %vm625, %v601, %v649
        %v674 = vsel %vm626, %v602, %v650
        %v675 = vsel %vm627, %v603, %v651
        %v676 = vsel %vm628, %v604, %v652
        %v677 = vsel %vm629, %v605, %v653
        %v678 = vsel %vm630, %v606, %v654
        %v679 = vsel %vm631, %v607, %v655
        %v680 = vsel %vm632, %v608, %v656
        %v681 = vsel %vm633, %v609, %v657
        %v682 = vsel %vm634, %v610, %v658
        %v683 = vsel %vm635, %v611, %v659
        %v684 = vsel %vm636, %v612, %v660
        %v685 = vsel %vm637, %v613, %v661
        %v686 = vsel %vm638, %v614, %v662
        %v687 = vsel %vm639, %v615, %v663
        %v688 = vsel %vm640, %v616, %v664
        %v689 = vsel %vm641, %v617, %v665
        %v690 = vsel %vm642, %v618, %v666
        %v691 = vsel %vm643, %v619, %v667
        %v692 = vsel %vm644, %v620, %v668
        %v693 = vmul.f32 %v669, %v472
        %v694 = vmul.f32 %v670, %v476
        %v695 = vmul.f32 %v671, %v480
        %v696 = vmul.f32 %v672, %v472
        %v697 = vmul.f32 %v673, %v476
        %v698 = vmul.f32 %v674, %v480
        %v699 = vmul.f32 %v675, %v472
        %v700 = vmul.f32 %v676, %v476
        %v701 = vmul.f32 %v677, %v480
        %v702 = vmul.f32 %v678, %v472
        %v703 = vmul.f32 %v679, %v476
        %v704 = vmul.f32 %v680, %v480
        %v705 = vmul.f32 %v681, %v472
        %v706 = vmul.f32 %v682, %v476
        %v707 = vmul.f32 %v683, %v480
        %v708 = vmul.f32 %v684, %v472
        %v709 = vmul.f32 %v685, %v476
        %v710 = vmul.f32 %v686, %v480
        %v711 = vmul.f32 %v687, %v472
        %v712 = vmul.f32 %v688, %v476
        %v713 = vmul.f32 %v689, %v480
        %v714 = vmul.f32 %v690, %v472
        %v715 = vmul.f32 %v691, %v476
        %v716 = vmul.f32 %v692, %v480
        %v717 = vld [vmem:[#allocation10] sm:$0xff]
        %v718 = vld [vmem:[#allocation10 + $0x8] sm:$0xff]
        %v719 = vld [vmem:[#allocation10 + $0x10] sm:$0xff]
        %v720 = vld [vmem:[#allocation10 + $0x18] sm:$0xff]
        %v721 = vld [vmem:[#allocation10 + $0x20] sm:$0xff]
        %v722 = vld [vmem:[#allocation10 + $0x28] sm:$0xff]
        %v723 = vld [vmem:[#allocation10 + $0x30] sm:$0xff]
        %v724 = vld [vmem:[#allocation10 + $0x38] sm:$0xff]
        %v725 = vld [vmem:[#allocation10 + $0x40] sm:$0xff]
        %v726 = vld [vmem:[#allocation10 + $0x48] sm:$0xff]
        %v727 = vld [vmem:[#allocation10 + $0x50] sm:$0xff]
        %v728 = vld [vmem:[#allocation10 + $0x58] sm:$0xff]
        %v729 = vld [vmem:[#allocation10 + $0x60] sm:$0xff]
        %v730 = vld [vmem:[#allocation10 + $0x68] sm:$0xff]
        %v731 = vld [vmem:[#allocation10 + $0x70] sm:$0xff]
        %v732 = vld [vmem:[#allocation10 + $0x78] sm:$0xff]
        %vm757 = vcmask 1046528
        %v758 = vrot.slane %v521, 1
        %v759 = vrot.slane %v522, 1
        %v760 = vsel %vm757, %v758, %v759
        %v761 = vrot.slane %v523, 1
        %v762 = vsel %vm757, %v759, %v761
        %v763 = vrot.slane %v693, 1
        %v764 = vrot.slane %v694, 1
        %v765 = vsel %vm757, %v763, %v764
        %v766 = vrot.slane %v695, 1
        %v767 = vsel %vm757, %v764, %v766
        %v768 = vrot.slane %v696, 1
        %v769 = vrot.slane %v697, 1
        %v770 = vsel %vm757, %v768, %v769
        %v771 = vrot.slane %v698, 1
        %v772 = vsel %vm757, %v769, %v771
        %v773 = vrot.slane %v699, 1
        %v774 = vrot.slane %v700, 1
        %v775 = vsel %vm757, %v773, %v774
        %v776 = vrot.slane %v701, 1
        %v777 = vsel %vm757, %v774, %v776
        %v778 = vrot.slane %v702, 1
        %v779 = vrot.slane %v703, 1
        %v780 = vsel %vm757, %v778, %v779
        %v781 = vrot.slane %v704, 1
        %v782 = vsel %vm757, %v779, %v781
        %v783 = vrot.slane %v705, 1
        %v784 = vrot.slane %v706, 1
        %v785 = vsel %vm757, %v783, %v784
        %v786 = vrot.slane %v707, 1
        %v787 = vsel %vm757, %v784, %v786
        %v788 = vrot.slane %v708, 1
        %v789 = vrot.slane %v709, 1
        %v790 = vsel %vm757, %v788, %v789
        %v791 = vrot.slane %v710, 1
        %v792 = vsel %vm757, %v789, %v791
        %v793 = vrot.slane %v711, 1
        %v794 = vrot.slane %v712, 1
        %v795 = vsel %vm757, %v793, %v794
        %v796 = vrot.slane %v713, 1
        %v797 = vsel %vm757, %v794, %v796
        %s814 = scalar_lea.vmem [#allocation10], 128
        %v815 = vld [vmem:[%s814] sm:$0xff]
        %v816 = vld [vmem:[%s814 + $0x8] sm:$0xff]
        %v817 = vld [vmem:[%s814 + $0x10] sm:$0xff]
        %v818 = vld [vmem:[%s814 + $0x18] sm:$0xff]
        %v819 = vld [vmem:[%s814 + $0x20] sm:$0xff]
        %v820 = vld [vmem:[%s814 + $0x28] sm:$0xff]
        %v821 = vld [vmem:[%s814 + $0x30] sm:$0xff]
        %v822 = vld [vmem:[%s814 + $0x38] sm:$0xff]
        %v823 = vld [vmem:[%s814 + $0x40] sm:$0xff]
        %v824 = vld [vmem:[%s814 + $0x48] sm:$0xff]
        %v825 = vld [vmem:[%s814 + $0x50] sm:$0xff]
        %v826 = vld [vmem:[%s814 + $0x58] sm:$0xff]
        %v827 = vld [vmem:[%s814 + $0x60] sm:$0xff]
        %v828 = vld [vmem:[%s814 + $0x68] sm:$0xff]
        %v829 = vld [vmem:[%s814 + $0x70] sm:$0xff]
        %v830 = vld [vmem:[%s814 + $0x78] sm:$0xff]
        %831 = vmatprep.subr.mxu0 0.0
        %832 = vmatpush1.msra.mxu0 %v815
        %833 = vmatprep.subr.mxu0 0.0
        %834 = vmatpush1.msra.mxu0 %v816
        %835 = vmatprep.subr.mxu0 0.0
        %836 = vmatpush1.msra.mxu0 %v817
        %837 = vmatprep.subr.mxu0 0.0
        %838 = vmatpush1.msra.mxu0 %v818
        %839 = vmatprep.subr.mxu0 0.0
        %840 = vmatpush1.msra.mxu0 %v819
        %841 = vmatprep.subr.mxu0 0.0
        %842 = vmatpush1.msra.mxu0 %v820
        %843 = vmatprep.subr.mxu0 0.0
        %844 = vmatpush1.msra.mxu0 %v821
        %845 = vmatprep.subr.mxu0 0.0
        %846 = vmatpush1.msra.mxu0 %v822
        %847 = vmatprep.subr.mxu0 0.0
        %848 = vmatpush1.msra.mxu0 %v823
        %849 = vmatprep.subr.mxu0 0.0
        %850 = vmatpush1.msra.mxu0 %v824
        %851 = vmatprep.subr.mxu0 0.0
        %852 = vmatpush1.msra.mxu0 %v825
        %853 = vmatprep.subr.mxu0 0.0
        %854 = vmatpush1.msra.mxu0 %v826
        %855 = vmatprep.subr.mxu0 0.0
        %856 = vmatpush1.msra.mxu0 %v827
        %857 = vmatprep.subr.mxu0 0.0
        %858 = vmatpush1.msra.mxu0 %v828
        %859 = vmatprep.subr.mxu0 0.0
        %860 = vmatpush1.msra.mxu0 %v829
        %861 = vmatprep.subr.mxu0 0.0
        %862 = vmatpush1.msra.mxu0 %v830
        %863 = vmatprep.subr.mxu0 0.0
        %864 = vmatpush1.msra.mxu0 0.0
        %865 = vmatprep.subr.mxu0 0.0
        %866 = vmatpush1.msra.mxu0 0.0
        %867 = vmatprep.subr.mxu0 0.0
        %868 = vmatpush1.msra.mxu0 0.0
        %869 = vmatprep.subr.mxu0 0.0
        %870 = vmatpush1.msra.mxu0 0.0
        %871 = vmatprep.subr.mxu0 0.0
        %872 = vmatpush1.msra.mxu0 0.0
        %873 = vmatprep.subr.mxu0 0.0
        %874 = vmatpush1.msra.mxu0 0.0
        %875 = vmatprep.subr.mxu0 0.0
        %876 = vmatpush1.msra.mxu0 0.0
        %877 = vmatprep.subr.mxu0 0.0
        %878 = vmatpush1.msra.mxu0 0.0
        %879 = vmatprep.subr.mxu0 0.0
        %880 = vmatpush1.msra.mxu0 0.0
        %881 = vmatprep.subr.mxu0 0.0
        %882 = vmatpush1.msra.mxu0 0.0
        %883 = vmatprep.subr.mxu0 0.0
        %884 = vmatpush1.msra.mxu0 0.0
        %885 = vmatprep.subr.mxu0 0.0
        %886 = vmatpush1.msra.mxu0 0.0
        %887 = vmatprep.subr.mxu0 0.0
        %888 = vmatpush1.msra.mxu0 0.0
        %889 = vmatprep.subr.mxu0 0.0
        %890 = vmatpush1.msra.mxu0 0.0
        %891 = vmatprep.subr.mxu0 0.0
        %892 = vmatpush1.msra.mxu0 0.0
        %893 = vmatprep.subr.mxu0 0.0
        %894 = vmatpush1.msra.mxu0 0.0
        %895 = vmatprep.mubr.f32.mxu0 0.0
        %896 = vmatmul.mubr.f32.gmra.mrb[0].mxu0 %v760
        %v897 = vpop.f32.mrb[0].mxu0
        %v898 = vadd.f32 0.0, %v897
        %v899 = vpop.f32.mrb[0].mxu0
        %900 = vmatprep.mubr.f32.mxu0 0.0
        %901 = vmatmul.mubr.f32.gmra.mrb[0].mxu0 %v762
        %v902 = vpop.f32.mrb[0].mxu0
        %v903 = vadd.f32 0.0, %v902
        %v904 = vpop.f32.mrb[0].mxu0
        %905 = vmatprep.mubr.f32.mxu0 0.0
        %906 = vmatmul.mubr.f32.gmra.mrb[0].mxu0 %v765
        %v907 = vpop.f32.mrb[0].mxu0
        %v908 = vadd.f32 0.0, %v907
        %v909 = vpop.f32.mrb[0].mxu0
        %910 = vmatprep.mubr.f32.mxu0 0.0
        %911 = vmatmul.mubr.f32.gmra.mrb[0].mxu0 %v767
        %v912 = vpop.f32.mrb[0].mxu0
        %v913 = vadd.f32 0.0, %v912
        %v914 = vpop.f32.mrb[0].mxu0
        %915 = vmatprep.mubr.f32.mxu0 0.0
        %916 = vmatmul.mubr.f32.gmra.mrb[0].mxu0 %v770
        %v917 = vpop.f32.mrb[0].mxu0
        %v918 = vadd.f32 0.0, %v917
        %v919 = vpop.f32.mrb[0].mxu0
        %920 = vmatprep.mubr.f32.mxu0 0.0
        %921 = vmatmul.mubr.f32.gmra.mrb[0].mxu0 %v772
        %v922 = vpop.f32.mrb[0].mxu0
        %v923 = vadd.f32 0.0, %v922
        %v924 = vpop.f32.mrb[0].mxu0
        %925 = vmatprep.mubr.f32.mxu0 0.0
        %926 = vmatmul.mubr.f32.gmra.mrb[0].mxu0 %v775
        %v927 = vpop.f32.mrb[0].mxu0
        %v928 = vadd.f32 0.0, %v927
        %v929 = vpop.f32.mrb[0].mxu0
        %930 = vmatprep.mubr.f32.mxu0 0.0
        %931 = vmatmul.mubr.f32.gmra.mrb[0].mxu0 %v777
        %v932 = vpop.f32.mrb[0].mxu0
        %v933 = vadd.f32 0.0, %v932
        %v934 = vpop.f32.mrb[0].mxu0
        %935 = vmatprep.mubr.f32.mxu0 0.0
        %936 = vmatmul.mubr.f32.gmra.mrb[0].mxu0 %v780
        %v937 = vpop.f32.mrb[0].mxu0
        %v938 = vadd.f32 0.0, %v937
        %v939 = vpop.f32.mrb[0].mxu0
        %940 = vmatprep.mubr.f32.mxu0 0.0
        %941 = vmatmul.mubr.f32.gmra.mrb[0].mxu0 %v782
        %v942 = vpop.f32.mrb[0].mxu0
        %v943 = vadd.f32 0.0, %v942
        %v944 = vpop.f32.mrb[0].mxu0
        %945 = vmatprep.mubr.f32.mxu0 0.0
        %946 = vmatmul.mubr.f32.gmra.mrb[0].mxu0 %v785
        %v947 = vpop.f32.mrb[0].mxu0
        %v948 = vadd.f32 0.0, %v947
        %v949 = vpop.f32.mrb[0].mxu0
        %950 = vmatprep.mubr.f32.mxu0 0.0
        %951 = vmatmul.mubr.f32.gmra.mrb[0].mxu0 %v787
        %v952 = vpop.f32.mrb[0].mxu0
        %v953 = vadd.f32 0.0, %v952
        %v954 = vpop.f32.mrb[0].mxu0
        %955 = vmatprep.mubr.f32.mxu0 0.0
        %956 = vmatmul.mubr.f32.gmra.mrb[0].mxu0 %v790
        %v957 = vpop.f32.mrb[0].mxu0
        %v958 = vadd.f32 0.0, %v957
        %v959 = vpop.f32.mrb[0].mxu0
        %960 = vmatprep.mubr.f32.mxu0 0.0
        %961 = vmatmul.mubr.f32.gmra.mrb[0].mxu0 %v792
        %v962 = vpop.f32.mrb[0].mxu0
        %v963 = vadd.f32 0.0, %v962
        %v964 = vpop.f32.mrb[0].mxu0
        %965 = vmatprep.mubr.f32.mxu0 0.0
        %966 = vmatmul.mubr.f32.gmra.mrb[0].mxu0 %v795
        %v967 = vpop.f32.mrb[0].mxu0
        %v968 = vadd.f32 0.0, %v967
        %v969 = vpop.f32.mrb[0].mxu0
        %970 = vmatprep.mubr.f32.mxu0 0.0
        %971 = vmatmul.mubr.f32.gmra.mrb[0].mxu0 %v797
        %v972 = vpop.f32.mrb[0].mxu0
        %v973 = vadd.f32 0.0, %v972
        %v974 = vpop.f32.mrb[0].mxu0
        %975 = vdwg.mxu0
        %976 = vmatprep.subr.mxu0 0.0
        %977 = vmatpush1.msra.mxu0 %v717
        %978 = vmatprep.subr.mxu0 0.0
        %979 = vmatpush1.msra.mxu0 %v718
        %980 = vmatprep.subr.mxu0 0.0
        %981 = vmatpush1.msra.mxu0 %v719
        %982 = vmatprep.subr.mxu0 0.0
        %983 = vmatpush1.msra.mxu0 %v720
        %984 = vmatprep.subr.mxu0 0.0
        %985 = vmatpush1.msra.mxu0 %v721
        %986 = vmatprep.subr.mxu0 0.0
        %987 = vmatpush1.msra.mxu0 %v722
        %988 = vmatprep.subr.mxu0 0.0
        %989 = vmatpush1.msra.mxu0 %v723
        %990 = vmatprep.subr.mxu0 0.0
        %991 = vmatpush1.msra.mxu0 %v724
        %992 = vmatprep.subr.mxu0 0.0
        %993 = vmatpush1.msra.mxu0 %v725
        %994 = vmatprep.subr.mxu0 0.0
        %995 = vmatpush1.msra.mxu0 %v726
        %996 = vmatprep.subr.mxu0 0.0
        %997 = vmatpush1.msra.mxu0 %v727
        %998 = vmatprep.subr.mxu0 0.0
        %999 = vmatpush1.msra.mxu0 %v728
        %1000 = vmatprep.subr.mxu0 0.0
        %1001 = vmatpush1.msra.mxu0 %v729
        %1002 = vmatprep.subr.mxu0 0.0
        %1003 = vmatpush1.msra.mxu0 %v730
        %1004 = vmatprep.subr.mxu0 0.0
        %1005 = vmatpush1.msra.mxu0 %v731
        %1006 = vmatprep.subr.mxu0 0.0
        %1007 = vmatpush1.msra.mxu0 %v732
        %1008 = vmatprep.subr.mxu0 0.0
        %1009 = vmatpush1.msra.mxu0 0.0
        %1010 = vmatprep.subr.mxu0 0.0
        %1011 = vmatpush1.msra.mxu0 0.0
        %1012 = vmatprep.subr.mxu0 0.0
        %1013 = vmatpush1.msra.mxu0 0.0
        %1014 = vmatprep.subr.mxu0 0.0
        %1015 = vmatpush1.msra.mxu0 0.0
        %1016 = vmatprep.subr.mxu0 0.0
        %1017 = vmatpush1.msra.mxu0 0.0
        %1018 = vmatprep.subr.mxu0 0.0
        %1019 = vmatpush1.msra.mxu0 0.0
        %1020 = vmatprep.subr.mxu0 0.0
        %1021 = vmatpush1.msra.mxu0 0.0
        %1022 = vmatprep.subr.mxu0 0.0
        %1023 = vmatpush1.msra.mxu0 0.0
        %1024 = vmatprep.subr.mxu0 0.0
        %1025 = vmatpush1.msra.mxu0 0.0
        %1026 = vmatprep.subr.mxu0 0.0
        %1027 = vmatpush1.msra.mxu0 0.0
        %1028 = vmatprep.subr.mxu0 0.0
        %1029 = vmatpush1.msra.mxu0 0.0
        %1030 = vmatprep.subr.mxu0 0.0
        %1031 = vmatpush1.msra.mxu0 0.0
        %1032 = vmatprep.subr.mxu0 0.0
        %1033 = vmatpush1.msra.mxu0 0.0
        %1034 = vmatprep.subr.mxu0 0.0
        %1035 = vmatpush1.msra.mxu0 0.0
        %1036 = vmatprep.subr.mxu0 0.0
        %1037 = vmatpush1.msra.mxu0 0.0
        %1038 = vmatprep.subr.mxu0 0.0
        %1039 = vmatpush1.msra.mxu0 0.0
        %1040 = vmatprep.mubr.f32.mxu0 0.0
        %1041 = vmatmul.mubr.f32.gmra.mrb[0].mxu0 %v521
        %v1042 = vpop.f32.mrb[0].mxu0
        %v1043 = vadd.f32 %v898, %v1042
        %v1044 = vpop.f32.mrb[0].mxu0
        %1045 = vmatprep.mubr.f32.mxu0 0.0
        %1046 = vmatmul.mubr.f32.gmra.mrb[0].mxu0 %v522
        %v1047 = vpop.f32.mrb[0].mxu0
        %v1048 = vadd.f32 %v903, %v1047
        %v1049 = vpop.f32.mrb[0].mxu0
        %1050 = vmatprep.mubr.f32.mxu0 0.0
        %1051 = vmatmul.mubr.f32.gmra.mrb[0].mxu0 %v693
        %v1052 = vpop.f32.mrb[0].mxu0
        %v1053 = vadd.f32 %v908, %v1052
        %v1054 = vpop.f32.mrb[0].mxu0
        %1055 = vmatprep.mubr.f32.mxu0 0.0
        %1056 = vmatmul.mubr.f32.gmra.mrb[0].mxu0 %v694
        %v1057 = vpop.f32.mrb[0].mxu0
        %v1058 = vadd.f32 %v913, %v1057
        %v1059 = vpop.f32.mrb[0].mxu0
        %1060 = vmatprep.mubr.f32.mxu0 0.0
        %1061 = vmatmul.mubr.f32.gmra.mrb[0].mxu0 %v696
        %v1062 = vpop.f32.mrb[0].mxu0
        %v1063 = vadd.f32 %v918, %v1062
        %v1064 = vpop.f32.mrb[0].mxu0
        %1065 = vmatprep.mubr.f32.mxu0 0.0
        %1066 = vmatmul.mubr.f32.gmra.mrb[0].mxu0 %v697
        %v1067 = vpop.f32.mrb[0].mxu0
        %v1068 = vadd.f32 %v923, %v1067
        %v1069 = vpop.f32.mrb[0].mxu0
        %1070 = vmatprep.mubr.f32.mxu0 0.0
        %1071 = vmatmul.mubr.f32.gmra.mrb[0].mxu0 %v699
        %v1072 = vpop.f32.mrb[0].mxu0
        %v1073 = vadd.f32 %v928, %v1072
        %v1074 = vpop.f32.mrb[0].mxu0
        %1075 = vmatprep.mubr.f32.mxu0 0.0
        %1076 = vmatmul.mubr.f32.gmra.mrb[0].mxu0 %v700
        %v1077 = vpop.f32.mrb[0].mxu0
        %v1078 = vadd.f32 %v933, %v1077
        %v1079 = vpop.f32.mrb[0].mxu0
        %1080 = vmatprep.mubr.f32.mxu0 0.0
        %1081 = vmatmul.mubr.f32.gmra.mrb[0].mxu0 %v702
        %v1082 = vpop.f32.mrb[0].mxu0
        %v1083 = vadd.f32 %v938, %v1082
        %v1084 = vpop.f32.mrb[0].mxu0
        %1085 = vmatprep.mubr.f32.mxu0 0.0
        %1086 = vmatmul.mubr.f32.gmra.mrb[0].mxu0 %v703
        %v1087 = vpop.f32.mrb[0].mxu0
        %v1088 = vadd.f32 %v943, %v1087
        %v1089 = vpop.f32.mrb[0].mxu0
        %1090 = vmatprep.mubr.f32.mxu0 0.0
        %1091 = vmatmul.mubr.f32.gmra.mrb[0].mxu0 %v705
        %v1092 = vpop.f32.mrb[0].mxu0
        %v1093 = vadd.f32 %v948, %v1092
        %v1094 = vpop.f32.mrb[0].mxu0
        %1095 = vmatprep.mubr.f32.mxu0 0.0
        %1096 = vmatmul.mubr.f32.gmra.mrb[0].mxu0 %v706
        %v1097 = vpop.f32.mrb[0].mxu0
        %v1098 = vadd.f32 %v953, %v1097
        %v1099 = vpop.f32.mrb[0].mxu0
        %1100 = vmatprep.mubr.f32.mxu0 0.0
        %1101 = vmatmul.mubr.f32.gmra.mrb[0].mxu0 %v708
        %v1102 = vpop.f32.mrb[0].mxu0
        %v1103 = vadd.f32 %v958, %v1102
        %v1104 = vpop.f32.mrb[0].mxu0
        %1105 = vmatprep.mubr.f32.mxu0 0.0
        %1106 = vmatmul.mubr.f32.gmra.mrb[0].mxu0 %v709
        %v1107 = vpop.f32.mrb[0].mxu0
        %v1108 = vadd.f32 %v963, %v1107
        %v1109 = vpop.f32.mrb[0].mxu0
        %1110 = vmatprep.mubr.f32.mxu0 0.0
        %1111 = vmatmul.mubr.f32.gmra.mrb[0].mxu0 %v711
        %v1112 = vpop.f32.mrb[0].mxu0
        %v1113 = vadd.f32 %v968, %v1112
        %v1114 = vpop.f32.mrb[0].mxu0
        %1115 = vmatprep.mubr.f32.mxu0 0.0
        %1116 = vmatmul.mubr.f32.gmra.mrb[0].mxu0 %v712
        %v1117 = vpop.f32.mrb[0].mxu0
        %v1118 = vadd.f32 %v973, %v1117
        %v1119 = vpop.f32.mrb[0].mxu0
        %1120 = vdwg.mxu0
        %vm1121 = vcmask 1045504
        %v1122 = vrot.slane %v521, 2
        %v1123 = vrot.slane %v522, 2
        %v1124 = vsel %vm1121, %v1122, %v1123
        %v1125 = vrot.slane %v523, 2
        %v1126 = vsel %vm1121, %v1123, %v1125
        %v1127 = vrot.slane %v693, 2
        %v1128 = vrot.slane %v694, 2
        %v1129 = vsel %vm1121, %v1127, %v1128
        %v1130 = vrot.slane %v695, 2
        %v1131 = vsel %vm1121, %v1128, %v1130
        %v1132 = vrot.slane %v696, 2
        %v1133 = vrot.slane %v697, 2
        %v1134 = vsel %vm1121, %v1132, %v1133
        %v1135 = vrot.slane %v698, 2
        %v1136 = vsel %vm1121, %v1133, %v1135
        %v1137 = vrot.slane %v699, 2
        %v1138 = vrot.slane %v700, 2
        %v1139 = vsel %vm1121, %v1137, %v1138
        %v1140 = vrot.slane %v701, 2
        %v1141 = vsel %vm1121, %v1138, %v1140
        %v1142 = vrot.slane %v702, 2
        %v1143 = vrot.slane %v703, 2
        %v1144 = vsel %vm1121, %v1142, %v1143
        %v1145 = vrot.slane %v704, 2
        %v1146 = vsel %vm1121, %v1143, %v1145
        %v1147 = vrot.slane %v705, 2
        %v1148 = vrot.slane %v706, 2
        %v1149 = vsel %vm1121, %v1147, %v1148
        %v1150 = vrot.slane %v707, 2
        %v1151 = vsel %vm1121, %v1148, %v1150
        %v1152 = vrot.slane %v708, 2
        %v1153 = vrot.slane %v709, 2
        %v1154 = vsel %vm1121, %v1152, %v1153
        %v1155 = vrot.slane %v710, 2
        %v1156 = vsel %vm1121, %v1153, %v1155
        %v1157 = vrot.slane %v711, 2
        %v1158 = vrot.slane %v712, 2
        %v1159 = vsel %vm1121, %v1157, %v1158
        %v1160 = vrot.slane %v713, 2
        %v1161 = vsel %vm1121, %v1158, %v1160
        %s1178 = scalar_lea.vmem [#allocation10], 256
        %v1179 = vld [vmem:[%s1178] sm:$0xff]
        %v1180 = vld [vmem:[%s1178 + $0x8] sm:$0xff]
        %v1181 = vld [vmem:[%s1178 + $0x10] sm:$0xff]
        %v1182 = vld [vmem:[%s1178 + $0x18] sm:$0xff]
        %v1183 = vld [vmem:[%s1178 + $0x20] sm:$0xff]
        %v1184 = vld [vmem:[%s1178 + $0x28] sm:$0xff]
        %v1185 = vld [vmem:[%s1178 + $0x30] sm:$0xff]
        %v1186 = vld [vmem:[%s1178 + $0x38] sm:$0xff]
        %v1187 = vld [vmem:[%s1178 + $0x40] sm:$0xff]
        %v1188 = vld [vmem:[%s1178 + $0x48] sm:$0xff]
        %v1189 = vld [vmem:[%s1178 + $0x50] sm:$0xff]
        %v1190 = vld [vmem:[%s1178 + $0x58] sm:$0xff]
        %v1191 = vld [vmem:[%s1178 + $0x60] sm:$0xff]
        %v1192 = vld [vmem:[%s1178 + $0x68] sm:$0xff]
        %v1193 = vld [vmem:[%s1178 + $0x70] sm:$0xff]
        %v1194 = vld [vmem:[%s1178 + $0x78] sm:$0xff]
        %1195 = vmatprep.subr.mxu0 0.0
        %1196 = vmatpush1.msra.mxu0 %v1179
        %1197 = vmatprep.subr.mxu0 0.0
        %1198 = vmatpush1.msra.mxu0 %v1180
        %1199 = vmatprep.subr.mxu0 0.0
        %1200 = vmatpush1.msra.mxu0 %v1181
        %1201 = vmatprep.subr.mxu0 0.0
        %1202 = vmatpush1.msra.mxu0 %v1182
        %1203 = vmatprep.subr.mxu0 0.0
        %1204 = vmatpush1.msra.mxu0 %v1183
        %1205 = vmatprep.subr.mxu0 0.0
        %1206 = vmatpush1.msra.mxu0 %v1184
        %1207 = vmatprep.subr.mxu0 0.0
        %1208 = vmatpush1.msra.mxu0 %v1185
        %1209 = vmatprep.subr.mxu0 0.0
        %1210 = vmatpush1.msra.mxu0 %v1186
        %1211 = vmatprep.subr.mxu0 0.0
        %1212 = vmatpush1.msra.mxu0 %v1187
        %1213 = vmatprep.subr.mxu0 0.0
        %1214 = vmatpush1.msra.mxu0 %v1188
        %1215 = vmatprep.subr.mxu0 0.0
        %1216 = vmatpush1.msra.mxu0 %v1189
        %1217 = vmatprep.subr.mxu0 0.0
        %1218 = vmatpush1.msra.mxu0 %v1190
        %1219 = vmatprep.subr.mxu0 0.0
        %1220 = vmatpush1.msra.mxu0 %v1191
        %1221 = vmatprep.subr.mxu0 0.0
        %1222 = vmatpush1.msra.mxu0 %v1192
        %1223 = vmatprep.subr.mxu0 0.0
        %1224 = vmatpush1.msra.mxu0 %v1193
        %1225 = vmatprep.subr.mxu0 0.0
        %1226 = vmatpush1.msra.mxu0 %v1194
        %1227 = vmatprep.subr.mxu0 0.0
        %1228 = vmatpush1.msra.mxu0 0.0
        %1229 = vmatprep.subr.mxu0 0.0
        %1230 = vmatpush1.msra.mxu0 0.0
        %1231 = vmatprep.subr.mxu0 0.0
        %1232 = vmatpush1.msra.mxu0 0.0
        %1233 = vmatprep.subr.mxu0 0.0
        %1234 = vmatpush1.msra.mxu0 0.0
        %1235 = vmatprep.subr.mxu0 0.0
        %1236 = vmatpush1.msra.mxu0 0.0
        %1237 = vmatprep.subr.mxu0 0.0
        %1238 = vmatpush1.msra.mxu0 0.0
        %1239 = vmatprep.subr.mxu0 0.0
        %1240 = vmatpush1.msra.mxu0 0.0
        %1241 = vmatprep.subr.mxu0 0.0
        %1242 = vmatpush1.msra.mxu0 0.0
        %1243 = vmatprep.subr.mxu0 0.0
        %1244 = vmatpush1.msra.mxu0 0.0
        %1245 = vmatprep.subr.mxu0 0.0
        %1246 = vmatpush1.msra.mxu0 0.0
        %1247 = vmatprep.subr.mxu0 0.0
        %1248 = vmatpush1.msra.mxu0 0.0
        %1249 = vmatprep.subr.mxu0 0.0
        %1250 = vmatpush1.msra.mxu0 0.0
        %1251 = vmatprep.subr.mxu0 0.0
        %1252 = vmatpush1.msra.mxu0 0.0
        %1253 = vmatprep.subr.mxu0 0.0
        %1254 = vmatpush1.msra.mxu0 0.0
        %1255 = vmatprep.subr.mxu0 0.0
        %1256 = vmatpush1.msra.mxu0 0.0
        %1257 = vmatprep.subr.mxu0 0.0
        %1258 = vmatpush1.msra.mxu0 0.0
        %1259 = vmatprep.mubr.f32.mxu0 0.0
        %1260 = vmatmul.mubr.f32.gmra.mrb[0].mxu0 %v1124
        %v1261 = vpop.f32.mrb[0].mxu0
        %v1262 = vadd.f32 0.0, %v1261
        %v1263 = vpop.f32.mrb[0].mxu0
        %1264 = vmatprep.mubr.f32.mxu0 0.0
        %1265 = vmatmul.mubr.f32.gmra.mrb[0].mxu0 %v1126
        %v1266 = vpop.f32.mrb[0].mxu0
        %v1267 = vadd.f32 0.0, %v1266
        %v1268 = vpop.f32.mrb[0].mxu0
        %1269 = vmatprep.mubr.f32.mxu0 0.0
        %1270 = vmatmul.mubr.f32.gmra.mrb[0].mxu0 %v1129
        %v1271 = vpop.f32.mrb[0].mxu0
        %v1272 = vadd.f32 0.0, %v1271
        %v1273 = vpop.f32.mrb[0].mxu0
        %1274 = vmatprep.mubr.f32.mxu0 0.0
        %1275 = vmatmul.mubr.f32.gmra.mrb[0].mxu0 %v1131
        %v1276 = vpop.f32.mrb[0].mxu0
        %v1277 = vadd.f32 0.0, %v1276
        %v1278 = vpop.f32.mrb[0].mxu0
        %1279 = vmatprep.mubr.f32.mxu0 0.0
        %1280 = vmatmul.mubr.f32.gmra.mrb[0].mxu0 %v1134
        %v1281 = vpop.f32.mrb[0].mxu0
        %v1282 = vadd.f32 0.0, %v1281
        %v1283 = vpop.f32.mrb[0].mxu0
        %1284 = vmatprep.mubr.f32.mxu0 0.0
        %1285 = vmatmul.mubr.f32.gmra.mrb[0].mxu0 %v1136
        %v1286 = vpop.f32.mrb[0].mxu0
        %v1287 = vadd.f32 0.0, %v1286
        %v1288 = vpop.f32.mrb[0].mxu0
        %1289 = vmatprep.mubr.f32.mxu0 0.0
        %1290 = vmatmul.mubr.f32.gmra.mrb[0].mxu0 %v1139
        %v1291 = vpop.f32.mrb[0].mxu0
        %v1292 = vadd.f32 0.0, %v1291
        %v1293 = vpop.f32.mrb[0].mxu0
        %1294 = vmatprep.mubr.f32.mxu0 0.0
        %1295 = vmatmul.mubr.f32.gmra.mrb[0].mxu0 %v1141
        %v1296 = vpop.f32.mrb[0].mxu0
        %v1297 = vadd.f32 0.0, %v1296
        %v1298 = vpop.f32.mrb[0].mxu0
        %1299 = vmatprep.mubr.f32.mxu0 0.0
        %1300 = vmatmul.mubr.f32.gmra.mrb[0].mxu0 %v1144
        %v1301 = vpop.f32.mrb[0].mxu0
        %v1302 = vadd.f32 0.0, %v1301
        %v1303 = vpop.f32.mrb[0].mxu0
        %1304 = vmatprep.mubr.f32.mxu0 0.0
        %1305 = vmatmul.mubr.f32.gmra.mrb[0].mxu0 %v1146
        %v1306 = vpop.f32.mrb[0].mxu0
        %v1307 = vadd.f32 0.0, %v1306
        %v1308 = vpop.f32.mrb[0].mxu0
        %1309 = vmatprep.mubr.f32.mxu0 0.0
        %1310 = vmatmul.mubr.f32.gmra.mrb[0].mxu0 %v1149
        %v1311 = vpop.f32.mrb[0].mxu0
        %v1312 = vadd.f32 0.0, %v1311
        %v1313 = vpop.f32.mrb[0].mxu0
        %1314 = vmatprep.mubr.f32.mxu0 0.0
        %1315 = vmatmul.mubr.f32.gmra.mrb[0].mxu0 %v1151
        %v1316 = vpop.f32.mrb[0].mxu0
        %v1317 = vadd.f32 0.0, %v1316
        %v1318 = vpop.f32.mrb[0].mxu0
        %1319 = vmatprep.mubr.f32.mxu0 0.0
        %1320 = vmatmul.mubr.f32.gmra.mrb[0].mxu0 %v1154
        %v1321 = vpop.f32.mrb[0].mxu0
        %v1322 = vadd.f32 0.0, %v1321
        %v1323 = vpop.f32.mrb[0].mxu0
        %1324 = vmatprep.mubr.f32.mxu0 0.0
        %1325 = vmatmul.mubr.f32.gmra.mrb[0].mxu0 %v1156
        %v1326 = vpop.f32.mrb[0].mxu0
        %v1327 = vadd.f32 0.0, %v1326
        %v1328 = vpop.f32.mrb[0].mxu0
        %1329 = vmatprep.mubr.f32.mxu0 0.0
        %1330 = vmatmul.mubr.f32.gmra.mrb[0].mxu0 %v1159
        %v1331 = vpop.f32.mrb[0].mxu0
        %v1332 = vadd.f32 0.0, %v1331
        %v1333 = vpop.f32.mrb[0].mxu0
        %1334 = vmatprep.mubr.f32.mxu0 0.0
        %1335 = vmatmul.mubr.f32.gmra.mrb[0].mxu0 %v1161
        %v1336 = vpop.f32.mrb[0].mxu0
        %v1337 = vadd.f32 0.0, %v1336
        %v1338 = vpop.f32.mrb[0].mxu0
        %1339 = vdwg.mxu0
        %v1340 = vadd.f32 %v1043, %v1262
        %v1341 = vadd.f32 %v1048, %v1267
        %v1342 = vadd.f32 %v1053, %v1272
        %v1343 = vadd.f32 %v1058, %v1277
        %v1344 = vadd.f32 %v1063, %v1282
        %v1345 = vadd.f32 %v1068, %v1287
        %v1346 = vadd.f32 %v1073, %v1292
        %v1347 = vadd.f32 %v1078, %v1297
        %v1348 = vadd.f32 %v1083, %v1302
        %v1349 = vadd.f32 %v1088, %v1307
        %v1350 = vadd.f32 %v1093, %v1312
        %v1351 = vadd.f32 %v1098, %v1317
        %v1352 = vadd.f32 %v1103, %v1322
        %v1353 = vadd.f32 %v1108, %v1327
        %v1354 = vadd.f32 %v1113, %v1332
        %v1355 = vadd.f32 %v1118, %v1337
        %s1356 = scalar_lea.vmem [#allocation10], 384
        %v1357 = vld [vmem:[%s1356] sm:$0xff]
        %v1358 = vld [vmem:[%s1356 + $0x8] sm:$0xff]
        %v1359 = vld [vmem:[%s1356 + $0x10] sm:$0xff]
        %v1360 = vld [vmem:[%s1356 + $0x18] sm:$0xff]
        %v1361 = vld [vmem:[%s1356 + $0x20] sm:$0xff]
        %v1362 = vld [vmem:[%s1356 + $0x28] sm:$0xff]
        %v1363 = vld [vmem:[%s1356 + $0x30] sm:$0xff]
        %v1364 = vld [vmem:[%s1356 + $0x38] sm:$0xff]
        %v1365 = vld [vmem:[%s1356 + $0x40] sm:$0xff]
        %v1366 = vld [vmem:[%s1356 + $0x48] sm:$0xff]
        %v1367 = vld [vmem:[%s1356 + $0x50] sm:$0xff]
        %v1368 = vld [vmem:[%s1356 + $0x58] sm:$0xff]
        %v1369 = vld [vmem:[%s1356 + $0x60] sm:$0xff]
        %v1370 = vld [vmem:[%s1356 + $0x68] sm:$0xff]
        %v1371 = vld [vmem:[%s1356 + $0x70] sm:$0xff]
        %v1372 = vld [vmem:[%s1356 + $0x78] sm:$0xff]
        %1373 = vmatprep.subr.mxu0 0.0
        %1374 = vmatpush1.msra.mxu0 %v1357
        %1375 = vmatprep.subr.mxu0 0.0
        %1376 = vmatpush1.msra.mxu0 %v1358
        %1377 = vmatprep.subr.mxu0 0.0
        %1378 = vmatpush1.msra.mxu0 %v1359
        %1379 = vmatprep.subr.mxu0 0.0
        %1380 = vmatpush1.msra.mxu0 %v1360
        %1381 = vmatprep.subr.mxu0 0.0
        %1382 = vmatpush1.msra.mxu0 %v1361
        %1383 = vmatprep.subr.mxu0 0.0
        %1384 = vmatpush1.msra.mxu0 %v1362
        %1385 = vmatprep.subr.mxu0 0.0
        %1386 = vmatpush1.msra.mxu0 %v1363
        %1387 = vmatprep.subr.mxu0 0.0
        %1388 = vmatpush1.msra.mxu0 %v1364
        %1389 = vmatprep.subr.mxu0 0.0
        %1390 = vmatpush1.msra.mxu0 %v1365
        %1391 = vmatprep.subr.mxu0 0.0
        %1392 = vmatpush1.msra.mxu0 %v1366
        %1393 = vmatprep.subr.mxu0 0.0
        %1394 = vmatpush1.msra.mxu0 %v1367
        %1395 = vmatprep.subr.mxu0 0.0
        %1396 = vmatpush1.msra.mxu0 %v1368
        %1397 = vmatprep.subr.mxu0 0.0
        %1398 = vmatpush1.msra.mxu0 %v1369
        %1399 = vmatprep.subr.mxu0 0.0
        %1400 = vmatpush1.msra.mxu0 %v1370
        %1401 = vmatprep.subr.mxu0 0.0
        %1402 = vmatpush1.msra.mxu0 %v1371
        %1403 = vmatprep.subr.mxu0 0.0
        %1404 = vmatpush1.msra.mxu0 %v1372
        %1405 = vmatprep.subr.mxu0 0.0
        %1406 = vmatpush1.msra.mxu0 0.0
        %1407 = vmatprep.subr.mxu0 0.0
        %1408 = vmatpush1.msra.mxu0 0.0
        %1409 = vmatprep.subr.mxu0 0.0
        %1410 = vmatpush1.msra.mxu0 0.0
        %1411 = vmatprep.subr.mxu0 0.0
        %1412 = vmatpush1.msra.mxu0 0.0
        %1413 = vmatprep.subr.mxu0 0.0
        %1414 = vmatpush1.msra.mxu0 0.0
        %1415 = vmatprep.subr.mxu0 0.0
        %1416 = vmatpush1.msra.mxu0 0.0
        %1417 = vmatprep.subr.mxu0 0.0
        %1418 = vmatpush1.msra.mxu0 0.0
        %1419 = vmatprep.subr.mxu0 0.0
        %1420 = vmatpush1.msra.mxu0 0.0
        %1421 = vmatprep.subr.mxu0 0.0
        %1422 = vmatpush1.msra.mxu0 0.0
        %1423 = vmatprep.subr.mxu0 0.0
        %1424 = vmatpush1.msra.mxu0 0.0
        %1425 = vmatprep.subr.mxu0 0.0
        %1426 = vmatpush1.msra.mxu0 0.0
        %1427 = vmatprep.subr.mxu0 0.0
        %1428 = vmatpush1.msra.mxu0 0.0
        %1429 = vmatprep.subr.mxu0 0.0
        %1430 = vmatpush1.msra.mxu0 0.0
        %1431 = vmatprep.subr.mxu0 0.0
        %1432 = vmatpush1.msra.mxu0 0.0
        %1433 = vmatprep.subr.mxu0 0.0
        %1434 = vmatpush1.msra.mxu0 0.0
        %1435 = vmatprep.subr.mxu0 0.0
        %1436 = vmatpush1.msra.mxu0 0.0
        %1437 = vmatprep.mubr.f32.mxu0 0.0
        %1438 = vmatmul.mubr.f32.gmra.mrb[0].mxu0 %v693
        %v1439 = vpop.f32.mrb[0].mxu0
        %v1440 = vadd.f32 0.0, %v1439
        %v1441 = vpop.f32.mrb[0].mxu0
        %1442 = vmatprep.mubr.f32.mxu0 0.0
        %1443 = vmatmul.mubr.f32.gmra.mrb[0].mxu0 %v694
        %v1444 = vpop.f32.mrb[0].mxu0
        %v1445 = vadd.f32 0.0, %v1444
        %v1446 = vpop.f32.mrb[0].mxu0
        %1447 = vmatprep.mubr.f32.mxu0 0.0
        %1448 = vmatmul.mubr.f32.gmra.mrb[0].mxu0 %v696
        %v1449 = vpop.f32.mrb[0].mxu0
        %v1450 = vadd.f32 0.0, %v1449
        %v1451 = vpop.f32.mrb[0].mxu0
        %1452 = vmatprep.mubr.f32.mxu0 0.0
        %1453 = vmatmul.mubr.f32.gmra.mrb[0].mxu0 %v697
        %v1454 = vpop.f32.mrb[0].mxu0
        %v1455 = vadd.f32 0.0, %v1454
        %v1456 = vpop.f32.mrb[0].mxu0
        %1457 = vmatprep.mubr.f32.mxu0 0.0
        %1458 = vmatmul.mubr.f32.gmra.mrb[0].mxu0 %v699
        %v1459 = vpop.f32.mrb[0].mxu0
        %v1460 = vadd.f32 0.0, %v1459
        %v1461 = vpop.f32.mrb[0].mxu0
        %1462 = vmatprep.mubr.f32.mxu0 0.0
        %1463 = vmatmul.mubr.f32.gmra.mrb[0].mxu0 %v700
        %v1464 = vpop.f32.mrb[0].mxu0
        %v1465 = vadd.f32 0.0, %v1464
        %v1466 = vpop.f32.mrb[0].mxu0
        %1467 = vmatprep.mubr.f32.mxu0 0.0
        %1468 = vmatmul.mubr.f32.gmra.mrb[0].mxu0 %v702
        %v1469 = vpop.f32.mrb[0].mxu0
        %v1470 = vadd.f32 0.0, %v1469
        %v1471 = vpop.f32.mrb[0].mxu0
        %1472 = vmatprep.mubr.f32.mxu0 0.0
        %1473 = vmatmul.mubr.f32.gmra.mrb[0].mxu0 %v703
        %v1474 = vpop.f32.mrb[0].mxu0
        %v1475 = vadd.f32 0.0, %v1474
        %v1476 = vpop.f32.mrb[0].mxu0
        %1477 = vmatprep.mubr.f32.mxu0 0.0
        %1478 = vmatmul.mubr.f32.gmra.mrb[0].mxu0 %v705
        %v1479 = vpop.f32.mrb[0].mxu0
        %v1480 = vadd.f32 0.0, %v1479
        %v1481 = vpop.f32.mrb[0].mxu0
        %1482 = vmatprep.mubr.f32.mxu0 0.0
        %1483 = vmatmul.mubr.f32.gmra.mrb[0].mxu0 %v706
        %v1484 = vpop.f32.mrb[0].mxu0
        %v1485 = vadd.f32 0.0, %v1484
        %v1486 = vpop.f32.mrb[0].mxu0
        %1487 = vmatprep.mubr.f32.mxu0 0.0
        %1488 = vmatmul.mubr.f32.gmra.mrb[0].mxu0 %v708
        %v1489 = vpop.f32.mrb[0].mxu0
        %v1490 = vadd.f32 0.0, %v1489
        %v1491 = vpop.f32.mrb[0].mxu0
        %1492 = vmatprep.mubr.f32.mxu0 0.0
        %1493 = vmatmul.mubr.f32.gmra.mrb[0].mxu0 %v709
        %v1494 = vpop.f32.mrb[0].mxu0
        %v1495 = vadd.f32 0.0, %v1494
        %v1496 = vpop.f32.mrb[0].mxu0
        %1497 = vmatprep.mubr.f32.mxu0 0.0
        %1498 = vmatmul.mubr.f32.gmra.mrb[0].mxu0 %v711
        %v1499 = vpop.f32.mrb[0].mxu0
        %v1500 = vadd.f32 0.0, %v1499
        %v1501 = vpop.f32.mrb[0].mxu0
        %1502 = vmatprep.mubr.f32.mxu0 0.0
        %1503 = vmatmul.mubr.f32.gmra.mrb[0].mxu0 %v712
        %v1504 = vpop.f32.mrb[0].mxu0
        %v1505 = vadd.f32 0.0, %v1504
        %v1506 = vpop.f32.mrb[0].mxu0
        %1507 = vmatprep.mubr.f32.mxu0 0.0
        %1508 = vmatmul.mubr.f32.gmra.mrb[0].mxu0 %v714
        %v1509 = vpop.f32.mrb[0].mxu0
        %v1510 = vadd.f32 0.0, %v1509
        %v1511 = vpop.f32.mrb[0].mxu0
        %1512 = vmatprep.mubr.f32.mxu0 0.0
        %1513 = vmatmul.mubr.f32.gmra.mrb[0].mxu0 %v715
        %v1514 = vpop.f32.mrb[0].mxu0
        %v1515 = vadd.f32 0.0, %v1514
        %v1516 = vpop.f32.mrb[0].mxu0
        %1517 = vdwg.mxu0
        %v1518 = vadd.f32 %v1340, %v1440
        %v1519 = vadd.f32 %v1341, %v1445
        %v1520 = vadd.f32 %v1342, %v1450
        %v1521 = vadd.f32 %v1343, %v1455
        %v1522 = vadd.f32 %v1344, %v1460
        %v1523 = vadd.f32 %v1345, %v1465
        %v1524 = vadd.f32 %v1346, %v1470
        %v1525 = vadd.f32 %v1347, %v1475
        %v1526 = vadd.f32 %v1348, %v1480
        %v1527 = vadd.f32 %v1349, %v1485
        %v1528 = vadd.f32 %v1350, %v1490
        %v1529 = vadd.f32 %v1351, %v1495
        %v1530 = vadd.f32 %v1352, %v1500
        %v1531 = vadd.f32 %v1353, %v1505
        %v1532 = vadd.f32 %v1354, %v1510
        %v1533 = vadd.f32 %v1355, %v1515
        %v1537 = vrot.slane %v714, 1
        %v1538 = vrot.slane %v715, 1
        %v1539 = vsel %vm757, %v1537, %v1538
        %v1540 = vrot.slane %v716, 1
        %v1541 = vsel %vm757, %v1538, %v1540
        %s1544 = scalar_lea.vmem [#allocation10], 512
        %v1545 = vld [vmem:[%s1544] sm:$0xff]
        %v1546 = vld [vmem:[%s1544 + $0x8] sm:$0xff]
        %v1547 = vld [vmem:[%s1544 + $0x10] sm:$0xff]
        %v1548 = vld [vmem:[%s1544 + $0x18] sm:$0xff]
        %v1549 = vld [vmem:[%s1544 + $0x20] sm:$0xff]
        %v1550 = vld [vmem:[%s1544 + $0x28] sm:$0xff]
        %v1551 = vld [vmem:[%s1544 + $0x30] sm:$0xff]
        %v1552 = vld [vmem:[%s1544 + $0x38] sm:$0xff]
        %v1553 = vld [vmem:[%s1544 + $0x40] sm:$0xff]
        %v1554 = vld [vmem:[%s1544 + $0x48] sm:$0xff]
        %v1555 = vld [vmem:[%s1544 + $0x50] sm:$0xff]
        %v1556 = vld [vmem:[%s1544 + $0x58] sm:$0xff]
        %v1557 = vld [vmem:[%s1544 + $0x60] sm:$0xff]
        %v1558 = vld [vmem:[%s1544 + $0x68] sm:$0xff]
        %v1559 = vld [vmem:[%s1544 + $0x70] sm:$0xff]
        %v1560 = vld [vmem:[%s1544 + $0x78] sm:$0xff]
        %1561 = vmatprep.subr.mxu0 0.0
        %1562 = vmatpush1.msra.mxu0 %v1545
        %1563 = vmatprep.subr.mxu0 0.0
        %1564 = vmatpush1.msra.mxu0 %v1546
        %1565 = vmatprep.subr.mxu0 0.0
        %1566 = vmatpush1.msra.mxu0 %v1547
        %1567 = vmatprep.subr.mxu0 0.0
        %1568 = vmatpush1.msra.mxu0 %v1548
        %1569 = vmatprep.subr.mxu0 0.0
        %1570 = vmatpush1.msra.mxu0 %v1549
        %1571 = vmatprep.subr.mxu0 0.0
        %1572 = vmatpush1.msra.mxu0 %v1550
        %1573 = vmatprep.subr.mxu0 0.0
        %1574 = vmatpush1.msra.mxu0 %v1551
        %1575 = vmatprep.subr.mxu0 0.0
        %1576 = vmatpush1.msra.mxu0 %v1552
        %1577 = vmatprep.subr.mxu0 0.0
        %1578 = vmatpush1.msra.mxu0 %v1553
        %1579 = vmatprep.subr.mxu0 0.0
        %1580 = vmatpush1.msra.mxu0 %v1554
        %1581 = vmatprep.subr.mxu0 0.0
        %1582 = vmatpush1.msra.mxu0 %v1555
        %1583 = vmatprep.subr.mxu0 0.0
        %1584 = vmatpush1.msra.mxu0 %v1556
        %1585 = vmatprep.subr.mxu0 0.0
        %1586 = vmatpush1.msra.mxu0 %v1557
        %1587 = vmatprep.subr.mxu0 0.0
        %1588 = vmatpush1.msra.mxu0 %v1558
        %1589 = vmatprep.subr.mxu0 0.0
        %1590 = vmatpush1.msra.mxu0 %v1559
        %1591 = vmatprep.subr.mxu0 0.0
        %1592 = vmatpush1.msra.mxu0 %v1560
        %1593 = vmatprep.subr.mxu0 0.0
        %1594 = vmatpush1.msra.mxu0 0.0
        %1595 = vmatprep.subr.mxu0 0.0
        %1596 = vmatpush1.msra.mxu0 0.0
        %1597 = vmatprep.subr.mxu0 0.0
        %1598 = vmatpush1.msra.mxu0 0.0
        %1599 = vmatprep.subr.mxu0 0.0
        %1600 = vmatpush1.msra.mxu0 0.0
        %1601 = vmatprep.subr.mxu0 0.0
        %1602 = vmatpush1.msra.mxu0 0.0
        %1603 = vmatprep.subr.mxu0 0.0
        %1604 = vmatpush1.msra.mxu0 0.0
        %1605 = vmatprep.subr.mxu0 0.0
        %1606 = vmatpush1.msra.mxu0 0.0
        %1607 = vmatprep.subr.mxu0 0.0
        %1608 = vmatpush1.msra.mxu0 0.0
        %1609 = vmatprep.subr.mxu0 0.0
        %1610 = vmatpush1.msra.mxu0 0.0
        %1611 = vmatprep.subr.mxu0 0.0
        %1612 = vmatpush1.msra.mxu0 0.0
        %1613 = vmatprep.subr.mxu0 0.0
        %1614 = vmatpush1.msra.mxu0 0.0
        %1615 = vmatprep.subr.mxu0 0.0
        %1616 = vmatpush1.msra.mxu0 0.0
        %1617 = vmatprep.subr.mxu0 0.0
        %1618 = vmatpush1.msra.mxu0 0.0
        %1619 = vmatprep.subr.mxu0 0.0
        %1620 = vmatpush1.msra.mxu0 0.0
        %1621 = vmatprep.subr.mxu0 0.0
        %1622 = vmatpush1.msra.mxu0 0.0
        %1623 = vmatprep.subr.mxu0 0.0
        %1624 = vmatpush1.msra.mxu0 0.0
        %1625 = vmatprep.mubr.f32.mxu0 0.0
        %1626 = vmatmul.mubr.f32.gmra.mrb[0].mxu0 %v765
        %v1627 = vpop.f32.mrb[0].mxu0
        %v1628 = vadd.f32 0.0, %v1627
        %v1629 = vpop.f32.mrb[0].mxu0
        %1630 = vmatprep.mubr.f32.mxu0 0.0
        %1631 = vmatmul.mubr.f32.gmra.mrb[0].mxu0 %v767
        %v1632 = vpop.f32.mrb[0].mxu0
        %v1633 = vadd.f32 0.0, %v1632
        %v1634 = vpop.f32.mrb[0].mxu0
        %1635 = vmatprep.mubr.f32.mxu0 0.0
        %1636 = vmatmul.mubr.f32.gmra.mrb[0].mxu0 %v770
        %v1637 = vpop.f32.mrb[0].mxu0
        %v1638 = vadd.f32 0.0, %v1637
        %v1639 = vpop.f32.mrb[0].mxu0
        %1640 = vmatprep.mubr.f32.mxu0 0.0
        %1641 = vmatmul.mubr.f32.gmra.mrb[0].mxu0 %v772
        %v1642 = vpop.f32.mrb[0].mxu0
        %v1643 = vadd.f32 0.0, %v1642
        %v1644 = vpop.f32.mrb[0].mxu0
        %1645 = vmatprep.mubr.f32.mxu0 0.0
        %1646 = vmatmul.mubr.f32.gmra.mrb[0].mxu0 %v775
        %v1647 = vpop.f32.mrb[0].mxu0
        %v1648 = vadd.f32 0.0, %v1647
        %v1649 = vpop.f32.mrb[0].mxu0
        %1650 = vmatprep.mubr.f32.mxu0 0.0
        %1651 = vmatmul.mubr.f32.gmra.mrb[0].mxu0 %v777
        %v1652 = vpop.f32.mrb[0].mxu0
        %v1653 = vadd.f32 0.0, %v1652
        %v1654 = vpop.f32.mrb[0].mxu0
        %1655 = vmatprep.mubr.f32.mxu0 0.0
        %1656 = vmatmul.mubr.f32.gmra.mrb[0].mxu0 %v780
        %v1657 = vpop.f32.mrb[0].mxu0
        %v1658 = vadd.f32 0.0, %v1657
        %v1659 = vpop.f32.mrb[0].mxu0
        %1660 = vmatprep.mubr.f32.mxu0 0.0
        %1661 = vmatmul.mubr.f32.gmra.mrb[0].mxu0 %v782
        %v1662 = vpop.f32.mrb[0].mxu0
        %v1663 = vadd.f32 0.0, %v1662
        %v1664 = vpop.f32.mrb[0].mxu0
        %1665 = vmatprep.mubr.f32.mxu0 0.0
        %1666 = vmatmul.mubr.f32.gmra.mrb[0].mxu0 %v785
        %v1667 = vpop.f32.mrb[0].mxu0
        %v1668 = vadd.f32 0.0, %v1667
        %v1669 = vpop.f32.mrb[0].mxu0
        %1670 = vmatprep.mubr.f32.mxu0 0.0
        %1671 = vmatmul.mubr.f32.gmra.mrb[0].mxu0 %v787
        %v1672 = vpop.f32.mrb[0].mxu0
        %v1673 = vadd.f32 0.0, %v1672
        %v1674 = vpop.f32.mrb[0].mxu0
        %1675 = vmatprep.mubr.f32.mxu0 0.0
        %1676 = vmatmul.mubr.f32.gmra.mrb[0].mxu0 %v790
        %v1677 = vpop.f32.mrb[0].mxu0
        %v1678 = vadd.f32 0.0, %v1677
        %v1679 = vpop.f32.mrb[0].mxu0
        %1680 = vmatprep.mubr.f32.mxu0 0.0
        %1681 = vmatmul.mubr.f32.gmra.mrb[0].mxu0 %v792
        %v1682 = vpop.f32.mrb[0].mxu0
        %v1683 = vadd.f32 0.0, %v1682
        %v1684 = vpop.f32.mrb[0].mxu0
        %1685 = vmatprep.mubr.f32.mxu0 0.0
        %1686 = vmatmul.mubr.f32.gmra.mrb[0].mxu0 %v795
        %v1687 = vpop.f32.mrb[0].mxu0
        %v1688 = vadd.f32 0.0, %v1687
        %v1689 = vpop.f32.mrb[0].mxu0
        %1690 = vmatprep.mubr.f32.mxu0 0.0
        %1691 = vmatmul.mubr.f32.gmra.mrb[0].mxu0 %v797
        %v1692 = vpop.f32.mrb[0].mxu0
        %v1693 = vadd.f32 0.0, %v1692
        %v1694 = vpop.f32.mrb[0].mxu0
        %1695 = vmatprep.mubr.f32.mxu0 0.0
        %1696 = vmatmul.mubr.f32.gmra.mrb[0].mxu0 %v1539
        %v1697 = vpop.f32.mrb[0].mxu0
        %v1698 = vadd.f32 0.0, %v1697
        %v1699 = vpop.f32.mrb[0].mxu0
        %1700 = vmatprep.mubr.f32.mxu0 0.0
        %1701 = vmatmul.mubr.f32.gmra.mrb[0].mxu0 %v1541
        %v1702 = vpop.f32.mrb[0].mxu0
        %v1703 = vadd.f32 0.0, %v1702
        %v1704 = vpop.f32.mrb[0].mxu0
        %1705 = vdwg.mxu0
        %v1706 = vadd.f32 %v1518, %v1628
        %v1707 = vadd.f32 %v1519, %v1633
        %v1708 = vadd.f32 %v1520, %v1638
        %v1709 = vadd.f32 %v1521, %v1643
        %v1710 = vadd.f32 %v1522, %v1648
        %v1711 = vadd.f32 %v1523, %v1653
        %v1712 = vadd.f32 %v1524, %v1658
        %v1713 = vadd.f32 %v1525, %v1663
        %v1714 = vadd.f32 %v1526, %v1668
        %v1715 = vadd.f32 %v1527, %v1673
        %v1716 = vadd.f32 %v1528, %v1678
        %v1717 = vadd.f32 %v1529, %v1683
        %v1718 = vadd.f32 %v1530, %v1688
        %v1719 = vadd.f32 %v1531, %v1693
        %v1720 = vadd.f32 %v1532, %v1698
        %v1721 = vadd.f32 %v1533, %v1703
        %v1722 = vrot.slane %v714, 2
        %v1723 = vrot.slane %v715, 2
        %v1724 = vsel %vm1121, %v1722, %v1723
        %v1725 = vrot.slane %v716, 2
        %v1726 = vsel %vm1121, %v1723, %v1725
        %s1729 = scalar_lea.vmem [#allocation10], 640
        %v1730 = vld [vmem:[%s1729] sm:$0xff]
        %v1731 = vld [vmem:[%s1729 + $0x8] sm:$0xff]
        %v1732 = vld [vmem:[%s1729 + $0x10] sm:$0xff]
        %v1733 = vld [vmem:[%s1729 + $0x18] sm:$0xff]
        %v1734 = vld [vmem:[%s1729 + $0x20] sm:$0xff]
        %v1735 = vld [vmem:[%s1729 + $0x28] sm:$0xff]
        %v1736 = vld [vmem:[%s1729 + $0x30] sm:$0xff]
        %v1737 = vld [vmem:[%s1729 + $0x38] sm:$0xff]
        %v1738 = vld [vmem:[%s1729 + $0x40] sm:$0xff]
        %v1739 = vld [vmem:[%s1729 + $0x48] sm:$0xff]
        %v1740 = vld [vmem:[%s1729 + $0x50] sm:$0xff]
        %v1741 = vld [vmem:[%s1729 + $0x58] sm:$0xff]
        %v1742 = vld [vmem:[%s1729 + $0x60] sm:$0xff]
        %v1743 = vld [vmem:[%s1729 + $0x68] sm:$0xff]
        %v1744 = vld [vmem:[%s1729 + $0x70] sm:$0xff]
        %v1745 = vld [vmem:[%s1729 + $0x78] sm:$0xff]
        %1746 = vmatprep.subr.mxu0 0.0
        %1747 = vmatpush1.msra.mxu0 %v1730
        %1748 = vmatprep.subr.mxu0 0.0
        %1749 = vmatpush1.msra.mxu0 %v1731
        %1750 = vmatprep.subr.mxu0 0.0
        %1751 = vmatpush1.msra.mxu0 %v1732
        %1752 = vmatprep.subr.mxu0 0.0
        %1753 = vmatpush1.msra.mxu0 %v1733
        %1754 = vmatprep.subr.mxu0 0.0
        %1755 = vmatpush1.msra.mxu0 %v1734
        %1756 = vmatprep.subr.mxu0 0.0
        %1757 = vmatpush1.msra.mxu0 %v1735
        %1758 = vmatprep.subr.mxu0 0.0
        %1759 = vmatpush1.msra.mxu0 %v1736
        %1760 = vmatprep.subr.mxu0 0.0
        %1761 = vmatpush1.msra.mxu0 %v1737
        %1762 = vmatprep.subr.mxu0 0.0
        %1763 = vmatpush1.msra.mxu0 %v1738
        %1764 = vmatprep.subr.mxu0 0.0
        %1765 = vmatpush1.msra.mxu0 %v1739
        %1766 = vmatprep.subr.mxu0 0.0
        %1767 = vmatpush1.msra.mxu0 %v1740
        %1768 = vmatprep.subr.mxu0 0.0
        %1769 = vmatpush1.msra.mxu0 %v1741
        %1770 = vmatprep.subr.mxu0 0.0
        %1771 = vmatpush1.msra.mxu0 %v1742
        %1772 = vmatprep.subr.mxu0 0.0
        %1773 = vmatpush1.msra.mxu0 %v1743
        %1774 = vmatprep.subr.mxu0 0.0
        %1775 = vmatpush1.msra.mxu0 %v1744
        %1776 = vmatprep.subr.mxu0 0.0
        %1777 = vmatpush1.msra.mxu0 %v1745
        %1778 = vmatprep.subr.mxu0 0.0
        %1779 = vmatpush1.msra.mxu0 0.0
        %1780 = vmatprep.subr.mxu0 0.0
        %1781 = vmatpush1.msra.mxu0 0.0
        %1782 = vmatprep.subr.mxu0 0.0
        %1783 = vmatpush1.msra.mxu0 0.0
        %1784 = vmatprep.subr.mxu0 0.0
        %1785 = vmatpush1.msra.mxu0 0.0
        %1786 = vmatprep.subr.mxu0 0.0
        %1787 = vmatpush1.msra.mxu0 0.0
        %1788 = vmatprep.subr.mxu0 0.0
        %1789 = vmatpush1.msra.mxu0 0.0
        %1790 = vmatprep.subr.mxu0 0.0
        %1791 = vmatpush1.msra.mxu0 0.0
        %1792 = vmatprep.subr.mxu0 0.0
        %1793 = vmatpush1.msra.mxu0 0.0
        %1794 = vmatprep.subr.mxu0 0.0
        %1795 = vmatpush1.msra.mxu0 0.0
        %1796 = vmatprep.subr.mxu0 0.0
        %1797 = vmatpush1.msra.mxu0 0.0
        %1798 = vmatprep.subr.mxu0 0.0
        %1799 = vmatpush1.msra.mxu0 0.0
        %1800 = vmatprep.subr.mxu0 0.0
        %1801 = vmatpush1.msra.mxu0 0.0
        %1802 = vmatprep.subr.mxu0 0.0
        %1803 = vmatpush1.msra.mxu0 0.0
        %1804 = vmatprep.subr.mxu0 0.0
        %1805 = vmatpush1.msra.mxu0 0.0
        %1806 = vmatprep.subr.mxu0 0.0
        %1807 = vmatpush1.msra.mxu0 0.0
        %1808 = vmatprep.subr.mxu0 0.0
        %1809 = vmatpush1.msra.mxu0 0.0
        %1810 = vmatprep.mubr.f32.mxu0 0.0
        %1811 = vmatmul.mubr.f32.gmra.mrb[0].mxu0 %v1129
        %v1812 = vpop.f32.mrb[0].mxu0
        %v1813 = vadd.f32 0.0, %v1812
        %v1814 = vpop.f32.mrb[0].mxu0
        %1815 = vmatprep.mubr.f32.mxu0 0.0
        %1816 = vmatmul.mubr.f32.gmra.mrb[0].mxu0 %v1131
        %v1817 = vpop.f32.mrb[0].mxu0
        %v1818 = vadd.f32 0.0, %v1817
        %v1819 = vpop.f32.mrb[0].mxu0
        %1820 = vmatprep.mubr.f32.mxu0 0.0
        %1821 = vmatmul.mubr.f32.gmra.mrb[0].mxu0 %v1134
        %v1822 = vpop.f32.mrb[0].mxu0
        %v1823 = vadd.f32 0.0, %v1822
        %v1824 = vpop.f32.mrb[0].mxu0
        %1825 = vmatprep.mubr.f32.mxu0 0.0
        %1826 = vmatmul.mubr.f32.gmra.mrb[0].mxu0 %v1136
        %v1827 = vpop.f32.mrb[0].mxu0
        %v1828 = vadd.f32 0.0, %v1827
        %v1829 = vpop.f32.mrb[0].mxu0
        %1830 = vmatprep.mubr.f32.mxu0 0.0
        %1831 = vmatmul.mubr.f32.gmra.mrb[0].mxu0 %v1139
        %v1832 = vpop.f32.mrb[0].mxu0
        %v1833 = vadd.f32 0.0, %v1832
        %v1834 = vpop.f32.mrb[0].mxu0
        %1835 = vmatprep.mubr.f32.mxu0 0.0
        %1836 = vmatmul.mubr.f32.gmra.mrb[0].mxu0 %v1141
        %v1837 = vpop.f32.mrb[0].mxu0
        %v1838 = vadd.f32 0.0, %v1837
        %v1839 = vpop.f32.mrb[0].mxu0
        %1840 = vmatprep.mubr.f32.mxu0 0.0
        %1841 = vmatmul.mubr.f32.gmra.mrb[0].mxu0 %v1144
        %v1842 = vpop.f32.mrb[0].mxu0
        %v1843 = vadd.f32 0.0, %v1842
        %v1844 = vpop.f32.mrb[0].mxu0
        %1845 = vmatprep.mubr.f32.mxu0 0.0
        %1846 = vmatmul.mubr.f32.gmra.mrb[0].mxu0 %v1146
        %v1847 = vpop.f32.mrb[0].mxu0
        %v1848 = vadd.f32 0.0, %v1847
        %v1849 = vpop.f32.mrb[0].mxu0
        %1850 = vmatprep.mubr.f32.mxu0 0.0
        %1851 = vmatmul.mubr.f32.gmra.mrb[0].mxu0 %v1149
        %v1852 = vpop.f32.mrb[0].mxu0
        %v1853 = vadd.f32 0.0, %v1852
        %v1854 = vpop.f32.mrb[0].mxu0
        %1855 = vmatprep.mubr.f32.mxu0 0.0
        %1856 = vmatmul.mubr.f32.gmra.mrb[0].mxu0 %v1151
        %v1857 = vpop.f32.mrb[0].mxu0
        %v1858 = vadd.f32 0.0, %v1857
        %v1859 = vpop.f32.mrb[0].mxu0
        %1860 = vmatprep.mubr.f32.mxu0 0.0
        %1861 = vmatmul.mubr.f32.gmra.mrb[0].mxu0 %v1154
        %v1862 = vpop.f32.mrb[0].mxu0
        %v1863 = vadd.f32 0.0, %v1862
        %v1864 = vpop.f32.mrb[0].mxu0
        %1865 = vmatprep.mubr.f32.mxu0 0.0
        %1866 = vmatmul.mubr.f32.gmra.mrb[0].mxu0 %v1156
        %v1867 = vpop.f32.mrb[0].mxu0
        %v1868 = vadd.f32 0.0, %v1867
        %v1869 = vpop.f32.mrb[0].mxu0
        %1870 = vmatprep.mubr.f32.mxu0 0.0
        %1871 = vmatmul.mubr.f32.gmra.mrb[0].mxu0 %v1159
        %v1872 = vpop.f32.mrb[0].mxu0
        %v1873 = vadd.f32 0.0, %v1872
        %v1874 = vpop.f32.mrb[0].mxu0
        %1875 = vmatprep.mubr.f32.mxu0 0.0
        %1876 = vmatmul.mubr.f32.gmra.mrb[0].mxu0 %v1161
        %v1877 = vpop.f32.mrb[0].mxu0
        %v1878 = vadd.f32 0.0, %v1877
        %v1879 = vpop.f32.mrb[0].mxu0
        %1880 = vmatprep.mubr.f32.mxu0 0.0
        %1881 = vmatmul.mubr.f32.gmra.mrb[0].mxu0 %v1724
        %v1882 = vpop.f32.mrb[0].mxu0
        %v1883 = vadd.f32 0.0, %v1882
        %v1884 = vpop.f32.mrb[0].mxu0
        %1885 = vmatprep.mubr.f32.mxu0 0.0
        %1886 = vmatmul.mubr.f32.gmra.mrb[0].mxu0 %v1726
        %v1887 = vpop.f32.mrb[0].mxu0
        %v1888 = vadd.f32 0.0, %v1887
        %v1889 = vpop.f32.mrb[0].mxu0
        %1890 = vdwg.mxu0
        %v1891 = vadd.f32 %v1706, %v1813
        %v1892 = vadd.f32 %v1707, %v1818
        %v1893 = vadd.f32 %v1708, %v1823
        %v1894 = vadd.f32 %v1709, %v1828
        %v1895 = vadd.f32 %v1710, %v1833
        %v1896 = vadd.f32 %v1711, %v1838
        %v1897 = vadd.f32 %v1712, %v1843
        %v1898 = vadd.f32 %v1713, %v1848
        %v1899 = vadd.f32 %v1714, %v1853
        %v1900 = vadd.f32 %v1715, %v1858
        %v1901 = vadd.f32 %v1716, %v1863
        %v1902 = vadd.f32 %v1717, %v1868
        %v1903 = vadd.f32 %v1718, %v1873
        %v1904 = vadd.f32 %v1719, %v1878
        %v1905 = vadd.f32 %v1720, %v1883
        %v1906 = vadd.f32 %v1721, %v1888
        %s1907 = scalar_lea.vmem [#allocation10], 768
        %v1908 = vld [vmem:[%s1907] sm:$0xff]
        %v1909 = vld [vmem:[%s1907 + $0x8] sm:$0xff]
        %v1910 = vld [vmem:[%s1907 + $0x10] sm:$0xff]
        %v1911 = vld [vmem:[%s1907 + $0x18] sm:$0xff]
        %v1912 = vld [vmem:[%s1907 + $0x20] sm:$0xff]
        %v1913 = vld [vmem:[%s1907 + $0x28] sm:$0xff]
        %v1914 = vld [vmem:[%s1907 + $0x30] sm:$0xff]
        %v1915 = vld [vmem:[%s1907 + $0x38] sm:$0xff]
        %v1916 = vld [vmem:[%s1907 + $0x40] sm:$0xff]
        %v1917 = vld [vmem:[%s1907 + $0x48] sm:$0xff]
        %v1918 = vld [vmem:[%s1907 + $0x50] sm:$0xff]
        %v1919 = vld [vmem:[%s1907 + $0x58] sm:$0xff]
        %v1920 = vld [vmem:[%s1907 + $0x60] sm:$0xff]
        %v1921 = vld [vmem:[%s1907 + $0x68] sm:$0xff]
        %v1922 = vld [vmem:[%s1907 + $0x70] sm:$0xff]
        %v1923 = vld [vmem:[%s1907 + $0x78] sm:$0xff]
        %1924 = vmatprep.subr.mxu0 0.0
        %1925 = vmatpush1.msra.mxu0 %v1908
        %1926 = vmatprep.subr.mxu0 0.0
        %1927 = vmatpush1.msra.mxu0 %v1909
        %1928 = vmatprep.subr.mxu0 0.0
        %1929 = vmatpush1.msra.mxu0 %v1910
        %1930 = vmatprep.subr.mxu0 0.0
        %1931 = vmatpush1.msra.mxu0 %v1911
        %1932 = vmatprep.subr.mxu0 0.0
        %1933 = vmatpush1.msra.mxu0 %v1912
        %1934 = vmatprep.subr.mxu0 0.0
        %1935 = vmatpush1.msra.mxu0 %v1913
        %1936 = vmatprep.subr.mxu0 0.0
        %1937 = vmatpush1.msra.mxu0 %v1914
        %1938 = vmatprep.subr.mxu0 0.0
        %1939 = vmatpush1.msra.mxu0 %v1915
        %1940 = vmatprep.subr.mxu0 0.0
        %1941 = vmatpush1.msra.mxu0 %v1916
        %1942 = vmatprep.subr.mxu0 0.0
        %1943 = vmatpush1.msra.mxu0 %v1917
        %1944 = vmatprep.subr.mxu0 0.0
        %1945 = vmatpush1.msra.mxu0 %v1918
        %1946 = vmatprep.subr.mxu0 0.0
        %1947 = vmatpush1.msra.mxu0 %v1919
        %1948 = vmatprep.subr.mxu0 0.0
        %1949 = vmatpush1.msra.mxu0 %v1920
        %1950 = vmatprep.subr.mxu0 0.0
        %1951 = vmatpush1.msra.mxu0 %v1921
        %1952 = vmatprep.subr.mxu0 0.0
        %1953 = vmatpush1.msra.mxu0 %v1922
        %1954 = vmatprep.subr.mxu0 0.0
        %1955 = vmatpush1.msra.mxu0 %v1923
        %1956 = vmatprep.subr.mxu0 0.0
        %1957 = vmatpush1.msra.mxu0 0.0
        %1958 = vmatprep.subr.mxu0 0.0
        %1959 = vmatpush1.msra.mxu0 0.0
        %1960 = vmatprep.subr.mxu0 0.0
        %1961 = vmatpush1.msra.mxu0 0.0
        %1962 = vmatprep.subr.mxu0 0.0
        %1963 = vmatpush1.msra.mxu0 0.0
        %1964 = vmatprep.subr.mxu0 0.0
        %1965 = vmatpush1.msra.mxu0 0.0
        %1966 = vmatprep.subr.mxu0 0.0
        %1967 = vmatpush1.msra.mxu0 0.0
        %1968 = vmatprep.subr.mxu0 0.0
        %1969 = vmatpush1.msra.mxu0 0.0
        %1970 = vmatprep.subr.mxu0 0.0
        %1971 = vmatpush1.msra.mxu0 0.0
        %1972 = vmatprep.subr.mxu0 0.0
        %1973 = vmatpush1.msra.mxu0 0.0
        %1974 = vmatprep.subr.mxu0 0.0
        %1975 = vmatpush1.msra.mxu0 0.0
        %1976 = vmatprep.subr.mxu0 0.0
        %1977 = vmatpush1.msra.mxu0 0.0
        %1978 = vmatprep.subr.mxu0 0.0
        %1979 = vmatpush1.msra.mxu0 0.0
        %1980 = vmatprep.subr.mxu0 0.0
        %1981 = vmatpush1.msra.mxu0 0.0
        %1982 = vmatprep.subr.mxu0 0.0
        %1983 = vmatpush1.msra.mxu0 0.0
        %1984 = vmatprep.subr.mxu0 0.0
        %1985 = vmatpush1.msra.mxu0 0.0
        %1986 = vmatprep.subr.mxu0 0.0
        %1987 = vmatpush1.msra.mxu0 0.0
        %1988 = vmatprep.mubr.f32.mxu0 0.0
        %1989 = vmatmul.mubr.f32.gmra.mrb[0].mxu0 %v696
        %v1990 = vpop.f32.mrb[0].mxu0
        %v1991 = vadd.f32 0.0, %v1990
        %v1992 = vpop.f32.mrb[0].mxu0
        %1993 = vmatprep.mubr.f32.mxu0 0.0
        %1994 = vmatmul.mubr.f32.gmra.mrb[0].mxu0 %v697
        %v1995 = vpop.f32.mrb[0].mxu0
        %v1996 = vadd.f32 0.0, %v1995
        %v1997 = vpop.f32.mrb[0].mxu0
        %1998 = vmatprep.mubr.f32.mxu0 0.0
        %1999 = vmatmul.mubr.f32.gmra.mrb[0].mxu0 %v699
        %v2000 = vpop.f32.mrb[0].mxu0
        %v2001 = vadd.f32 0.0, %v2000
        %v2002 = vpop.f32.mrb[0].mxu0
        %2003 = vmatprep.mubr.f32.mxu0 0.0
        %2004 = vmatmul.mubr.f32.gmra.mrb[0].mxu0 %v700
        %v2005 = vpop.f32.mrb[0].mxu0
        %v2006 = vadd.f32 0.0, %v2005
        %v2007 = vpop.f32.mrb[0].mxu0
        %2008 = vmatprep.mubr.f32.mxu0 0.0
        %2009 = vmatmul.mubr.f32.gmra.mrb[0].mxu0 %v702
        %v2010 = vpop.f32.mrb[0].mxu0
        %v2011 = vadd.f32 0.0, %v2010
        %v2012 = vpop.f32.mrb[0].mxu0
        %2013 = vmatprep.mubr.f32.mxu0 0.0
        %2014 = vmatmul.mubr.f32.gmra.mrb[0].mxu0 %v703
        %v2015 = vpop.f32.mrb[0].mxu0
        %v2016 = vadd.f32 0.0, %v2015
        %v2017 = vpop.f32.mrb[0].mxu0
        %2018 = vmatprep.mubr.f32.mxu0 0.0
        %2019 = vmatmul.mubr.f32.gmra.mrb[0].mxu0 %v705
        %v2020 = vpop.f32.mrb[0].mxu0
        %v2021 = vadd.f32 0.0, %v2020
        %v2022 = vpop.f32.mrb[0].mxu0
        %2023 = vmatprep.mubr.f32.mxu0 0.0
        %2024 = vmatmul.mubr.f32.gmra.mrb[0].mxu0 %v706
        %v2025 = vpop.f32.mrb[0].mxu0
        %v2026 = vadd.f32 0.0, %v2025
        %v2027 = vpop.f32.mrb[0].mxu0
        %2028 = vmatprep.mubr.f32.mxu0 0.0
        %2029 = vmatmul.mubr.f32.gmra.mrb[0].mxu0 %v708
        %v2030 = vpop.f32.mrb[0].mxu0
        %v2031 = vadd.f32 0.0, %v2030
        %v2032 = vpop.f32.mrb[0].mxu0
        %2033 = vmatprep.mubr.f32.mxu0 0.0
        %2034 = vmatmul.mubr.f32.gmra.mrb[0].mxu0 %v709
        %v2035 = vpop.f32.mrb[0].mxu0
        %v2036 = vadd.f32 0.0, %v2035
        %v2037 = vpop.f32.mrb[0].mxu0
        %2038 = vmatprep.mubr.f32.mxu0 0.0
        %2039 = vmatmul.mubr.f32.gmra.mrb[0].mxu0 %v711
        %v2040 = vpop.f32.mrb[0].mxu0
        %v2041 = vadd.f32 0.0, %v2040
        %v2042 = vpop.f32.mrb[0].mxu0
        %2043 = vmatprep.mubr.f32.mxu0 0.0
        %2044 = vmatmul.mubr.f32.gmra.mrb[0].mxu0 %v712
        %v2045 = vpop.f32.mrb[0].mxu0
        %v2046 = vadd.f32 0.0, %v2045
        %v2047 = vpop.f32.mrb[0].mxu0
        %2048 = vmatprep.mubr.f32.mxu0 0.0
        %2049 = vmatmul.mubr.f32.gmra.mrb[0].mxu0 %v714
        %v2050 = vpop.f32.mrb[0].mxu0
        %v2051 = vadd.f32 0.0, %v2050
        %v2052 = vpop.f32.mrb[0].mxu0
        %2053 = vmatprep.mubr.f32.mxu0 0.0
        %2054 = vmatmul.mubr.f32.gmra.mrb[0].mxu0 %v715
        %v2055 = vpop.f32.mrb[0].mxu0
        %v2056 = vadd.f32 0.0, %v2055
        %v2057 = vpop.f32.mrb[0].mxu0
        %2058 = vmatprep.mubr.f32.mxu0 0.0
        %2059 = vmatmul.mubr.f32.gmra.mrb[0].mxu0 %v546
        %v2060 = vpop.f32.mrb[0].mxu0
        %v2061 = vadd.f32 0.0, %v2060
        %v2062 = vpop.f32.mrb[0].mxu0
        %2063 = vmatprep.mubr.f32.mxu0 0.0
        %2064 = vmatmul.mubr.f32.gmra.mrb[0].mxu0 %v547
        %v2065 = vpop.f32.mrb[0].mxu0
        %v2066 = vadd.f32 0.0, %v2065
        %v2067 = vpop.f32.mrb[0].mxu0
        %2068 = vdwg.mxu0
        %v2069 = vadd.f32 %v1891, %v1991
        %v2070 = vadd.f32 %v1892, %v1996
        %v2071 = vadd.f32 %v1893, %v2001
        %v2072 = vadd.f32 %v1894, %v2006
        %v2073 = vadd.f32 %v1895, %v2011
        %v2074 = vadd.f32 %v1896, %v2016
        %v2075 = vadd.f32 %v1897, %v2021
        %v2076 = vadd.f32 %v1898, %v2026
        %v2077 = vadd.f32 %v1899, %v2031
        %v2078 = vadd.f32 %v1900, %v2036
        %v2079 = vadd.f32 %v1901, %v2041
        %v2080 = vadd.f32 %v1902, %v2046
        %v2081 = vadd.f32 %v1903, %v2051
        %v2082 = vadd.f32 %v1904, %v2056
        %v2083 = vadd.f32 %v1905, %v2061
        %v2084 = vadd.f32 %v1906, %v2066
        %v2088 = vrot.slane %v546, 1
        %v2089 = vrot.slane %v547, 1
        %v2090 = vsel %vm757, %v2088, %v2089
        %v2091 = vrot.slane %v548, 1
        %v2092 = vsel %vm757, %v2089, %v2091
        %s2095 = scalar_lea.vmem [#allocation10], 896
        %v2096 = vld [vmem:[%s2095] sm:$0xff]
        %v2097 = vld [vmem:[%s2095 + $0x8] sm:$0xff]
        %v2098 = vld [vmem:[%s2095 + $0x10] sm:$0xff]
        %v2099 = vld [vmem:[%s2095 + $0x18] sm:$0xff]
        %v2100 = vld [vmem:[%s2095 + $0x20] sm:$0xff]
        %v2101 = vld [vmem:[%s2095 + $0x28] sm:$0xff]
        %v2102 = vld [vmem:[%s2095 + $0x30] sm:$0xff]
        %v2103 = vld [vmem:[%s2095 + $0x38] sm:$0xff]
        %v2104 = vld [vmem:[%s2095 + $0x40] sm:$0xff]
        %v2105 = vld [vmem:[%s2095 + $0x48] sm:$0xff]
        %v2106 = vld [vmem:[%s2095 + $0x50] sm:$0xff]
        %v2107 = vld [vmem:[%s2095 + $0x58] sm:$0xff]
        %v2108 = vld [vmem:[%s2095 + $0x60] sm:$0xff]
        %v2109 = vld [vmem:[%s2095 + $0x68] sm:$0xff]
        %v2110 = vld [vmem:[%s2095 + $0x70] sm:$0xff]
        %v2111 = vld [vmem:[%s2095 + $0x78] sm:$0xff]
        %2112 = vmatprep.subr.mxu0 0.0
        %2113 = vmatpush1.msra.mxu0 %v2096
        %2114 = vmatprep.subr.mxu0 0.0
        %2115 = vmatpush1.msra.mxu0 %v2097
        %2116 = vmatprep.subr.mxu0 0.0
        %2117 = vmatpush1.msra.mxu0 %v2098
        %2118 = vmatprep.subr.mxu0 0.0
        %2119 = vmatpush1.msra.mxu0 %v2099
        %2120 = vmatprep.subr.mxu0 0.0
        %2121 = vmatpush1.msra.mxu0 %v2100
        %2122 = vmatprep.subr.mxu0 0.0
        %2123 = vmatpush1.msra.mxu0 %v2101
        %2124 = vmatprep.subr.mxu0 0.0
        %2125 = vmatpush1.msra.mxu0 %v2102
        %2126 = vmatprep.subr.mxu0 0.0
        %2127 = vmatpush1.msra.mxu0 %v2103
        %2128 = vmatprep.subr.mxu0 0.0
        %2129 = vmatpush1.msra.mxu0 %v2104
        %2130 = vmatprep.subr.mxu0 0.0
        %2131 = vmatpush1.msra.mxu0 %v2105
        %2132 = vmatprep.subr.mxu0 0.0
        %2133 = vmatpush1.msra.mxu0 %v2106
        %2134 = vmatprep.subr.mxu0 0.0
        %2135 = vmatpush1.msra.mxu0 %v2107
        %2136 = vmatprep.subr.mxu0 0.0
        %2137 = vmatpush1.msra.mxu0 %v2108
        %2138 = vmatprep.subr.mxu0 0.0
        %2139 = vmatpush1.msra.mxu0 %v2109
        %2140 = vmatprep.subr.mxu0 0.0
        %2141 = vmatpush1.msra.mxu0 %v2110
        %2142 = vmatprep.subr.mxu0 0.0
        %2143 = vmatpush1.msra.mxu0 %v2111
        %2144 = vmatprep.subr.mxu0 0.0
        %2145 = vmatpush1.msra.mxu0 0.0
        %2146 = vmatprep.subr.mxu0 0.0
        %2147 = vmatpush1.msra.mxu0 0.0
        %2148 = vmatprep.subr.mxu0 0.0
        %2149 = vmatpush1.msra.mxu0 0.0
        %2150 = vmatprep.subr.mxu0 0.0
        %2151 = vmatpush1.msra.mxu0 0.0
        %2152 = vmatprep.subr.mxu0 0.0
        %2153 = vmatpush1.msra.mxu0 0.0
        %2154 = vmatprep.subr.mxu0 0.0
        %2155 = vmatpush1.msra.mxu0 0.0
        %2156 = vmatprep.subr.mxu0 0.0
        %2157 = vmatpush1.msra.mxu0 0.0
        %2158 = vmatprep.subr.mxu0 0.0
        %2159 = vmatpush1.msra.mxu0 0.0
        %2160 = vmatprep.subr.mxu0 0.0
        %2161 = vmatpush1.msra.mxu0 0.0
        %2162 = vmatprep.subr.mxu0 0.0
        %2163 = vmatpush1.msra.mxu0 0.0
        %2164 = vmatprep.subr.mxu0 0.0
        %2165 = vmatpush1.msra.mxu0 0.0
        %2166 = vmatprep.subr.mxu0 0.0
        %2167 = vmatpush1.msra.mxu0 0.0
        %2168 = vmatprep.subr.mxu0 0.0
        %2169 = vmatpush1.msra.mxu0 0.0
        %2170 = vmatprep.subr.mxu0 0.0
        %2171 = vmatpush1.msra.mxu0 0.0
        %2172 = vmatprep.subr.mxu0 0.0
        %2173 = vmatpush1.msra.mxu0 0.0
        %2174 = vmatprep.subr.mxu0 0.0
        %2175 = vmatpush1.msra.mxu0 0.0
        %2176 = vmatprep.mubr.f32.mxu0 0.0
        %2177 = vmatmul.mubr.f32.gmra.mrb[0].mxu0 %v770
        %v2178 = vpop.f32.mrb[0].mxu0
        %v2179 = vadd.f32 0.0, %v2178
        %v2180 = vpop.f32.mrb[0].mxu0
        %2181 = vmatprep.mubr.f32.mxu0 0.0
        %2182 = vmatmul.mubr.f32.gmra.mrb[0].mxu0 %v772
        %v2183 = vpop.f32.mrb[0].mxu0
        %v2184 = vadd.f32 0.0, %v2183
        %v2185 = vpop.f32.mrb[0].mxu0
        %2186 = vmatprep.mubr.f32.mxu0 0.0
        %2187 = vmatmul.mubr.f32.gmra.mrb[0].mxu0 %v775
        %v2188 = vpop.f32.mrb[0].mxu0
        %v2189 = vadd.f32 0.0, %v2188
        %v2190 = vpop.f32.mrb[0].mxu0
        %2191 = vmatprep.mubr.f32.mxu0 0.0
        %2192 = vmatmul.mubr.f32.gmra.mrb[0].mxu0 %v777
        %v2193 = vpop.f32.mrb[0].mxu0
        %v2194 = vadd.f32 0.0, %v2193
        %v2195 = vpop.f32.mrb[0].mxu0
        %2196 = vmatprep.mubr.f32.mxu0 0.0
        %2197 = vmatmul.mubr.f32.gmra.mrb[0].mxu0 %v780
        %v2198 = vpop.f32.mrb[0].mxu0
        %v2199 = vadd.f32 0.0, %v2198
        %v2200 = vpop.f32.mrb[0].mxu0
        %2201 = vmatprep.mubr.f32.mxu0 0.0
        %2202 = vmatmul.mubr.f32.gmra.mrb[0].mxu0 %v782
        %v2203 = vpop.f32.mrb[0].mxu0
        %v2204 = vadd.f32 0.0, %v2203
        %v2205 = vpop.f32.mrb[0].mxu0
        %2206 = vmatprep.mubr.f32.mxu0 0.0
        %2207 = vmatmul.mubr.f32.gmra.mrb[0].mxu0 %v785
        %v2208 = vpop.f32.mrb[0].mxu0
        %v2209 = vadd.f32 0.0, %v2208
        %v2210 = vpop.f32.mrb[0].mxu0
        %2211 = vmatprep.mubr.f32.mxu0 0.0
        %2212 = vmatmul.mubr.f32.gmra.mrb[0].mxu0 %v787
        %v2213 = vpop.f32.mrb[0].mxu0
        %v2214 = vadd.f32 0.0, %v2213
        %v2215 = vpop.f32.mrb[0].mxu0
        %2216 = vmatprep.mubr.f32.mxu0 0.0
        %2217 = vmatmul.mubr.f32.gmra.mrb[0].mxu0 %v790
        %v2218 = vpop.f32.mrb[0].mxu0
        %v2219 = vadd.f32 0.0, %v2218
        %v2220 = vpop.f32.mrb[0].mxu0
        %2221 = vmatprep.mubr.f32.mxu0 0.0
        %2222 = vmatmul.mubr.f32.gmra.mrb[0].mxu0 %v792
        %v2223 = vpop.f32.mrb[0].mxu0
        %v2224 = vadd.f32 0.0, %v2223
        %v2225 = vpop.f32.mrb[0].mxu0
        %2226 = vmatprep.mubr.f32.mxu0 0.0
        %2227 = vmatmul.mubr.f32.gmra.mrb[0].mxu0 %v795
        %v2228 = vpop.f32.mrb[0].mxu0
        %v2229 = vadd.f32 0.0, %v2228
        %v2230 = vpop.f32.mrb[0].mxu0
        %2231 = vmatprep.mubr.f32.mxu0 0.0
        %2232 = vmatmul.mubr.f32.gmra.mrb[0].mxu0 %v797
        %v2233 = vpop.f32.mrb[0].mxu0
        %v2234 = vadd.f32 0.0, %v2233
        %v2235 = vpop.f32.mrb[0].mxu0
        %2236 = vmatprep.mubr.f32.mxu0 0.0
        %2237 = vmatmul.mubr.f32.gmra.mrb[0].mxu0 %v1539
        %v2238 = vpop.f32.mrb[0].mxu0
        %v2239 = vadd.f32 0.0, %v2238
        %v2240 = vpop.f32.mrb[0].mxu0
        %2241 = vmatprep.mubr.f32.mxu0 0.0
        %2242 = vmatmul.mubr.f32.gmra.mrb[0].mxu0 %v1541
        %v2243 = vpop.f32.mrb[0].mxu0
        %v2244 = vadd.f32 0.0, %v2243
        %v2245 = vpop.f32.mrb[0].mxu0
        %2246 = vmatprep.mubr.f32.mxu0 0.0
        %2247 = vmatmul.mubr.f32.gmra.mrb[0].mxu0 %v2090
        %v2248 = vpop.f32.mrb[0].mxu0
        %v2249 = vadd.f32 0.0, %v2248
        %v2250 = vpop.f32.mrb[0].mxu0
        %2251 = vmatprep.mubr.f32.mxu0 0.0
        %2252 = vmatmul.mubr.f32.gmra.mrb[0].mxu0 %v2092
        %v2253 = vpop.f32.mrb[0].mxu0
        %v2254 = vadd.f32 0.0, %v2253
        %v2255 = vpop.f32.mrb[0].mxu0
        %2256 = vdwg.mxu0
        %v2257 = vadd.f32 %v2069, %v2179
        %v2258 = vadd.f32 %v2070, %v2184
        %v2259 = vadd.f32 %v2071, %v2189
        %v2260 = vadd.f32 %v2072, %v2194
        %v2261 = vadd.f32 %v2073, %v2199
        %v2262 = vadd.f32 %v2074, %v2204
        %v2263 = vadd.f32 %v2075, %v2209
        %v2264 = vadd.f32 %v2076, %v2214
        %v2265 = vadd.f32 %v2077, %v2219
        %v2266 = vadd.f32 %v2078, %v2224
        %v2267 = vadd.f32 %v2079, %v2229
        %v2268 = vadd.f32 %v2080, %v2234
        %v2269 = vadd.f32 %v2081, %v2239
        %v2270 = vadd.f32 %v2082, %v2244
        %v2271 = vadd.f32 %v2083, %v2249
        %v2272 = vadd.f32 %v2084, %v2254
        %v2273 = vrot.slane %v546, 2
        %v2274 = vrot.slane %v547, 2
        %v2275 = vsel %vm1121, %v2273, %v2274
        %v2276 = vrot.slane %v548, 2
        %v2277 = vsel %vm1121, %v2274, %v2276
        %s2280 = scalar_lea.vmem [#allocation10], 1024
        %v2281 = vld [vmem:[%s2280] sm:$0xff]
        %v2282 = vld [vmem:[%s2280 + $0x8] sm:$0xff]
        %v2283 = vld [vmem:[%s2280 + $0x10] sm:$0xff]
        %v2284 = vld [vmem:[%s2280 + $0x18] sm:$0xff]
        %v2285 = vld [vmem:[%s2280 + $0x20] sm:$0xff]
        %v2286 = vld [vmem:[%s2280 + $0x28] sm:$0xff]
        %v2287 = vld [vmem:[%s2280 + $0x30] sm:$0xff]
        %v2288 = vld [vmem:[%s2280 + $0x38] sm:$0xff]
        %v2289 = vld [vmem:[%s2280 + $0x40] sm:$0xff]
        %v2290 = vld [vmem:[%s2280 + $0x48] sm:$0xff]
        %v2291 = vld [vmem:[%s2280 + $0x50] sm:$0xff]
        %v2292 = vld [vmem:[%s2280 + $0x58] sm:$0xff]
        %v2293 = vld [vmem:[%s2280 + $0x60] sm:$0xff]
        %v2294 = vld [vmem:[%s2280 + $0x68] sm:$0xff]
        %v2295 = vld [vmem:[%s2280 + $0x70] sm:$0xff]
        %v2296 = vld [vmem:[%s2280 + $0x78] sm:$0xff]
        %2297 = vmatprep.subr.mxu0 0.0
        %2298 = vmatpush1.msra.mxu0 %v2281
        %2299 = vmatprep.subr.mxu0 0.0
        %2300 = vmatpush1.msra.mxu0 %v2282
        %2301 = vmatprep.subr.mxu0 0.0
        %2302 = vmatpush1.msra.mxu0 %v2283
        %2303 = vmatprep.subr.mxu0 0.0
        %2304 = vmatpush1.msra.mxu0 %v2284
        %2305 = vmatprep.subr.mxu0 0.0
        %2306 = vmatpush1.msra.mxu0 %v2285
        %2307 = vmatprep.subr.mxu0 0.0
        %2308 = vmatpush1.msra.mxu0 %v2286
        %2309 = vmatprep.subr.mxu0 0.0
        %2310 = vmatpush1.msra.mxu0 %v2287
        %2311 = vmatprep.subr.mxu0 0.0
        %2312 = vmatpush1.msra.mxu0 %v2288
        %2313 = vmatprep.subr.mxu0 0.0
        %2314 = vmatpush1.msra.mxu0 %v2289
        %2315 = vmatprep.subr.mxu0 0.0
        %2316 = vmatpush1.msra.mxu0 %v2290
        %2317 = vmatprep.subr.mxu0 0.0
        %2318 = vmatpush1.msra.mxu0 %v2291
        %2319 = vmatprep.subr.mxu0 0.0
        %2320 = vmatpush1.msra.mxu0 %v2292
        %2321 = vmatprep.subr.mxu0 0.0
        %2322 = vmatpush1.msra.mxu0 %v2293
        %2323 = vmatprep.subr.mxu0 0.0
        %2324 = vmatpush1.msra.mxu0 %v2294
        %2325 = vmatprep.subr.mxu0 0.0
        %2326 = vmatpush1.msra.mxu0 %v2295
        %2327 = vmatprep.subr.mxu0 0.0
        %2328 = vmatpush1.msra.mxu0 %v2296
        %2329 = vmatprep.subr.mxu0 0.0
        %2330 = vmatpush1.msra.mxu0 0.0
        %2331 = vmatprep.subr.mxu0 0.0
        %2332 = vmatpush1.msra.mxu0 0.0
        %2333 = vmatprep.subr.mxu0 0.0
        %2334 = vmatpush1.msra.mxu0 0.0
        %2335 = vmatprep.subr.mxu0 0.0
        %2336 = vmatpush1.msra.mxu0 0.0
        %2337 = vmatprep.subr.mxu0 0.0
        %2338 = vmatpush1.msra.mxu0 0.0
        %2339 = vmatprep.subr.mxu0 0.0
        %2340 = vmatpush1.msra.mxu0 0.0
        %2341 = vmatprep.subr.mxu0 0.0
        %2342 = vmatpush1.msra.mxu0 0.0
        %2343 = vmatprep.subr.mxu0 0.0
        %2344 = vmatpush1.msra.mxu0 0.0
        %2345 = vmatprep.subr.mxu0 0.0
        %2346 = vmatpush1.msra.mxu0 0.0
        %2347 = vmatprep.subr.mxu0 0.0
        %2348 = vmatpush1.msra.mxu0 0.0
        %2349 = vmatprep.subr.mxu0 0.0
        %2350 = vmatpush1.msra.mxu0 0.0
        %2351 = vmatprep.subr.mxu0 0.0
        %2352 = vmatpush1.msra.mxu0 0.0
        %2353 = vmatprep.subr.mxu0 0.0
        %2354 = vmatpush1.msra.mxu0 0.0
        %2355 = vmatprep.subr.mxu0 0.0
        %2356 = vmatpush1.msra.mxu0 0.0
        %2357 = vmatprep.subr.mxu0 0.0
        %2358 = vmatpush1.msra.mxu0 0.0
        %2359 = vmatprep.subr.mxu0 0.0
        %2360 = vmatpush1.msra.mxu0 0.0
        %2361 = vmatprep.mubr.f32.mxu0 0.0
        %2362 = vmatmul.mubr.f32.gmra.mrb[0].mxu0 %v1134
        %v2363 = vpop.f32.mrb[0].mxu0
        %v2364 = vadd.f32 0.0, %v2363
        %v2365 = vpop.f32.mrb[0].mxu0
        %2366 = vmatprep.mubr.f32.mxu0 0.0
        %2367 = vmatmul.mubr.f32.gmra.mrb[0].mxu0 %v1136
        %v2368 = vpop.f32.mrb[0].mxu0
        %v2369 = vadd.f32 0.0, %v2368
        %v2370 = vpop.f32.mrb[0].mxu0
        %2371 = vmatprep.mubr.f32.mxu0 0.0
        %2372 = vmatmul.mubr.f32.gmra.mrb[0].mxu0 %v1139
        %v2373 = vpop.f32.mrb[0].mxu0
        %v2374 = vadd.f32 0.0, %v2373
        %v2375 = vpop.f32.mrb[0].mxu0
        %2376 = vmatprep.mubr.f32.mxu0 0.0
        %2377 = vmatmul.mubr.f32.gmra.mrb[0].mxu0 %v1141
        %v2378 = vpop.f32.mrb[0].mxu0
        %v2379 = vadd.f32 0.0, %v2378
        %v2380 = vpop.f32.mrb[0].mxu0
        %2381 = vmatprep.mubr.f32.mxu0 0.0
        %2382 = vmatmul.mubr.f32.gmra.mrb[0].mxu0 %v1144
        %v2383 = vpop.f32.mrb[0].mxu0
        %v2384 = vadd.f32 0.0, %v2383
        %v2385 = vpop.f32.mrb[0].mxu0
        %2386 = vmatprep.mubr.f32.mxu0 0.0
        %2387 = vmatmul.mubr.f32.gmra.mrb[0].mxu0 %v1146
        %v2388 = vpop.f32.mrb[0].mxu0
        %v2389 = vadd.f32 0.0, %v2388
        %v2390 = vpop.f32.mrb[0].mxu0
        %2391 = vmatprep.mubr.f32.mxu0 0.0
        %2392 = vmatmul.mubr.f32.gmra.mrb[0].mxu0 %v1149
        %v2393 = vpop.f32.mrb[0].mxu0
        %v2394 = vadd.f32 0.0, %v2393
        %v2395 = vpop.f32.mrb[0].mxu0
        %2396 = vmatprep.mubr.f32.mxu0 0.0
        %2397 = vmatmul.mubr.f32.gmra.mrb[0].mxu0 %v1151
        %v2398 = vpop.f32.mrb[0].mxu0
        %v2399 = vadd.f32 0.0, %v2398
        %v2400 = vpop.f32.mrb[0].mxu0
        %2401 = vmatprep.mubr.f32.mxu0 0.0
        %2402 = vmatmul.mubr.f32.gmra.mrb[0].mxu0 %v1154
        %v2403 = vpop.f32.mrb[0].mxu0
        %v2404 = vadd.f32 0.0, %v2403
        %v2405 = vpop.f32.mrb[0].mxu0
        %2406 = vmatprep.mubr.f32.mxu0 0.0
        %2407 = vmatmul.mubr.f32.gmra.mrb[0].mxu0 %v1156
        %v2408 = vpop.f32.mrb[0].mxu0
        %v2409 = vadd.f32 0.0, %v2408
        %v2410 = vpop.f32.mrb[0].mxu0
        %2411 = vmatprep.mubr.f32.mxu0 0.0
        %2412 = vmatmul.mubr.f32.gmra.mrb[0].mxu0 %v1159
        %v2413 = vpop.f32.mrb[0].mxu0
        %v2414 = vadd.f32 0.0, %v2413
        %v2415 = vpop.f32.mrb[0].mxu0
        %2416 = vmatprep.mubr.f32.mxu0 0.0
        %2417 = vmatmul.mubr.f32.gmra.mrb[0].mxu0 %v1161
        %v2418 = vpop.f32.mrb[0].mxu0
        %v2419 = vadd.f32 0.0, %v2418
        %v2420 = vpop.f32.mrb[0].mxu0
        %2421 = vmatprep.mubr.f32.mxu0 0.0
        %2422 = vmatmul.mubr.f32.gmra.mrb[0].mxu0 %v1724
        %v2423 = vpop.f32.mrb[0].mxu0
        %v2424 = vadd.f32 0.0, %v2423
        %v2425 = vpop.f32.mrb[0].mxu0
        %2426 = vmatprep.mubr.f32.mxu0 0.0
        %2427 = vmatmul.mubr.f32.gmra.mrb[0].mxu0 %v1726
        %v2428 = vpop.f32.mrb[0].mxu0
        %v2429 = vadd.f32 0.0, %v2428
        %v2430 = vpop.f32.mrb[0].mxu0
        %2431 = vmatprep.mubr.f32.mxu0 0.0
        %2432 = vmatmul.mubr.f32.gmra.mrb[0].mxu0 %v2275
        %v2433 = vpop.f32.mrb[0].mxu0
        %v2434 = vadd.f32 0.0, %v2433
        %v2435 = vpop.f32.mrb[0].mxu0
        %2436 = vmatprep.mubr.f32.mxu0 0.0
        %2437 = vmatmul.mubr.f32.gmra.mrb[0].mxu0 %v2277
        %v2438 = vpop.f32.mrb[0].mxu0
        %v2439 = vadd.f32 0.0, %v2438
        %v2440 = vpop.f32.mrb[0].mxu0
        %2441 = vdwg.mxu0
        %v2442 = vadd.f32 %v2257, %v2364
        %v2443 = vadd.f32 %v2258, %v2369
        %v2444 = vadd.f32 %v2259, %v2374
        %v2445 = vadd.f32 %v2260, %v2379
        %v2446 = vadd.f32 %v2261, %v2384
        %v2447 = vadd.f32 %v2262, %v2389
        %v2448 = vadd.f32 %v2263, %v2394
        %v2449 = vadd.f32 %v2264, %v2399
        %v2450 = vadd.f32 %v2265, %v2404
        %v2451 = vadd.f32 %v2266, %v2409
        %v2452 = vadd.f32 %v2267, %v2414
        %v2453 = vadd.f32 %v2268, %v2419
        %v2454 = vadd.f32 %v2269, %v2424
        %v2455 = vadd.f32 %v2270, %v2429
        %v2456 = vadd.f32 %v2271, %v2434
        %v2457 = vadd.f32 %v2272, %v2439
        %v2458 = vadd.f32 %v2442, %v2443
        %v2459 = vadd.f32 %v2458, %v2444
        %v2460 = vadd.f32 %v2459, %v2445
        %v2461 = vadd.f32 %v2460, %v2446
        %v2462 = vadd.f32 %v2461, %v2447
        %v2463 = vadd.f32 %v2462, %v2448
        %v2464 = vadd.f32 %v2463, %v2449
        %v2465 = vadd.f32 %v2464, %v2450
        %v2466 = vadd.f32 %v2465, %v2451
        %v2467 = vadd.f32 %v2466, %v2452
        %v2468 = vadd.f32 %v2467, %v2453
        %v2469 = vadd.f32 %v2468, %v2454
        %v2470 = vadd.f32 %v2469, %v2455
        %v2471 = vadd.f32 %v2470, %v2456
        %v2472 = vadd.f32 %v2471, %v2457
        %v2473 = vrot.slane %v2472, 4
        %v2474 = vadd.f32 %v2472, %v2473
        %v2475 = vrot.slane %v2474, 2
        %v2476 = vadd.f32 %v2474, %v2475
        %v2477 = vrot.slane %v2476, 1
        %v2478 = vadd.f32 %v2476, %v2477
        %2479 = vst [vmem:[%s452] sm:$0x1] %v2478
        %v2480 = vmul.f32 %v2442, %v2442
        %v2481 = vmul.f32 %v2443, %v2443
        %v2482 = vmul.f32 %v2444, %v2444
        %v2483 = vmul.f32 %v2445, %v2445
        %v2484 = vmul.f32 %v2446, %v2446
        %v2485 = vmul.f32 %v2447, %v2447
        %v2486 = vmul.f32 %v2448, %v2448
        %v2487 = vmul.f32 %v2449, %v2449
        %v2488 = vmul.f32 %v2450, %v2450
        %v2489 = vmul.f32 %v2451, %v2451
        %v2490 = vmul.f32 %v2452, %v2452
        %v2491 = vmul.f32 %v2453, %v2453
        %v2492 = vmul.f32 %v2454, %v2454
        %v2493 = vmul.f32 %v2455, %v2455
        %v2494 = vmul.f32 %v2456, %v2456
        %v2495 = vmul.f32 %v2457, %v2457
        %v2496 = vadd.f32 %v2480, %v2481
        %v2497 = vadd.f32 %v2496, %v2482
        %v2498 = vadd.f32 %v2497, %v2483
        %v2499 = vadd.f32 %v2498, %v2484
        %v2500 = vadd.f32 %v2499, %v2485
        %v2501 = vadd.f32 %v2500, %v2486
        %v2502 = vadd.f32 %v2501, %v2487
        %v2503 = vadd.f32 %v2502, %v2488
        %v2504 = vadd.f32 %v2503, %v2489
        %v2505 = vadd.f32 %v2504, %v2490
        %v2506 = vadd.f32 %v2505, %v2491
        %v2507 = vadd.f32 %v2506, %v2492
        %v2508 = vadd.f32 %v2507, %v2493
        %v2509 = vadd.f32 %v2508, %v2494
        %v2510 = vadd.f32 %v2509, %v2495
        %v2511 = vrot.slane %v2510, 4
        %v2512 = vadd.f32 %v2510, %v2511
        %v2513 = vrot.slane %v2512, 2
        %v2514 = vadd.f32 %v2512, %v2513
        %v2515 = vrot.slane %v2514, 1
        %v2516 = vadd.f32 %v2514, %v2515
        %2517 = vst [vmem:[%s458] sm:$0x1] %v2516
        %2518 = vst [vmem:[%s446] sm:$0xff] %v2442
        %2519 = vst [vmem:[%s446 + $0x8] sm:$0xff] %v2443
        %2520 = vst [vmem:[%s446 + $0x10] sm:$0xff] %v2444
        %2521 = vst [vmem:[%s446 + $0x18] sm:$0xff] %v2445
        %2522 = vst [vmem:[%s446 + $0x20] sm:$0xff] %v2446
        %2523 = vst [vmem:[%s446 + $0x28] sm:$0xff] %v2447
        %2524 = vst [vmem:[%s446 + $0x30] sm:$0xff] %v2448
        %2525 = vst [vmem:[%s446 + $0x38] sm:$0xff] %v2449
        %2526 = vst [vmem:[%s446 + $0x40] sm:$0xff] %v2450
        %2527 = vst [vmem:[%s446 + $0x48] sm:$0xff] %v2451
        %2528 = vst [vmem:[%s446 + $0x50] sm:$0xff] %v2452
        %2529 = vst [vmem:[%s446 + $0x58] sm:$0xff] %v2453
        %2530 = vst [vmem:[%s446 + $0x60] sm:$0xff] %v2454
        %2531 = vst [vmem:[%s446 + $0x68] sm:$0xff] %v2455
        %2532 = vst [vmem:[%s446 + $0x70] sm:$0xff] %v2456
        %2533 = vst [vmem:[%s446 + $0x78] sm:$0xff] %v2457
        %s2534 = sand.u32 %s185, 1
        %s2535 = scalar_lea.sflag [#allocation4], %s2534
        %s2536 = sand.u32 %s185, 1
        %s2537 = smul.addr %s2536, 128
        %s2538 = scalar_lea.vmem [#allocation11], %s2537
        %s2539 = sand.u32 %s34, 1
        %s2540 = scalar_lea.sflag [#allocation13], %s2539
        %s2541 = sand.u32 %s213, 1
        %s2542 = scalar_lea.vmem [#allocation12], %s2541
        %s2543 = sand.u32 %s34, 1
        %s2544 = scalar_lea.sflag [#allocation13], %s2543
        %s2545 = sand.u32 %s241, 1
        %s2546 = scalar_lea.vmem [#allocation14], %s2545
        // Predicated region
        $region61: #{unetr_up_block_forward.3} parent=39 // pred_check
          %p2547 = pneg %p195
        $region62: #{unetr_up_block_forward.3} parent=39 // pred_check_branch
          %2549 = sbr.rel (%p2547) target = $region64
        $region63: #{unetr_up_block_forward.3} parent=39 // pred_region
          %s2550 = smul.u32 8, %s39
          %s2552 = ssub.s32 2048, 2048
          %2553 = vsyncadd %s2535, %s2552
          %s2554 = smul.addr %s2550, 2
          %s2555 = smul.addr %s38, 32
          %s2556 = sadd.s32 %s2554, %s2555
          %s2557 = smul.addr %s2556, 128
          %s2558 = scalar_lea.hbm %s5, %s2557
          %s2559 = sshll.u32 %s2538, 4
          %s2560 = int_to_ptr.vmem [resolvable:$true] %s2559
          %2565 = dma.vmem_to_hbm [thread:$0]  %s2560, 2048, %s2558, %s2535, 128, 128, 8
        $region64: #{unetr_up_block_forward.3} parent=39 // pred_fallthru
          _
        // Predicated region
        $region65: #{unetr_up_block_forward.3} parent=39 // pred_check
          %p2566 = pneg %p223
        $region66: #{unetr_up_block_forward.3} parent=39 // pred_check_branch
          %2568 = sbr.rel (%p2566) target = $region68
        $region67: #{unetr_up_block_forward.3} parent=39 // pred_region
          %s2570 = ssub.s32 16, 16
          %2571 = vsyncadd %s2540, %s2570
          %s2572 = smul.addr %s38, 2
          %s2573 = sadd.s32 %s39, %s2572
          %s2574 = smul.addr %s2573, 16
          %s2575 = scalar_lea.hbm %s6, %s2574
          %s2577 = sshll.u32 %s2542, 4
          %s2578 = int_to_ptr.vmem [resolvable:$true] %s2577
          %2580 = dma.vmem_to_hbm [thread:$0]  %s2578, 16, %s2575, %s2540
        $region68: #{unetr_up_block_forward.3} parent=39 // pred_fallthru
          _
        // Predicated region
        $region69: #{unetr_up_block_forward.3} parent=39 // pred_check
          %p2581 = pneg %p251
        $region70: #{unetr_up_block_forward.3} parent=39 // pred_check_branch
          %2583 = sbr.rel (%p2581) target = $region72
        $region71: #{unetr_up_block_forward.3} parent=39 // pred_region
          %s2585 = ssub.s32 16, 16
          %2586 = vsyncadd %s2544, %s2585
          %s2587 = smul.addr %s38, 2
          %s2588 = sadd.s32 %s39, %s2587
          %s2589 = smul.addr %s2588, 16
          %s2590 = scalar_lea.hbm %s7, %s2589
          %s2592 = sshll.u32 %s2546, 4
          %s2593 = int_to_ptr.vmem [resolvable:$true] %s2592
          %2595 = dma.vmem_to_hbm [thread:$0]  %s2593, 16, %s2590, %s2544
        $region72: #{unetr_up_block_forward.3} parent=39 // pred_fallthru
          _
      $region40: #{unetr_up_block_forward.3} parent=5 // pred_fallthru
        _
      %p2596 = scmp.le.s32.totalorder 2, %s29
      // Predicated region
      $region73: #{unetr_up_block_forward.3} parent=5 // pred_check
        %p2597 = pneg %p2596
      $region74: #{unetr_up_block_forward.3} parent=5 // pred_check_branch
        %2599 = sbr.rel (%p2597) target = $region76
      $region75: #{unetr_up_block_forward.3} parent=5 // pred_region
        %s2600 = ssub.s32 %s29, 2
        // Predicated region
        $region77: #{unetr_up_block_forward.3} parent=75 // pred_check
          %p2601 = pneg %p201
        $region78: #{unetr_up_block_forward.3} parent=75 // pred_check_branch
          %2603 = sbr.rel (%p2601) target = $region80
        $region79: #{unetr_up_block_forward.3} parent=75 // pred_region
          %s2604 = sand.u32 %s186, 1
          %s2605 = scalar_lea.sflag [#allocation4], %s2604
          %s2606 = sand.u32 %s186, 1
          %s2607 = smul.addr %s2606, 128
          %s2608 = scalar_lea.vmem [#allocation11], %s2607
          %2609 = dma.done %s2605, 2048
        $region80: #{unetr_up_block_forward.3} parent=75 // pred_fallthru
          _
        // Predicated region
        $region81: #{unetr_up_block_forward.3} parent=75 // pred_check
          %p2610 = pneg %p229
        $region82: #{unetr_up_block_forward.3} parent=75 // pred_check_branch
          %2612 = sbr.rel (%p2610) target = $region84
        $region83: #{unetr_up_block_forward.3} parent=75 // pred_region
          %s2613 = sand.u32 %s35, 1
          %s2614 = scalar_lea.sflag [#allocation13], %s2613
          %s2615 = sand.u32 %s214, 1
          %s2616 = scalar_lea.vmem [#allocation12], %s2615
          %2617 = dma.done %s2614, 16
        $region84: #{unetr_up_block_forward.3} parent=75 // pred_fallthru
          _
        // Predicated region
        $region85: #{unetr_up_block_forward.3} parent=75 // pred_check
          %p2618 = pneg %p257
        $region86: #{unetr_up_block_forward.3} parent=75 // pred_check_branch
          %2620 = sbr.rel (%p2618) target = $region88
        $region87: #{unetr_up_block_forward.3} parent=75 // pred_region
          %s2621 = sand.u32 %s35, 1
          %s2622 = scalar_lea.sflag [#allocation13], %s2621
          %s2623 = sand.u32 %s242, 1
          %s2624 = scalar_lea.vmem [#allocation14], %s2623
          %2625 = dma.done %s2622, 16
        $region88: #{unetr_up_block_forward.3} parent=75 // pred_fallthru
          _
      $region76: #{unetr_up_block_forward.3} parent=5 // pred_fallthru
        _
    $region6: #{unetr_up_block_forward.3} parent=1 // loop_footer
      %s33 = sadd.s32 1, %s29
    $region7: #{unetr_up_block_forward.3} parent=1 // loop_footer_branch
      %28 = sbr.rel target = $region3
    $region8: #{unetr_up_block_forward.3} parent=1 // loop_exit
      _
    %2626 = vsyncpa [#allocation3], 1
    %s2627 = scalar_lea.sflag [#allocation3], 1
    %2628 = vsyncpa %s2627, 1
    %2629 = vsyncpa [#allocation6], 1
    %s2630 = scalar_lea.sflag [#allocation6], 1
    %2631 = vsyncpa %s2630, 1
    %2632 = vsyncpa [#allocation9], 1
    %s2633 = scalar_lea.sflag [#allocation9], 1
    %2634 = vsyncpa %s2633, 1
    %2635 = vsyncpa [#allocation4], 1
    %s2636 = scalar_lea.sflag [#allocation4], 1
    %2637 = vsyncpa %s2636, 1
    %2638 = vsyncpa [#allocation13], 1
    %s2639 = scalar_lea.sflag [#allocation13], 1
    %2640 = vsyncpa %s2639, 1

</llo_original>
